<compile_context>
chip_gen: v7x
topology: tpu7x:2x2x1
jax: 0.10.0
libtpu: 0.0.40
codegen_flags: <defaults>
</compile_context>

<pallas_src>
import math

import jax
import jax.numpy as jnp
from jax.experimental import pallas as pl
from jax.experimental.pallas import tpu as pltpu

LANE = 128
BIAS_ROWS = 16   # 16-row blocks keep every in-slab slice offset bf16-sublane aligned


def _round_up(v, m):
    return (v + m - 1) // m * m


def _pad2d(a, rows, cols):
    return jnp.pad(a, ((0, rows - a.shape[0]), (0, cols - a.shape[1])))


# ----------------------------------------------------------------------------
# Kernel factory.  Weight slabs are sliced with static (trace-time) offsets from the
# packing metadata; all dots are bf16 x bf16 with f32 accumulation on the MXU.
# ----------------------------------------------------------------------------
def _make_processor_kernel(n_linear, Dp, Hp, d_node_real, d_edge_real,
                           edge_meta, node_meta, eupd_meta):
    bf16 = jnp.bfloat16
    f32 = jnp.float32

    def load_w(slab_ref, ent):                     # padded weight block, bf16
        off, r, c = ent
        return slab_ref[off:off + r, 0:c]

    def load_v(slab_ref, ent):                     # bias / gamma / beta row, f32
        off, _, c = ent
        return slab_ref[off:off + 1, 0:c].astype(f32)

    def masked_layernorm(h, gamma, beta, d_real):
        dp = h.shape[-1]
        lane = jax.lax.broadcasted_iota(jnp.int32, (1, dp), 1)
        mask = (lane < d_real).astype(h.dtype)
        inv_d = 1.0 / d_real
        mean = jnp.sum(h, axis=-1, keepdims=True) * inv_d    # padded lanes are exactly 0
        centered = (h - mean) * mask
        var = jnp.sum(centered * centered, axis=-1, keepdims=True) * inv_d
        return centered * jax.lax.rsqrt(var + 1e-5) * gamma + beta

    def mlp_tail(h, slab_ref, meta_tail, d_real):
        # meta_tail = [W1, b1, ..., W_{L-1}, b_{L-1}, gamma, beta]
        if n_linear > 1:
            h = jnp.maximum(h, 0.0)
        i = 0
        for l in range(1, n_linear):
            w = load_w(slab_ref, meta_tail[i])
            b = load_v(slab_ref, meta_tail[i + 1])
            i += 2
            h = jnp.dot(h.astype(bf16), w, preferred_element_type=f32) + b
            if l < n_linear - 1:
                h = jnp.maximum(h, 0.0)
        gamma = load_v(slab_ref, meta_tail[i])
        beta = load_v(slab_ref, meta_tail[i + 1])
        return masked_layernorm(h, gamma, beta, d_real)

    def kernel(x_in, e_in, src_oh, tgt_oh, tgt_oh_t, pair_ref, slab_ref, x_out, e_out):
        step = pl.program_id(0)

        @pl.when(step == 0)
        def _():
            x_out[...] = x_in[...]
            e_out[...] = e_in[...]

        x = x_out[...]                       # [Np, Dp] f32  (state carried in output ref)
        e = e_out[...]                       # [Ep, Fp] f32
        xb = x.astype(bf16)
        eb = e.astype(bf16)
        g_src = src_oh[...]                  # [Ep, Np] bf16
        g_tgt = tgt_oh[...]                  # [Ep, Np] bf16
        s_tgt_t = tgt_oh_t[...]              # [Np, Ep] bf16 (pre-transposed scatter operand)

        # ---- edge MLP (message): edge_fn(cat([x[tgt], x[src], e])) ----
        # Fused projection (one 256-wide output matmul), then project-then-gather.
        p = jnp.dot(xb, pair_ref[0:Dp, :], preferred_element_type=f32)     # [Np, 2Hp]
        p_i = p[:, :Hp].astype(bf16)         # target-node part (x_i)
        p_j = p[:, Hp:].astype(bf16)         # source-node part (x_j)
        h = jnp.dot(g_tgt, p_i, preferred_element_type=f32)
        h = h + jnp.dot(g_src, p_j, preferred_element_type=f32)
        h = h + jnp.dot(eb, load_w(slab_ref, edge_meta[0]), preferred_element_type=f32)
        h = h + load_v(slab_ref, edge_meta[1])
        m = mlp_tail(h, slab_ref, edge_meta[2:], d_edge_real)              # [Ep, Fp]

        # ---- scatter-add messages to target nodes (aggr='add') ----
        aggr = jnp.dot(s_tgt_t, m.astype(bf16), preferred_element_type=f32)   # [Np, Fp]

        # ---- node MLP: node_fn(cat([aggr, x])) ----
        hn = jnp.dot(aggr.astype(bf16), load_w(slab_ref, node_meta[0]),
                     preferred_element_type=f32)
        hn = hn + jnp.dot(xb, load_w(slab_ref, node_meta[1]), preferred_element_type=f32)
        hn = hn + load_v(slab_ref, node_meta[2])
        x_upd = mlp_tail(hn, slab_ref, node_meta[3:], d_node_real)         # [Np, Dp]

        # ---- edge update MLP: edge_update_fn(cat([x_upd[src], x_upd[tgt], e])) ----
        q = jnp.dot(x_upd.astype(bf16), pair_ref[Dp:2 * Dp, :], preferred_element_type=f32)
        q_s = q[:, :Hp].astype(bf16)
        q_t = q[:, Hp:].astype(bf16)
        he = jnp.dot(g_src, q_s, preferred_element_type=f32)
        he = he + jnp.dot(g_tgt, q_t, preferred_element_type=f32)
        he = he + jnp.dot(eb, load_w(slab_ref, eupd_meta[0]), preferred_element_type=f32)
        he = he + load_v(slab_ref, eupd_meta[1])
        e_upd = mlp_tail(he, slab_ref, eupd_meta[2:], d_edge_real)         # [Ep, Fp]

        # ---- residuals; write back to the output refs (state for next step) ----
        x_out[...] = x_upd + x
        e_out[...] = e_upd + e

    return kernel


# ----------------------------------------------------------------------------
# Deterministic parameter initialization (PyTorch nn.Linear-style uniform bounds).
# Layout per MLP: [W0_part_0, ..., W0_part_{P-1}, b0, W1, b1, ..., gamma, beta]
# ----------------------------------------------------------------------------
def _init_mlp_params(key, in_parts, hidden, out_dim, nmlp_layers):
    layer_sizes = [sum(in_parts)] + [hidden] * nmlp_layers + [out_dim]
    params = []
    keys = jax.random.split(key, 2 * (len(layer_sizes) - 1))
    ki = 0
    fan_in = layer_sizes[0]
    bound = 1.0 / math.sqrt(fan_in)
    w0 = jax.random.uniform(keys[ki], (fan_in, layer_sizes[1]),
                            minval=-bound, maxval=bound, dtype=jnp.float32); ki += 1
    off = 0
    for p in in_parts:
        params.append(w0[off:off + p, :])
        off += p
    params.append(jax.random.uniform(keys[ki], (1, layer_sizes[1]),
                                     minval=-bound, maxval=bound, dtype=jnp.float32)); ki += 1
    for l in range(1, len(layer_sizes) - 1):
        fan_in = layer_sizes[l]
        bound = 1.0 / math.sqrt(fan_in)
        params.append(jax.random.uniform(keys[ki], (fan_in, layer_sizes[l + 1]),
                                         minval=-bound, maxval=bound, dtype=jnp.float32)); ki += 1
        params.append(jax.random.uniform(keys[ki], (1, layer_sizes[l + 1]),
                                         minval=-bound, maxval=bound, dtype=jnp.float32)); ki += 1
    params.append(jnp.ones((1, out_dim), jnp.float32))   # gamma
    params.append(jnp.zeros((1, out_dim), jnp.float32))  # beta
    return params


class ProcessorPallas:
    def __init__(self, nnode_in, nnode_out, nedge_in, nedge_out,
                 nmessage_passing_steps, nmlp_layers, mlp_hidden_dim, key):
        assert nnode_in == nnode_out and nedge_in == nedge_out, \
            "residual connections require equal in/out dims"
        assert nmlp_layers >= 1, "at least one hidden layer expected"
        self.n_linear = nmlp_layers + 1
        self.n_steps = nmessage_passing_steps
        self.nnode = nnode_out
        self.nedge = nedge_out
        self.Dp = _round_up(nnode_in, LANE)
        self.Fp = _round_up(nedge_in, LANE)
        self.Hp = _round_up(mlp_hidden_dim, LANE)

        self.steps_real = []
        for _ in range(nmessage_passing_steps):
            k0, k1, k2, key = jax.random.split(key, 4)
            edge_p = _init_mlp_params(k0, [nnode_in, nnode_in, nedge_in],
                                      mlp_hidden_dim, nedge_out, nmlp_layers)
            node_p = _init_mlp_params(k1, [nedge_out, nnode_in],
                                      mlp_hidden_dim, nnode_out, nmlp_layers)
            eupd_p = _init_mlp_params(k2, [nnode_out, nnode_out, nedge_in],
                                      mlp_hidden_dim, nedge_out, nmlp_layers)
            self.steps_real.append((edge_p, node_p, eupd_p))

        self._build_packed()

    # -- pack per-step parameters into two stacked bf16 slabs -----------------
    def _pack_main_slab(self, edge_p, node_p, eupd_p):
        Dp, Fp, Hp = self.Dp, self.Fp, self.Hp
        nl = self.n_linear
        blocks = []
        meta = {'edge': [], 'node': [], 'eupd': []}
        row = [0]

        def add(a, rows_p, cols_p, key):
            blocks.append(_pad2d(a, rows_p, cols_p))
            meta[key].append((row[0], rows_p, cols_p))
            row[0] += rows_p

        def tail_dims(out_pad):
            return [(Hp, Hp if l < nl - 1 else out_pad) for l in range(1, nl)]

        # edge MLP (first two weights live in the pair slab)
        add(edge_p[2], Fp, Hp, 'edge')
        add(edge_p[3], BIAS_ROWS, Hp, 'edge')
        idx = 4
        for (rin, cout) in tail_dims(Fp):
            add(edge_p[idx], rin, cout, 'edge'); idx += 1
            add(edge_p[idx], BIAS_ROWS, cout, 'edge'); idx += 1
        add(edge_p[idx], BIAS_ROWS, Fp, 'edge'); idx += 1   # gamma
        add(edge_p[idx], BIAS_ROWS, Fp, 'edge')             # beta

        # node MLP
        add(node_p[0], Fp, Hp, 'node')      # aggr part
        add(node_p[1], Dp, Hp, 'node')      # x part
        add(node_p[2], BIAS_ROWS, Hp, 'node')
        idx = 3
        for (rin, cout) in tail_dims(Dp):
            add(node_p[idx], rin, cout, 'node'); idx += 1
            add(node_p[idx], BIAS_ROWS, cout, 'node'); idx += 1
        add(node_p[idx], BIAS_ROWS, Dp, 'node'); idx += 1   # gamma
        add(node_p[idx], BIAS_ROWS, Dp, 'node')             # beta

        # edge-update MLP (first two weights live in the pair slab)
        add(eupd_p[2], Fp, Hp, 'eupd')
        add(eupd_p[3], BIAS_ROWS, Hp, 'eupd')
        idx = 4
        for (rin, cout) in tail_dims(Fp):
            add(eupd_p[idx], rin, cout, 'eupd'); idx += 1
            add(eupd_p[idx], BIAS_ROWS, cout, 'eupd'); idx += 1
        add(eupd_p[idx], BIAS_ROWS, Fp, 'eupd'); idx += 1   # gamma
        add(eupd_p[idx], BIAS_ROWS, Fp, 'eupd')             # beta

        cp = max(b.shape[1] for b in blocks)
        blocks = [jnp.pad(b, ((0, 0), (0, cp - b.shape[1]))) for b in blocks]
        return jnp.concatenate(blocks, axis=0), meta

    def _build_packed(self):
        Dp, Hp = self.Dp, self.Hp
        pair_steps, slab_steps, meta = [], [], None
        for (edge_p, node_p, eupd_p) in self.steps_real:
            pair_e = jnp.concatenate([_pad2d(edge_p[0], Dp, Hp),
                                      _pad2d(edge_p[1], Dp, Hp)], axis=1)   # tgt | src
            pair_u = jnp.concatenate([_pad2d(eupd_p[0], Dp, Hp),
                                      _pad2d(eupd_p[1], Dp, Hp)], axis=1)   # src | tgt
            pair_steps.append(jnp.concatenate([pair_e, pair_u], axis=0))    # [2Dp, 2Hp]
            slab, meta = self._pack_main_slab(edge_p, node_p, eupd_p)
            slab_steps.append(slab)
        self.pair_slab = jnp.stack(pair_steps).astype(jnp.bfloat16)         # [S, 2Dp, 2Hp]
        self.main_slab = jnp.stack(slab_steps).astype(jnp.bfloat16)         # [S, R, Cp]
        self.edge_meta = meta['edge']
        self.node_meta = meta['node']
        self.eupd_meta = meta['eupd']

    # -- forward ---------------------------------------------------------------
    def __call__(self, x, edge_index, edge_features):
        N, D = x.shape
        E, F = edge_features.shape
        Dp, Fp, Hp = self.Dp, self.Fp, self.Hp
        Np = _round_up(N, LANE)     # 128-aligned => lane-dense one-hot feeds
        Ep = _round_up(E, LANE)

        xp = _pad2d(x.astype(jnp.float32), Np, Dp)
        ep = _pad2d(edge_features.astype(jnp.float32), Ep, Fp)

        src = edge_index[0].astype(jnp.int32)
        tgt = edge_index[1].astype(jnp.int32)
        if Ep > E:
            fill = jnp.full((Ep - E,), Np, dtype=jnp.int32)  # out-of-range -> all-zero rows
            src = jnp.concatenate([src, fill])
            tgt = jnp.concatenate([tgt, fill])

        # bf16 one-hots (0/1 exact); the scatter transpose is hoisted to the host.
        src_oh = jax.nn.one_hot(src, Np, dtype=jnp.bfloat16)    # [Ep, Np]
        tgt_oh = jax.nn.one_hot(tgt, Np, dtype=jnp.bfloat16)    # [Ep, Np]
        tgt_oh_t = jnp.transpose(tgt_oh)                         # [Np, Ep]

        R, Cp = self.main_slab.shape[1], self.main_slab.shape[2]

        kernel = _make_processor_kernel(self.n_linear, Dp, Hp, self.nnode, self.nedge,
                                        self.edge_meta, self.node_meta, self.eupd_meta)

        grid_spec = pltpu.PrefetchScalarGridSpec(
            num_scalar_prefetch=0,
            grid=(self.n_steps,),
            in_specs=[
                pl.BlockSpec((Np, Dp), lambda s: (0, 0)),            # x
                pl.BlockSpec((Ep, Fp), lambda s: (0, 0)),            # e
                pl.BlockSpec((Ep, Np), lambda s: (0, 0)),            # src one-hot
                pl.BlockSpec((Ep, Np), lambda s: (0, 0)),            # tgt one-hot
                pl.BlockSpec((Np, Ep), lambda s: (0, 0)),            # tgt one-hot^T
                pl.BlockSpec((None, 2 * Dp, 2 * Hp), lambda s: (s, 0, 0)),  # fused proj
                pl.BlockSpec((None, R, Cp), lambda s: (s, 0, 0)),           # main slab
            ],
            out_specs=(pl.BlockSpec((Np, Dp), lambda s: (0, 0)),
                       pl.BlockSpec((Ep, Fp), lambda s: (0, 0))),
        )

        # Right-size the scoped VMEM request (cap at 48 MiB: inside v7x's 64 MiB).
        onehots = 3 * Ep * Np * 2 * 2
        state = (Np * Dp + Ep * Fp) * 4 * 4
        weights = (2 * Dp * 2 * Hp + R * Cp) * 2 * 2
        acts = (Np * 2 * Hp + Ep * Hp + Np * Fp + Ep * Fp + Np * Dp) * 4 * 4
        vmem_limit = int(min(48 * 2 ** 20, max(32 * 2 ** 20, int((onehots + state + weights + acts) * 1.5))))

        x_out, e_out = pl.pallas_call(
            kernel,
            out_shape=(jax.ShapeDtypeStruct((Np, Dp), jnp.float32),
                       jax.ShapeDtypeStruct((Ep, Fp), jnp.float32)),
            grid_spec=grid_spec,
            compiler_params=pltpu.CompilerParams(
                dimension_semantics=("arbitrary",),   # step axis carries state in the outputs
                vmem_limit_bytes=vmem_limit),
        )(xp, ep, src_oh, tgt_oh, tgt_oh_t, self.pair_slab, self.main_slab)

        return x_out[:N, :D], e_out[:E, :F]


# ----------------------------------------------------------------------------
# Pure-JAX reference mirroring the kernel math (same project-then-gather order and
# the same bf16 rounding of weights / activations fed to each matmul).
# ----------------------------------------------------------------------------
def _bf(a):
    return a.astype(jnp.bfloat16).astype(jnp.float32)


def _ref_mlp_tail(h, params, n_linear):
    if n_linear > 1:
        h = jnp.maximum(h, 0.0)
    i = 0
    for l in range(1, n_linear):
        h = _bf(h) @ _bf(params[i]) + _bf(params[i + 1])
        i += 2
        if l < n_linear - 1:
            h = jnp.maximum(h, 0.0)
    gamma, beta = params[i], params[i + 1]
    mean = jnp.mean(h, -1, keepdims=True)
    var = jnp.mean((h - mean) ** 2, -1, keepdims=True)
    return (h - mean) * jax.lax.rsqrt(var + 1e-5) * _bf(gamma) + _bf(beta)


def _ref_processor(proc, x, edge_index, e):
    src, tgt = edge_index[0], edge_index[1]
    n_nodes = x.shape[0]
    for (edge_p, node_p, eupd_p) in proc.steps_real:
        p_i = _bf(x) @ _bf(edge_p[0])
        p_j = _bf(x) @ _bf(edge_p[1])
        h = _bf(p_i)[tgt] + _bf(p_j)[src] + _bf(e) @ _bf(edge_p[2]) + _bf(edge_p[3])
        m = _ref_mlp_tail(h, edge_p[4:], proc.n_linear)
        aggr = jax.ops.segment_sum(_bf(m), tgt, num_segments=n_nodes)
        hn = _bf(aggr) @ _bf(node_p[0]) + _bf(x) @ _bf(node_p[1]) + _bf(node_p[2])
        x_upd = _ref_mlp_tail(hn, node_p[3:], proc.n_linear)
        q_s = _bf(x_upd) @ _bf(eupd_p[0])
        q_t = _bf(x_upd) @ _bf(eupd_p[1])
        he = _bf(q_s)[src] + _bf(q_t)[tgt] + _bf(e) @ _bf(eupd_p[2]) + _bf(eupd_p[3])
        e_upd = _ref_mlp_tail(he, eupd_p[4:], proc.n_linear)
        x = x_upd + x
        e = e_upd + e
    return x, e


if __name__ == "__main__":
    # Small configuration consistent with the module's forward pass.
    N_NODES = 16
    N_EDGES = 32
    NNODE = 32      # nnode_in == nnode_out
    NEDGE = 32      # nedge_in == nedge_out
    NSTEPS = 2      # nmessage_passing_steps
    NMLP_LAYERS = 2
    HIDDEN = 32

    key = jax.random.PRNGKey(0)
    kx, ke, ks, kt, kparams = jax.random.split(key, 5)

    x = jax.random.normal(kx, (N_NODES, NNODE), dtype=jnp.float32)
    edge_features = jax.random.normal(ke, (N_EDGES, NEDGE), dtype=jnp.float32)
    src = jax.random.randint(ks, (N_EDGES,), 0, N_NODES, dtype=jnp.int32)
    tgt = jax.random.randint(kt, (N_EDGES,), 0, N_NODES, dtype=jnp.int32)
    edge_index = jnp.stack([src, tgt], axis=0)

    proc = ProcessorPallas(NNODE, NNODE, NEDGE, NEDGE, NSTEPS, NMLP_LAYERS, HIDDEN, kparams)

    x_out, e_out = proc(x, edge_index, edge_features)
    jax.block_until_ready((x_out, e_out))

    # Verify against the pure-JAX reference (tolerance covers bf16 rounding and MXU vs
    # XLA accumulation-order differences).
    x_ref, e_ref = _ref_processor(proc, x, edge_index, edge_features)
    assert jnp.allclose(x_out, x_ref, rtol=5e-2, atol=5e-2), "node output mismatch"
    assert jnp.allclose(e_out, e_ref, rtol=5e-2, atol=5e-2), "edge output mismatch"

    print("KERNEL_OK")
</pallas_src>

<mosaic_0001>
module attributes {stable_mosaic.version = 11 : i64} {
  func.func @kernel(%arg0: i32, %arg1: memref<128x128xf32, #tpu.memory_space<vmem>>, %arg2: memref<128x128xf32, #tpu.memory_space<vmem>>, %arg3: memref<128x128xbf16, #tpu.memory_space<vmem>>, %arg4: memref<128x128xbf16, #tpu.memory_space<vmem>>, %arg5: memref<128x128xbf16, #tpu.memory_space<vmem>>, %arg6: memref<1x256x256xbf16, #tpu.memory_space<vmem>>, %arg7: memref<1x1520x128xbf16, #tpu.memory_space<vmem>>, %arg8: memref<128x128xf32, #tpu.memory_space<vmem>>, %arg9: memref<128x128xf32, #tpu.memory_space<vmem>>) attributes {dimension_semantics = [#tpu.dimension_semantics<arbitrary>], iteration_bounds = array<i64: 2>, scalar_prefetch = 0 : i64, scratch_operands = 0 : i64, tpu.core_type = #tpu.core_type<tc>, window_params = [{pipeline_mode = #tpu.pipeline_mode<synchronous>, transform_indices = @transform_0, window_bounds = array<i64: 128, 128>}, {pipeline_mode = #tpu.pipeline_mode<synchronous>, transform_indices = @transform_1, window_bounds = array<i64: 128, 128>}, {pipeline_mode = #tpu.pipeline_mode<synchronous>, transform_indices = @transform_2, window_bounds = array<i64: 128, 128>}, {pipeline_mode = #tpu.pipeline_mode<synchronous>, transform_indices = @transform_3, window_bounds = array<i64: 128, 128>}, {pipeline_mode = #tpu.pipeline_mode<synchronous>, transform_indices = @transform_4, window_bounds = array<i64: 128, 128>}, {transform_indices = @transform_5, window_bounds = array<i64: 1, 256, 256>}, {transform_indices = @transform_6, window_bounds = array<i64: 1, 1520, 128>}, {pipeline_mode = #tpu.pipeline_mode<synchronous>, transform_indices = @transform_7, window_bounds = array<i64: 128, 128>}, {pipeline_mode = #tpu.pipeline_mode<synchronous>, transform_indices = @transform_8, window_bounds = array<i64: 128, 128>}]} {
    %c0_i32 = arith.constant 0 : i32
    %0 = arith.cmpi eq, %arg0, %c0_i32 : i32
    %1 = arith.extui %0 : i1 to i32
    %c0_i32_0 = arith.constant 0 : i32
    %2 = arith.cmpi ne, %1, %c0_i32_0 : i32
    scf.if %2 {
      %c0_110 = arith.constant 0 : index
      %c0_111 = arith.constant 0 : index
      %233 = vector.load %arg1[%c0_110, %c0_111] : memref<128x128xf32, #tpu.memory_space<vmem>>, vector<128x128xf32>
      %c0_112 = arith.constant 0 : index
      %c0_113 = arith.constant 0 : index
      %234 = vector.load %arg8[%c0_112, %c0_113] : memref<128x128xf32, #tpu.memory_space<vmem>>, vector<128x128xf32>
      tpu.vector_store %arg8[%c0_112, %c0_113], %233 {strides = array<i32>} : memref<128x128xf32, #tpu.memory_space<vmem>>, vector<128x128xf32>,
      %c0_114 = arith.constant 0 : index
      %c0_115 = arith.constant 0 : index
      %235 = vector.load %arg2[%c0_114, %c0_115] : memref<128x128xf32, #tpu.memory_space<vmem>>, vector<128x128xf32>
      %c0_116 = arith.constant 0 : index
      %c0_117 = arith.constant 0 : index
      %236 = vector.load %arg9[%c0_116, %c0_117] : memref<128x128xf32, #tpu.memory_space<vmem>>, vector<128x128xf32>
      tpu.vector_store %arg9[%c0_116, %c0_117], %235 {strides = array<i32>} : memref<128x128xf32, #tpu.memory_space<vmem>>, vector<128x128xf32>,
    } else {
    }
    %c0 = arith.constant 0 : index
    %c0_1 = arith.constant 0 : index
    %3 = vector.load %arg8[%c0, %c0_1] : memref<128x128xf32, #tpu.memory_space<vmem>>, vector<128x128xf32>
    %c0_2 = arith.constant 0 : index
    %c0_3 = arith.constant 0 : index
    %4 = vector.load %arg9[%c0_2, %c0_3] : memref<128x128xf32, #tpu.memory_space<vmem>>, vector<128x128xf32>
    %5 = arith.truncf %3 : vector<128x128xf32> to vector<128x128xbf16>
    %6 = arith.truncf %4 : vector<128x128xf32> to vector<128x128xbf16>
    %c0_4 = arith.constant 0 : index
    %c0_5 = arith.constant 0 : index
    %7 = vector.load %arg3[%c0_4, %c0_5] : memref<128x128xbf16, #tpu.memory_space<vmem>>, vector<128x128xbf16>
    %c0_6 = arith.constant 0 : index
    %c0_7 = arith.constant 0 : index
    %8 = vector.load %arg4[%c0_6, %c0_7] : memref<128x128xbf16, #tpu.memory_space<vmem>>, vector<128x128xbf16>
    %c0_8 = arith.constant 0 : index
    %c0_9 = arith.constant 0 : index
    %9 = vector.load %arg5[%c0_8, %c0_9] : memref<128x128xbf16, #tpu.memory_space<vmem>>, vector<128x128xbf16>
    %c0_10 = arith.constant 0 : index
    %c0_11 = arith.constant 0 : index
    %c0_12 = arith.constant 0 : index
    %10 = vector.load %arg6[%c0_10, %c0_11, %c0_12] : memref<1x256x256xbf16, #tpu.memory_space<vmem>>, vector<1x128x256xbf16>
    %11 = vector.shape_cast %10 : vector<1x128x256xbf16> to vector<128x256xbf16>
    %cst = arith.constant dense<0.000000e+00> : vector<128x256xf32>
    %12 = tpu.matmul %5, %11, %cst {dimension_numbers = #tpu.dot_dimension_numbers<[1], [0], [0], [1], [0, 0, 1, 1], [], []>} : vector<128x128xbf16>, vector<128x256xbf16>, vector<128x256xf32> -> vector<128x256xf32>
    %13 = vector.extract_strided_slice %12 {offsets = [0, 0], sizes = [128, 128], strides = [1, 1]} : vector<128x256xf32> to vector<128x128xf32>
    %14 = arith.truncf %13 : vector<128x128xf32> to vector<128x128xbf16>
    %15 = vector.extract_strided_slice %12 {offsets = [0, 128], sizes = [128, 128], strides = [1, 1]} : vector<128x256xf32> to vector<128x128xf32>
    %16 = arith.truncf %15 : vector<128x128xf32> to vector<128x128xbf16>
    %cst_13 = arith.constant dense<0.000000e+00> : vector<128x128xf32>
    %17 = tpu.matmul %8, %14, %cst_13 {dimension_numbers = #tpu.dot_dimension_numbers<[1], [0], [0], [1], [0, 0, 1, 1], [], []>} : vector<128x128xbf16>, vector<128x128xbf16>, vector<128x128xf32> -> vector<128x128xf32>
    %cst_14 = arith.constant dense<0.000000e+00> : vector<128x128xf32>
    %18 = tpu.matmul %7, %16, %cst_14 {dimension_numbers = #tpu.dot_dimension_numbers<[1], [0], [0], [1], [0, 0, 1, 1], [], []>} : vector<128x128xbf16>, vector<128x128xbf16>, vector<128x128xf32> -> vector<128x128xf32>
    %19 = arith.addf %17, %18 : vector<128x128xf32>
    %c0_15 = arith.constant 0 : index
    %c0_16 = arith.constant 0 : index
    %c0_17 = arith.constant 0 : index
    %20 = vector.load %arg7[%c0_15, %c0_16, %c0_17] : memref<1x1520x128xbf16, #tpu.memory_space<vmem>>, vector<1x128x128xbf16>
    %21 = vector.shape_cast %20 : vector<1x128x128xbf16> to vector<128x128xbf16>
    %cst_18 = arith.constant dense<0.000000e+00> : vector<128x128xf32>
    %22 = tpu.matmul %6, %21, %cst_18 {dimension_numbers = #tpu.dot_dimension_numbers<[1], [0], [0], [1], [0, 0, 1, 1], [], []>} : vector<128x128xbf16>, vector<128x128xbf16>, vector<128x128xf32> -> vector<128x128xf32>
    %23 = arith.addf %19, %22 : vector<128x128xf32>
    %c0_19 = arith.constant 0 : index
    %c128 = arith.constant 128 : index
    %c0_20 = arith.constant 0 : index
    %24 = vector.load %arg7[%c0_19, %c128, %c0_20] : memref<1x1520x128xbf16, #tpu.memory_space<vmem>>, vector<1x1x128xbf16>
    %25 = vector.shape_cast %24 : vector<1x1x128xbf16> to vector<1x128xbf16>
    %26 = arith.extf %25 : vector<1x128xbf16> to vector<1x128xf32>
    %27 = vector.broadcast %26 : vector<1x128xf32> to vector<128x128xf32>
    %28 = arith.addf %23, %27 : vector<128x128xf32>
    %cst_21 = arith.constant 0.000000e+00 : f32
    %29 = vector.broadcast %cst_21 : f32 to vector<128x128xf32>
    %30 = arith.maximumf %28, %29 : vector<128x128xf32>
    %c0_22 = arith.constant 0 : index
    %c144 = arith.constant 144 : index
    %c0_23 = arith.constant 0 : index
    %31 = vector.load %arg7[%c0_22, %c144, %c0_23] : memref<1x1520x128xbf16, #tpu.memory_space<vmem>>, vector<1x128x128xbf16>
    %32 = vector.shape_cast %31 : vector<1x128x128xbf16> to vector<128x128xbf16>
    %c0_24 = arith.constant 0 : index
    %c272 = arith.constant 272 : index
    %c0_25 = arith.constant 0 : index
    %33 = vector.load %arg7[%c0_24, %c272, %c0_25] : memref<1x1520x128xbf16, #tpu.memory_space<vmem>>, vector<1x1x128xbf16>
    %34 = vector.shape_cast %33 : vector<1x1x128xbf16> to vector<1x128xbf16>
    %35 = arith.extf %34 : vector<1x128xbf16> to vector<1x128xf32>
    %36 = arith.truncf %30 : vector<128x128xf32> to vector<128x128xbf16>
    %cst_26 = arith.constant dense<0.000000e+00> : vector<128x128xf32>
    %37 = tpu.matmul %36, %32, %cst_26 {dimension_numbers = #tpu.dot_dimension_numbers<[1], [0], [0], [1], [0, 0, 1, 1], [], []>} : vector<128x128xbf16>, vector<128x128xbf16>, vector<128x128xf32> -> vector<128x128xf32>
    %38 = vector.broadcast %35 : vector<1x128xf32> to vector<128x128xf32>
    %39 = arith.addf %37, %38 : vector<128x128xf32>
    %cst_27 = arith.constant 0.000000e+00 : f32
    %40 = vector.broadcast %cst_27 : f32 to vector<128x128xf32>
    %41 = arith.maximumf %39, %40 : vector<128x128xf32>
    %c0_28 = arith.constant 0 : index
    %c288 = arith.constant 288 : index
    %c0_29 = arith.constant 0 : index
    %42 = vector.load %arg7[%c0_28, %c288, %c0_29] : memref<1x1520x128xbf16, #tpu.memory_space<vmem>>, vector<1x128x128xbf16>
    %43 = vector.shape_cast %42 : vector<1x128x128xbf16> to vector<128x128xbf16>
    %c0_30 = arith.constant 0 : index
    %c416 = arith.constant 416 : index
    %c0_31 = arith.constant 0 : index
    %44 = vector.load %arg7[%c0_30, %c416, %c0_31] : memref<1x1520x128xbf16, #tpu.memory_space<vmem>>, vector<1x1x128xbf16>
    %45 = vector.shape_cast %44 : vector<1x1x128xbf16> to vector<1x128xbf16>
    %46 = arith.extf %45 : vector<1x128xbf16> to vector<1x128xf32>
    %47 = arith.truncf %41 : vector<128x128xf32> to vector<128x128xbf16>
    %cst_32 = arith.constant dense<0.000000e+00> : vector<128x128xf32>
    %48 = tpu.matmul %47, %43, %cst_32 {dimension_numbers = #tpu.dot_dimension_numbers<[1], [0], [0], [1], [0, 0, 1, 1], [], []>} : vector<128x128xbf16>, vector<128x128xbf16>, vector<128x128xf32> -> vector<128x128xf32>
    %49 = vector.broadcast %46 : vector<1x128xf32> to vector<128x128xf32>
    %50 = arith.addf %48, %49 : vector<128x128xf32>
    %c0_33 = arith.constant 0 : index
    %c432 = arith.constant 432 : index
    %c0_34 = arith.constant 0 : index
    %51 = vector.load %arg7[%c0_33, %c432, %c0_34] : memref<1x1520x128xbf16, #tpu.memory_space<vmem>>, vector<1x1x128xbf16>
    %52 = vector.shape_cast %51 : vector<1x1x128xbf16> to vector<1x128xbf16>
    %53 = arith.extf %52 : vector<1x128xbf16> to vector<1x128xf32>
    %c0_35 = arith.constant 0 : index
    %c448 = arith.constant 448 : index
    %c0_36 = arith.constant 0 : index
    %54 = vector.load %arg7[%c0_35, %c448, %c0_36] : memref<1x1520x128xbf16, #tpu.memory_space<vmem>>, vector<1x1x128xbf16>
    %55 = vector.shape_cast %54 : vector<1x1x128xbf16> to vector<1x128xbf16>
    %56 = arith.extf %55 : vector<1x128xbf16> to vector<1x128xf32>
    %57 = tpu.iota {dimensions = array<i32: 1>} : vector<1x128xi32>
    %c32_i32 = arith.constant 32 : i32
    %58 = vector.broadcast %c32_i32 : i32 to vector<1x128xi32>
    %59 = arith.cmpi slt, %57, %58 : vector<1x128xi32>
    %60 = arith.extui %59 : vector<1x128xi1> to vector<1x128xi32>
    %61 = arith.sitofp %60 : vector<1x128xi32> to vector<1x128xf32>
    %cst_37 = arith.constant dense<0.000000e+00> : vector<128xf32>
    %62 = vector.multi_reduction <add>, %50, %cst_37 [1] : vector<128x128xf32> to vector<128xf32>
    %63 = vector.shape_cast %62 : vector<128xf32> to vector<128x1xf32>
    %cst_38 = arith.constant 3.125000e-02 : f32
    %64 = vector.broadcast %cst_38 : f32 to vector<128x1xf32>
    %65 = arith.mulf %63, %64 : vector<128x1xf32>
    %66 = vector.broadcast %65 : vector<128x1xf32> to vector<128x128xf32>
    %67 = arith.subf %50, %66 : vector<128x128xf32>
    %68 = vector.broadcast %61 : vector<1x128xf32> to vector<128x128xf32>
    %69 = arith.mulf %67, %68 : vector<128x128xf32>
    %70 = arith.mulf %69, %69 : vector<128x128xf32>
    %cst_39 = arith.constant dense<0.000000e+00> : vector<128xf32>
    %71 = vector.multi_reduction <add>, %70, %cst_39 [1] : vector<128x128xf32> to vector<128xf32>
    %72 = vector.shape_cast %71 : vector<128xf32> to vector<128x1xf32>
    %cst_40 = arith.constant 3.125000e-02 : f32
    %73 = vector.broadcast %cst_40 : f32 to vector<128x1xf32>
    %74 = arith.mulf %72, %73 : vector<128x1xf32>
    %cst_41 = arith.constant 9.99999974E-6 : f32
    %75 = vector.broadcast %cst_41 : f32 to vector<128x1xf32>
    %76 = arith.addf %74, %75 : vector<128x1xf32>
    %77 = math.rsqrt %76 : vector<128x1xf32>
    %78 = vector.broadcast %77 : vector<128x1xf32> to vector<128x128xf32>
    %79 = arith.mulf %69, %78 : vector<128x128xf32>
    %80 = vector.broadcast %53 : vector<1x128xf32> to vector<128x128xf32>
    %81 = arith.mulf %79, %80 : vector<128x128xf32>
    %82 = vector.broadcast %56 : vector<1x128xf32> to vector<128x128xf32>
    %83 = arith.addf %81, %82 : vector<128x128xf32>
    %84 = arith.truncf %83 : vector<128x128xf32> to vector<128x128xbf16>
    %cst_42 = arith.constant dense<0.000000e+00> : vector<128x128xf32>
    %85 = tpu.matmul %9, %84, %cst_42 {dimension_numbers = #tpu.dot_dimension_numbers<[1], [0], [0], [1], [0, 0, 1, 1], [], []>} : vector<128x128xbf16>, vector<128x128xbf16>, vector<128x128xf32> -> vector<128x128xf32>
    %86 = arith.truncf %85 : vector<128x128xf32> to vector<128x128xbf16>
    %c0_43 = arith.constant 0 : index
    %c464 = arith.constant 464 : index
    %c0_44 = arith.constant 0 : index
    %87 = vector.load %arg7[%c0_43, %c464, %c0_44] : memref<1x1520x128xbf16, #tpu.memory_space<vmem>>, vector<1x128x128xbf16>
    %88 = vector.shape_cast %87 : vector<1x128x128xbf16> to vector<128x128xbf16>
    %cst_45 = arith.constant dense<0.000000e+00> : vector<128x128xf32>
    %89 = tpu.matmul %86, %88, %cst_45 {dimension_numbers = #tpu.dot_dimension_numbers<[1], [0], [0], [1], [0, 0, 1, 1], [], []>} : vector<128x128xbf16>, vector<128x128xbf16>, vector<128x128xf32> -> vector<128x128xf32>
    %c0_46 = arith.constant 0 : index
    %c592 = arith.constant 592 : index
    %c0_47 = arith.constant 0 : index
    %90 = vector.load %arg7[%c0_46, %c592, %c0_47] : memref<1x1520x128xbf16, #tpu.memory_space<vmem>>, vector<1x128x128xbf16>
    %91 = vector.shape_cast %90 : vector<1x128x128xbf16> to vector<128x128xbf16>
    %cst_48 = arith.constant dense<0.000000e+00> : vector<128x128xf32>
    %92 = tpu.matmul %5, %91, %cst_48 {dimension_numbers = #tpu.dot_dimension_numbers<[1], [0], [0], [1], [0, 0, 1, 1], [], []>} : vector<128x128xbf16>, vector<128x128xbf16>, vector<128x128xf32> -> vector<128x128xf32>
    %93 = arith.addf %89, %92 : vector<128x128xf32>
    %c0_49 = arith.constant 0 : index
    %c720 = arith.constant 720 : index
    %c0_50 = arith.constant 0 : index
    %94 = vector.load %arg7[%c0_49, %c720, %c0_50] : memref<1x1520x128xbf16, #tpu.memory_space<vmem>>, vector<1x1x128xbf16>
    %95 = vector.shape_cast %94 : vector<1x1x128xbf16> to vector<1x128xbf16>
    %96 = arith.extf %95 : vector<1x128xbf16> to vector<1x128xf32>
    %97 = vector.broadcast %96 : vector<1x128xf32> to vector<128x128xf32>
    %98 = arith.addf %93, %97 : vector<128x128xf32>
    %cst_51 = arith.constant 0.000000e+00 : f32
    %99 = vector.broadcast %cst_51 : f32 to vector<128x128xf32>
    %100 = arith.maximumf %98, %99 : vector<128x128xf32>
    %c0_52 = arith.constant 0 : index
    %c736 = arith.constant 736 : index
    %c0_53 = arith.constant 0 : index
    %101 = vector.load %arg7[%c0_52, %c736, %c0_53] : memref<1x1520x128xbf16, #tpu.memory_space<vmem>>, vector<1x128x128xbf16>
    %102 = vector.shape_cast %101 : vector<1x128x128xbf16> to vector<128x128xbf16>
    %c0_54 = arith.constant 0 : index
    %c864 = arith.constant 864 : index
    %c0_55 = arith.constant 0 : index
    %103 = vector.load %arg7[%c0_54, %c864, %c0_55] : memref<1x1520x128xbf16, #tpu.memory_space<vmem>>, vector<1x1x128xbf16>
    %104 = vector.shape_cast %103 : vector<1x1x128xbf16> to vector<1x128xbf16>
    %105 = arith.extf %104 : vector<1x128xbf16> to vector<1x128xf32>
    %106 = arith.truncf %100 : vector<128x128xf32> to vector<128x128xbf16>
    %cst_56 = arith.constant dense<0.000000e+00> : vector<128x128xf32>
    %107 = tpu.matmul %106, %102, %cst_56 {dimension_numbers = #tpu.dot_dimension_numbers<[1], [0], [0], [1], [0, 0, 1, 1], [], []>} : vector<128x128xbf16>, vector<128x128xbf16>, vector<128x128xf32> -> vector<128x128xf32>
    %108 = vector.broadcast %105 : vector<1x128xf32> to vector<128x128xf32>
    %109 = arith.addf %107, %108 : vector<128x128xf32>
    %cst_57 = arith.constant 0.000000e+00 : f32
    %110 = vector.broadcast %cst_57 : f32 to vector<128x128xf32>
    %111 = arith.maximumf %109, %110 : vector<128x128xf32>
    %c0_58 = arith.constant 0 : index
    %c880 = arith.constant 880 : index
    %c0_59 = arith.constant 0 : index
    %112 = vector.load %arg7[%c0_58, %c880, %c0_59] : memref<1x1520x128xbf16, #tpu.memory_space<vmem>>, vector<1x128x128xbf16>
    %113 = vector.shape_cast %112 : vector<1x128x128xbf16> to vector<128x128xbf16>
    %c0_60 = arith.constant 0 : index
    %c1008 = arith.constant 1008 : index
    %c0_61 = arith.constant 0 : index
    %114 = vector.load %arg7[%c0_60, %c1008, %c0_61] : memref<1x1520x128xbf16, #tpu.memory_space<vmem>>, vector<1x1x128xbf16>
    %115 = vector.shape_cast %114 : vector<1x1x128xbf16> to vector<1x128xbf16>
    %116 = arith.extf %115 : vector<1x128xbf16> to vector<1x128xf32>
    %117 = arith.truncf %111 : vector<128x128xf32> to vector<128x128xbf16>
    %cst_62 = arith.constant dense<0.000000e+00> : vector<128x128xf32>
    %118 = tpu.matmul %117, %113, %cst_62 {dimension_numbers = #tpu.dot_dimension_numbers<[1], [0], [0], [1], [0, 0, 1, 1], [], []>} : vector<128x128xbf16>, vector<128x128xbf16>, vector<128x128xf32> -> vector<128x128xf32>
    %119 = vector.broadcast %116 : vector<1x128xf32> to vector<128x128xf32>
    %120 = arith.addf %118, %119 : vector<128x128xf32>
    %c0_63 = arith.constant 0 : index
    %c1024 = arith.constant 1024 : index
    %c0_64 = arith.constant 0 : index
    %121 = vector.load %arg7[%c0_63, %c1024, %c0_64] : memref<1x1520x128xbf16, #tpu.memory_space<vmem>>, vector<1x1x128xbf16>
    %122 = vector.shape_cast %121 : vector<1x1x128xbf16> to vector<1x128xbf16>
    %123 = arith.extf %122 : vector<1x128xbf16> to vector<1x128xf32>
    %c0_65 = arith.constant 0 : index
    %c1040 = arith.constant 1040 : index
    %c0_66 = arith.constant 0 : index
    %124 = vector.load %arg7[%c0_65, %c1040, %c0_66] : memref<1x1520x128xbf16, #tpu.memory_space<vmem>>, vector<1x1x128xbf16>
    %125 = vector.shape_cast %124 : vector<1x1x128xbf16> to vector<1x128xbf16>
    %126 = arith.extf %125 : vector<1x128xbf16> to vector<1x128xf32>
    %127 = tpu.iota {dimensions = array<i32: 1>} : vector<1x128xi32>
    %c32_i32_67 = arith.constant 32 : i32
    %128 = vector.broadcast %c32_i32_67 : i32 to vector<1x128xi32>
    %129 = arith.cmpi slt, %127, %128 : vector<1x128xi32>
    %130 = arith.extui %129 : vector<1x128xi1> to vector<1x128xi32>
    %131 = arith.sitofp %130 : vector<1x128xi32> to vector<1x128xf32>
    %cst_68 = arith.constant dense<0.000000e+00> : vector<128xf32>
    %132 = vector.multi_reduction <add>, %120, %cst_68 [1] : vector<128x128xf32> to vector<128xf32>
    %133 = vector.shape_cast %132 : vector<128xf32> to vector<128x1xf32>
    %cst_69 = arith.constant 3.125000e-02 : f32
    %134 = vector.broadcast %cst_69 : f32 to vector<128x1xf32>
    %135 = arith.mulf %133, %134 : vector<128x1xf32>
    %136 = vector.broadcast %135 : vector<128x1xf32> to vector<128x128xf32>
    %137 = arith.subf %120, %136 : vector<128x128xf32>
    %138 = vector.broadcast %131 : vector<1x128xf32> to vector<128x128xf32>
    %139 = arith.mulf %137, %138 : vector<128x128xf32>
    %140 = arith.mulf %139, %139 : vector<128x128xf32>
    %cst_70 = arith.constant dense<0.000000e+00> : vector<128xf32>
    %141 = vector.multi_reduction <add>, %140, %cst_70 [1] : vector<128x128xf32> to vector<128xf32>
    %142 = vector.shape_cast %141 : vector<128xf32> to vector<128x1xf32>
    %cst_71 = arith.constant 3.125000e-02 : f32
    %143 = vector.broadcast %cst_71 : f32 to vector<128x1xf32>
    %144 = arith.mulf %142, %143 : vector<128x1xf32>
    %cst_72 = arith.constant 9.99999974E-6 : f32
    %145 = vector.broadcast %cst_72 : f32 to vector<128x1xf32>
    %146 = arith.addf %144, %145 : vector<128x1xf32>
    %147 = math.rsqrt %146 : vector<128x1xf32>
    %148 = vector.broadcast %147 : vector<128x1xf32> to vector<128x128xf32>
    %149 = arith.mulf %139, %148 : vector<128x128xf32>
    %150 = vector.broadcast %123 : vector<1x128xf32> to vector<128x128xf32>
    %151 = arith.mulf %149, %150 : vector<128x128xf32>
    %152 = vector.broadcast %126 : vector<1x128xf32> to vector<128x128xf32>
    %153 = arith.addf %151, %152 : vector<128x128xf32>
    %154 = arith.truncf %153 : vector<128x128xf32> to vector<128x128xbf16>
    %c0_73 = arith.constant 0 : index
    %c128_74 = arith.constant 128 : index
    %c0_75 = arith.constant 0 : index
    %155 = vector.load %arg6[%c0_73, %c128_74, %c0_75] : memref<1x256x256xbf16, #tpu.memory_space<vmem>>, vector<1x128x256xbf16>
    %156 = vector.shape_cast %155 : vector<1x128x256xbf16> to vector<128x256xbf16>
    %cst_76 = arith.constant dense<0.000000e+00> : vector<128x256xf32>
    %157 = tpu.matmul %154, %156, %cst_76 {dimension_numbers = #tpu.dot_dimension_numbers<[1], [0], [0], [1], [0, 0, 1, 1], [], []>} : vector<128x128xbf16>, vector<128x256xbf16>, vector<128x256xf32> -> vector<128x256xf32>
    %158 = vector.extract_strided_slice %157 {offsets = [0, 0], sizes = [128, 128], strides = [1, 1]} : vector<128x256xf32> to vector<128x128xf32>
    %159 = arith.truncf %158 : vector<128x128xf32> to vector<128x128xbf16>
    %160 = vector.extract_strided_slice %157 {offsets = [0, 128], sizes = [128, 128], strides = [1, 1]} : vector<128x256xf32> to vector<128x128xf32>
    %161 = arith.truncf %160 : vector<128x128xf32> to vector<128x128xbf16>
    %cst_77 = arith.constant dense<0.000000e+00> : vector<128x128xf32>
    %162 = tpu.matmul %7, %159, %cst_77 {dimension_numbers = #tpu.dot_dimension_numbers<[1], [0], [0], [1], [0, 0, 1, 1], [], []>} : vector<128x128xbf16>, vector<128x128xbf16>, vector<128x128xf32> -> vector<128x128xf32>
    %cst_78 = arith.constant dense<0.000000e+00> : vector<128x128xf32>
    %163 = tpu.matmul %8, %161, %cst_78 {dimension_numbers = #tpu.dot_dimension_numbers<[1], [0], [0], [1], [0, 0, 1, 1], [], []>} : vector<128x128xbf16>, vector<128x128xbf16>, vector<128x128xf32> -> vector<128x128xf32>
    %164 = arith.addf %162, %163 : vector<128x128xf32>
    %c0_79 = arith.constant 0 : index
    %c1056 = arith.constant 1056 : index
    %c0_80 = arith.constant 0 : index
    %165 = vector.load %arg7[%c0_79, %c1056, %c0_80] : memref<1x1520x128xbf16, #tpu.memory_space<vmem>>, vector<1x128x128xbf16>
    %166 = vector.shape_cast %165 : vector<1x128x128xbf16> to vector<128x128xbf16>
    %cst_81 = arith.constant dense<0.000000e+00> : vector<128x128xf32>
    %167 = tpu.matmul %6, %166, %cst_81 {dimension_numbers = #tpu.dot_dimension_numbers<[1], [0], [0], [1], [0, 0, 1, 1], [], []>} : vector<128x128xbf16>, vector<128x128xbf16>, vector<128x128xf32> -> vector<128x128xf32>
    %168 = arith.addf %164, %167 : vector<128x128xf32>
    %c0_82 = arith.constant 0 : index
    %c1184 = arith.constant 1184 : index
    %c0_83 = arith.constant 0 : index
    %169 = vector.load %arg7[%c0_82, %c1184, %c0_83] : memref<1x1520x128xbf16, #tpu.memory_space<vmem>>, vector<1x1x128xbf16>
    %170 = vector.shape_cast %169 : vector<1x1x128xbf16> to vector<1x128xbf16>
    %171 = arith.extf %170 : vector<1x128xbf16> to vector<1x128xf32>
    %172 = vector.broadcast %171 : vector<1x128xf32> to vector<128x128xf32>
    %173 = arith.addf %168, %172 : vector<128x128xf32>
    %cst_84 = arith.constant 0.000000e+00 : f32
    %174 = vector.broadcast %cst_84 : f32 to vector<128x128xf32>
    %175 = arith.maximumf %173, %174 : vector<128x128xf32>
    %c0_85 = arith.constant 0 : index
    %c1200 = arith.constant 1200 : index
    %c0_86 = arith.constant 0 : index
    %176 = vector.load %arg7[%c0_85, %c1200, %c0_86] : memref<1x1520x128xbf16, #tpu.memory_space<vmem>>, vector<1x128x128xbf16>
    %177 = vector.shape_cast %176 : vector<1x128x128xbf16> to vector<128x128xbf16>
    %c0_87 = arith.constant 0 : index
    %c1328 = arith.constant 1328 : index
    %c0_88 = arith.constant 0 : index
    %178 = vector.load %arg7[%c0_87, %c1328, %c0_88] : memref<1x1520x128xbf16, #tpu.memory_space<vmem>>, vector<1x1x128xbf16>
    %179 = vector.shape_cast %178 : vector<1x1x128xbf16> to vector<1x128xbf16>
    %180 = arith.extf %179 : vector<1x128xbf16> to vector<1x128xf32>
    %181 = arith.truncf %175 : vector<128x128xf32> to vector<128x128xbf16>
    %cst_89 = arith.constant dense<0.000000e+00> : vector<128x128xf32>
    %182 = tpu.matmul %181, %177, %cst_89 {dimension_numbers = #tpu.dot_dimension_numbers<[1], [0], [0], [1], [0, 0, 1, 1], [], []>} : vector<128x128xbf16>, vector<128x128xbf16>, vector<128x128xf32> -> vector<128x128xf32>
    %183 = vector.broadcast %180 : vector<1x128xf32> to vector<128x128xf32>
    %184 = arith.addf %182, %183 : vector<128x128xf32>
    %cst_90 = arith.constant 0.000000e+00 : f32
    %185 = vector.broadcast %cst_90 : f32 to vector<128x128xf32>
    %186 = arith.maximumf %184, %185 : vector<128x128xf32>
    %c0_91 = arith.constant 0 : index
    %c1344 = arith.constant 1344 : index
    %c0_92 = arith.constant 0 : index
    %187 = vector.load %arg7[%c0_91, %c1344, %c0_92] : memref<1x1520x128xbf16, #tpu.memory_space<vmem>>, vector<1x128x128xbf16>
    %188 = vector.shape_cast %187 : vector<1x128x128xbf16> to vector<128x128xbf16>
    %c0_93 = arith.constant 0 : index
    %c1472 = arith.constant 1472 : index
    %c0_94 = arith.constant 0 : index
    %189 = vector.load %arg7[%c0_93, %c1472, %c0_94] : memref<1x1520x128xbf16, #tpu.memory_space<vmem>>, vector<1x1x128xbf16>
    %190 = vector.shape_cast %189 : vector<1x1x128xbf16> to vector<1x128xbf16>
    %191 = arith.extf %190 : vector<1x128xbf16> to vector<1x128xf32>
    %192 = arith.truncf %186 : vector<128x128xf32> to vector<128x128xbf16>
    %cst_95 = arith.constant dense<0.000000e+00> : vector<128x128xf32>
    %193 = tpu.matmul %192, %188, %cst_95 {dimension_numbers = #tpu.dot_dimension_numbers<[1], [0], [0], [1], [0, 0, 1, 1], [], []>} : vector<128x128xbf16>, vector<128x128xbf16>, vector<128x128xf32> -> vector<128x128xf32>
    %194 = vector.broadcast %191 : vector<1x128xf32> to vector<128x128xf32>
    %195 = arith.addf %193, %194 : vector<128x128xf32>
    %c0_96 = arith.constant 0 : index
    %c1488 = arith.constant 1488 : index
    %c0_97 = arith.constant 0 : index
    %196 = vector.load %arg7[%c0_96, %c1488, %c0_97] : memref<1x1520x128xbf16, #tpu.memory_space<vmem>>, vector<1x1x128xbf16>
    %197 = vector.shape_cast %196 : vector<1x1x128xbf16> to vector<1x128xbf16>
    %198 = arith.extf %197 : vector<1x128xbf16> to vector<1x128xf32>
    %c0_98 = arith.constant 0 : index
    %c1504 = arith.constant 1504 : index
    %c0_99 = arith.constant 0 : index
    %199 = vector.load %arg7[%c0_98, %c1504, %c0_99] : memref<1x1520x128xbf16, #tpu.memory_space<vmem>>, vector<1x1x128xbf16>
    %200 = vector.shape_cast %199 : vector<1x1x128xbf16> to vector<1x128xbf16>
    %201 = arith.extf %200 : vector<1x128xbf16> to vector<1x128xf32>
    %202 = tpu.iota {dimensions = array<i32: 1>} : vector<1x128xi32>
    %c32_i32_100 = arith.constant 32 : i32
    %203 = vector.broadcast %c32_i32_100 : i32 to vector<1x128xi32>
    %204 = arith.cmpi slt, %202, %203 : vector<1x128xi32>
    %205 = arith.extui %204 : vector<1x128xi1> to vector<1x128xi32>
    %206 = arith.sitofp %205 : vector<1x128xi32> to vector<1x128xf32>
    %cst_101 = arith.constant dense<0.000000e+00> : vector<128xf32>
    %207 = vector.multi_reduction <add>, %195, %cst_101 [1] : vector<128x128xf32> to vector<128xf32>
    %208 = vector.shape_cast %207 : vector<128xf32> to vector<128x1xf32>
    %cst_102 = arith.constant 3.125000e-02 : f32
    %209 = vector.broadcast %cst_102 : f32 to vector<128x1xf32>
    %210 = arith.mulf %208, %209 : vector<128x1xf32>
    %211 = vector.broadcast %210 : vector<128x1xf32> to vector<128x128xf32>
    %212 = arith.subf %195, %211 : vector<128x128xf32>
    %213 = vector.broadcast %206 : vector<1x128xf32> to vector<128x128xf32>
    %214 = arith.mulf %212, %213 : vector<128x128xf32>
    %215 = arith.mulf %214, %214 : vector<128x128xf32>
    %cst_103 = arith.constant dense<0.000000e+00> : vector<128xf32>
    %216 = vector.multi_reduction <add>, %215, %cst_103 [1] : vector<128x128xf32> to vector<128xf32>
    %217 = vector.shape_cast %216 : vector<128xf32> to vector<128x1xf32>
    %cst_104 = arith.constant 3.125000e-02 : f32
    %218 = vector.broadcast %cst_104 : f32 to vector<128x1xf32>
    %219 = arith.mulf %217, %218 : vector<128x1xf32>
    %cst_105 = arith.constant 9.99999974E-6 : f32
    %220 = vector.broadcast %cst_105 : f32 to vector<128x1xf32>
    %221 = arith.addf %219, %220 : vector<128x1xf32>
    %222 = math.rsqrt %221 : vector<128x1xf32>
    %223 = vector.broadcast %222 : vector<128x1xf32> to vector<128x128xf32>
    %224 = arith.mulf %214, %223 : vector<128x128xf32>
    %225 = vector.broadcast %198 : vector<1x128xf32> to vector<128x128xf32>
    %226 = arith.mulf %224, %225 : vector<128x128xf32>
    %227 = vector.broadcast %201 : vector<1x128xf32> to vector<128x128xf32>
    %228 = arith.addf %226, %227 : vector<128x128xf32>
    %229 = arith.addf %153, %3 : vector<128x128xf32>
    %c0_106 = arith.constant 0 : index
    %c0_107 = arith.constant 0 : index
    %230 = vector.load %arg8[%c0_106, %c0_107] : memref<128x128xf32, #tpu.memory_space<vmem>>, vector<128x128xf32>
    tpu.vector_store %arg8[%c0_106, %c0_107], %229 {strides = array<i32>} : memref<128x128xf32, #tpu.memory_space<vmem>>, vector<128x128xf32>,
    %231 = arith.addf %228, %4 : vector<128x128xf32>
    %c0_108 = arith.constant 0 : index
    %c0_109 = arith.constant 0 : index
    %232 = vector.load %arg9[%c0_108, %c0_109] : memref<128x128xf32, #tpu.memory_space<vmem>>, vector<128x128xf32>
    tpu.vector_store %arg9[%c0_108, %c0_109], %231 {strides = array<i32>} : memref<128x128xf32, #tpu.memory_space<vmem>>, vector<128x128xf32>,
    return
  }
  func.func @transform_0(%arg0: i32) -> (i32, i32) {
    %c0_i32 = arith.constant 0 : i32
    %c0_i32_0 = arith.constant 0 : i32
    %c0_i32_1 = arith.constant 0 : i32
    return %c0_i32, %c0_i32_0 : i32, i32
  }
  func.func @transform_1(%arg0: i32) -> (i32, i32) {
    %c0_i32 = arith.constant 0 : i32
    %c0_i32_0 = arith.constant 0 : i32
    %c0_i32_1 = arith.constant 0 : i32
    return %c0_i32, %c0_i32_0 : i32, i32
  }
  func.func @transform_2(%arg0: i32) -> (i32, i32) {
    %c0_i32 = arith.constant 0 : i32
    %c0_i32_0 = arith.constant 0 : i32
    %c0_i32_1 = arith.constant 0 : i32
    return %c0_i32, %c0_i32_0 : i32, i32
  }
  func.func @transform_3(%arg0: i32) -> (i32, i32) {
    %c0_i32 = arith.constant 0 : i32
    %c0_i32_0 = arith.constant 0 : i32
    %c0_i32_1 = arith.constant 0 : i32
    return %c0_i32, %c0_i32_0 : i32, i32
  }
  func.func @transform_4(%arg0: i32) -> (i32, i32) {
    %c0_i32 = arith.constant 0 : i32
    %c0_i32_0 = arith.constant 0 : i32
    %c0_i32_1 = arith.constant 0 : i32
    return %c0_i32, %c0_i32_0 : i32, i32
  }
  func.func @transform_5(%arg0: i32) -> (i32, i32, i32) {
    %c0_i32 = arith.constant 0 : i32
    %c0_i32_0 = arith.constant 0 : i32
    %c0_i32_1 = arith.constant 0 : i32
    return %arg0, %c0_i32, %c0_i32_0 : i32, i32, i32
  }
  func.func @transform_6(%arg0: i32) -> (i32, i32, i32) {
    %c0_i32 = arith.constant 0 : i32
    %c0_i32_0 = arith.constant 0 : i32
    %c0_i32_1 = arith.constant 0 : i32
    return %arg0, %c0_i32, %c0_i32_0 : i32, i32, i32
  }
  func.func @transform_7(%arg0: i32) -> (i32, i32) {
    %c0_i32 = arith.constant 0 : i32
    %c0_i32_0 = arith.constant 0 : i32
    %c0_i32_1 = arith.constant 0 : i32
    return %c0_i32, %c0_i32_0 : i32, i32
  }
  func.func @transform_8(%arg0: i32) -> (i32, i32) {
    %c0_i32 = arith.constant 0 : i32
    %c0_i32_0 = arith.constant 0 : i32
    %c0_i32_1 = arith.constant 0 : i32
    return %c0_i32, %c0_i32_0 : i32, i32
  }
}

</mosaic_0001>

<llo_original>
// kernel: tpu_custom_call.1
$region0: #{tpu_custom_call.1}
  #allocation0 [shape = 'u32[]', space=smem, size = 0x4, offset = 0x4, fixed_abs, tag = 'smem constant byte address 0x4 - core index']
  #allocation1 [shape = 'u32[144,128]{1,0:T(1,128)}', space=vmem, size = 0x12000, scoped, tag = 'internal scratch']
  %s0 = inlined_call_operand.hbm [shape: f32[128,128], index: 0, kind: input, shape index: {}]
  %s1 = inlined_call_operand.hbm [shape: f32[128,128], index: 1, kind: input, shape index: {}]
  %s2 = inlined_call_operand.hbm [shape: bf16[128,128], index: 2, kind: input, shape index: {}]
  %s3 = inlined_call_operand.hbm [shape: bf16[128,128], index: 3, kind: input, shape index: {}]
  %s4 = inlined_call_operand.hbm [shape: bf16[128,128], index: 4, kind: input, shape index: {}]
  %s5 = inlined_call_operand.hbm [shape: bf16[2,256,256], index: 5, kind: input, shape index: {}]
  %s6 = inlined_call_operand.hbm [shape: bf16[2,1520,128], index: 6, kind: input, shape index: {}]
  %s7 = inlined_call_operand.hbm [shape: f32[128,128], index: 7, kind: output, shape index: {0}]
  %s8 = inlined_call_operand.hbm [shape: f32[128,128], index: 8, kind: output, shape index: {1}]
  %9 = xla_tuple %s7, %s8
  %s10 = sld [smem:[#allocation0]]
  $region101: #{tpu_custom_call.1} parent=0
    _
  %s12 = ssub.s32 1, %s10
  %s13 = scalar_select 0, %s12, %s10
  $region1: #{tpu_custom_call.1} parent=0
    #allocation2 [shape = 'u8[65536]{0}', space=vmem, size = 0x10000, scoped, tag = 'input window, operand 0, single buffered']
    #allocation3 [shape = 's32[2]{0}', space=sflag, size = 0x8, scoped, tag = 'scoped memory for tpu_custom_call.1']
    #allocation4 [shape = 's32[2]{0}', space=sflag, size = 0x8, scoped, tag = 'scoped memory for tpu_custom_call.1']
    #allocation5 [shape = 'u8[65536]{0}', space=vmem, size = 0x10000, scoped, tag = 'input window, operand 1, single buffered']
    #allocation6 [shape = 's32[1]{0}', space=sflag, size = 0x4, scoped, tag = 'scoped memory for tpu_custom_call.1']
    #allocation7 [shape = 'u8[32768]{0}', space=vmem, size = 0x8000, scoped, tag = 'input window, operand 2, single buffered']
    #allocation8 [shape = 'u8[32768]{0}', space=vmem, size = 0x8000, scoped, tag = 'input window, operand 3, single buffered']
    #allocation9 [shape = 's32[1]{0}', space=sflag, size = 0x4, scoped, tag = 'scoped memory for tpu_custom_call.1']
    #allocation10 [shape = 'u8[32768]{0}', space=vmem, size = 0x8000, scoped, tag = 'input window, operand 4, single buffered']
    #allocation11 [shape = 'u8[262144]{0}', space=vmem, size = 0x40000, scoped, tag = 'input window, operand 5']
    #allocation12 [shape = 's32[2]{0}', space=sflag, size = 0x8, scoped, tag = 'scoped memory for tpu_custom_call.1']
    #allocation13 [shape = 'u8[778240]{0}', space=vmem, size = 0xbe000, scoped, tag = 'input window, operand 6']
    #allocation14 [shape = 'u8[65536]{0}', space=vmem, size = 0x10000, scoped, tag = 'output window, operand 0, single buffered']
    #allocation15 [shape = 'u8[65536]{0}', space=vmem, size = 0x10000, scoped, tag = 'output window, operand 1, single buffered']
    #allocation16 [shape = 's32[1]{0}', space=sflag, size = 0x4, scoped, tag = 'scoped memory for tpu_custom_call.1']
    %14 = vsyncpa [#allocation3], 0
    %15 = vsyncpa [#allocation6], 0
    %16 = vsyncpa [#allocation9], 0
    %17 = vsyncpa [#allocation12], 0
    %s18 = scalar_lea.sflag [#allocation12], 1
    %19 = vsyncpa %s18, 0
    %20 = vsyncpa [#allocation4], 0
    %21 = vsyncpa [#allocation16], 0
    loop: start=0, step=1, limit=4
    $region2: #{tpu_custom_call.1} parent=1 // loop_pre_header
      _
    $region3: #{tpu_custom_call.1} parent=1 // loop_header
      %s23 = sphi 0, %s27
      %p24 = scmp.ge.s32.totalorder %s23, 4
      %s31 = sphi 0, %s31
      %s33 = sphi 0, %s31
      %s34 = sphi 0, %s33
      %s48 = sphi 0, %s34
      %s52 = sphi 0, %s52
      %s54 = sphi 0, %s52
      %s55 = sphi 0, %s54
      %s69 = sphi 0, %s55
      %s73 = sphi 0, %s73
      %s75 = sphi 0, %s73
      %s76 = sphi 0, %s75
      %s90 = sphi 0, %s76
      %s94 = sphi 0, %s94
      %s96 = sphi 0, %s94
      %s97 = sphi 0, %s96
      %s111 = sphi 0, %s97
      %s115 = sphi 0, %s115
      %s117 = sphi 0, %s115
      %s118 = sphi 0, %s117
      %s132 = sphi 0, %s118
      %s138 = sphi 0, %s140
      %s141 = sphi 0, %s138
      %s142 = sphi 0, %s141
      %s158 = sphi 0, %s142
      %s164 = sphi 0, %s166
      %s167 = sphi 0, %s164
      %s168 = sphi 0, %s167
      %s184 = sphi 0, %s168
      %s188 = sphi 0, %s188
      %s190 = sphi 0, %s188
      %s191 = sphi 0, %s190
      %s205 = sphi 0, %s191
      %s209 = sphi 0, %s209
      %s211 = sphi 0, %s209
      %s212 = sphi 0, %s211
      %s226 = sphi 0, %s212
    $region4: #{tpu_custom_call.1} parent=1 // loop_header_branch
      %26 = sbr.rel (%p24) target = $region8
    $region5: #{tpu_custom_call.1} parent=1 // loop_body
      %s28 = ssub.s32 %s23, 1
      %s29 = ssub.s32 %s23, 2
      %s30 = sadd.s32 %s23, 1
      %s32 = sadd.s32 %s31, 1
      %p35 = scmp.eq.s32.totalorder %s23, 1
      %p36 = scmp.ne.s32.totalorder %s31, %s33
      %p37 = scmp.eq.s32.totalorder %s23, 0
      %p38 = por %p36, %p37
      %p39 = scmp.ne.s32.totalorder %s31, %s33
      %p40 = scmp.eq.s32.totalorder %s28, 1
      %p41 = por %p39, %p40
      %p42 = scmp.ne.s32.totalorder %s33, %s34
      %p43 = scmp.eq.s32.totalorder %s28, 0
      %p44 = por %p42, %p43
      %p45 = scmp.ne.s32.totalorder %s33, %s34
      %p46 = scmp.eq.s32.totalorder %s29, 1
      %p47 = por %p45, %p46
      %p49 = scmp.ne.s32.totalorder %s34, %s48
      %p50 = scmp.eq.s32.totalorder %s29, 0
      %p51 = por %p49, %p50
      %s53 = sadd.s32 %s52, 1
      %p56 = scmp.eq.s32.totalorder %s23, 1
      %p57 = scmp.ne.s32.totalorder %s52, %s54
      %p58 = scmp.eq.s32.totalorder %s23, 0
      %p59 = por %p57, %p58
      %p60 = scmp.ne.s32.totalorder %s52, %s54
      %p61 = scmp.eq.s32.totalorder %s28, 1
      %p62 = por %p60, %p61
      %p63 = scmp.ne.s32.totalorder %s54, %s55
      %p64 = scmp.eq.s32.totalorder %s28, 0
      %p65 = por %p63, %p64
      %p66 = scmp.ne.s32.totalorder %s54, %s55
      %p67 = scmp.eq.s32.totalorder %s29, 1
      %p68 = por %p66, %p67
      %p70 = scmp.ne.s32.totalorder %s55, %s69
      %p71 = scmp.eq.s32.totalorder %s29, 0
      %p72 = por %p70, %p71
      %s74 = sadd.s32 %s73, 1
      %p77 = scmp.eq.s32.totalorder %s23, 1
      %p78 = scmp.ne.s32.totalorder %s73, %s75
      %p79 = scmp.eq.s32.totalorder %s23, 0
      %p80 = por %p78, %p79
      %p81 = scmp.ne.s32.totalorder %s73, %s75
      %p82 = scmp.eq.s32.totalorder %s28, 1
      %p83 = por %p81, %p82
      %p84 = scmp.ne.s32.totalorder %s75, %s76
      %p85 = scmp.eq.s32.totalorder %s28, 0
      %p86 = por %p84, %p85
      %p87 = scmp.ne.s32.totalorder %s75, %s76
      %p88 = scmp.eq.s32.totalorder %s29, 1
      %p89 = por %p87, %p88
      %p91 = scmp.ne.s32.totalorder %s76, %s90
      %p92 = scmp.eq.s32.totalorder %s29, 0
      %p93 = por %p91, %p92
      %s95 = sadd.s32 %s94, 1
      %p98 = scmp.eq.s32.totalorder %s23, 1
      %p99 = scmp.ne.s32.totalorder %s94, %s96
      %p100 = scmp.eq.s32.totalorder %s23, 0
      %p101 = por %p99, %p100
      %p102 = scmp.ne.s32.totalorder %s94, %s96
      %p103 = scmp.eq.s32.totalorder %s28, 1
      %p104 = por %p102, %p103
      %p105 = scmp.ne.s32.totalorder %s96, %s97
      %p106 = scmp.eq.s32.totalorder %s28, 0
      %p107 = por %p105, %p106
      %p108 = scmp.ne.s32.totalorder %s96, %s97
      %p109 = scmp.eq.s32.totalorder %s29, 1
      %p110 = por %p108, %p109
      %p112 = scmp.ne.s32.totalorder %s97, %s111
      %p113 = scmp.eq.s32.totalorder %s29, 0
      %p114 = por %p112, %p113
      %s116 = sadd.s32 %s115, 1
      %p119 = scmp.eq.s32.totalorder %s23, 1
      %p120 = scmp.ne.s32.totalorder %s115, %s117
      %p121 = scmp.eq.s32.totalorder %s23, 0
      %p122 = por %p120, %p121
      %p123 = scmp.ne.s32.totalorder %s115, %s117
      %p124 = scmp.eq.s32.totalorder %s28, 1
      %p125 = por %p123, %p124
      %p126 = scmp.ne.s32.totalorder %s117, %s118
      %p127 = scmp.eq.s32.totalorder %s28, 0
      %p128 = por %p126, %p127
      %p129 = scmp.ne.s32.totalorder %s117, %s118
      %p130 = scmp.eq.s32.totalorder %s29, 1
      %p131 = por %p129, %p130
      %p133 = scmp.ne.s32.totalorder %s118, %s132
      %p134 = scmp.eq.s32.totalorder %s29, 0
      %p135 = por %p133, %p134
      %s136 = ssub.s32 %s23, %s30
      %p137 = scmp.eq.s32.totalorder %s136, 0
      %s139 = sadd.s32 %s138, 1
      %s140 = scalar_select %p137, %s138, %s139
      %p143 = pneg %p137
      %p144 = scmp.eq.s32.totalorder %s23, 1
      %p145 = por %p143, %p144
      %p146 = scmp.ne.s32.totalorder %s138, %s141
      %p147 = scmp.eq.s32.totalorder %s23, 0
      %p148 = por %p146, %p147
      %p149 = scmp.ne.s32.totalorder %s138, %s141
      %p150 = scmp.eq.s32.totalorder %s28, 1
      %p151 = por %p149, %p150
      %p152 = scmp.ne.s32.totalorder %s141, %s142
      %p153 = scmp.eq.s32.totalorder %s28, 0
      %p154 = por %p152, %p153
      %p155 = scmp.ne.s32.totalorder %s141, %s142
      %p156 = scmp.eq.s32.totalorder %s29, 1
      %p157 = por %p155, %p156
      %p159 = scmp.ne.s32.totalorder %s142, %s158
      %p160 = scmp.eq.s32.totalorder %s29, 0
      %p161 = por %p159, %p160
      %s162 = ssub.s32 %s23, %s30
      %p163 = scmp.eq.s32.totalorder %s162, 0
      %s165 = sadd.s32 %s164, 1
      %s166 = scalar_select %p163, %s164, %s165
      %p169 = pneg %p163
      %p170 = scmp.eq.s32.totalorder %s23, 1
      %p171 = por %p169, %p170
      %p172 = scmp.ne.s32.totalorder %s164, %s167
      %p173 = scmp.eq.s32.totalorder %s23, 0
      %p174 = por %p172, %p173
      %p175 = scmp.ne.s32.totalorder %s164, %s167
      %p176 = scmp.eq.s32.totalorder %s28, 1
      %p177 = por %p175, %p176
      %p178 = scmp.ne.s32.totalorder %s167, %s168
      %p179 = scmp.eq.s32.totalorder %s28, 0
      %p180 = por %p178, %p179
      %p181 = scmp.ne.s32.totalorder %s167, %s168
      %p182 = scmp.eq.s32.totalorder %s29, 1
      %p183 = por %p181, %p182
      %p185 = scmp.ne.s32.totalorder %s168, %s184
      %p186 = scmp.eq.s32.totalorder %s29, 0
      %p187 = por %p185, %p186
      %s189 = sadd.s32 %s188, 1
      %p192 = scmp.eq.s32.totalorder %s23, 1
      %p193 = scmp.ne.s32.totalorder %s188, %s190
      %p194 = scmp.eq.s32.totalorder %s23, 0
      %p195 = por %p193, %p194
      %p196 = scmp.ne.s32.totalorder %s188, %s190
      %p197 = scmp.eq.s32.totalorder %s28, 1
      %p198 = por %p196, %p197
      %p199 = scmp.ne.s32.totalorder %s190, %s191
      %p200 = scmp.eq.s32.totalorder %s28, 0
      %p201 = por %p199, %p200
      %p202 = scmp.ne.s32.totalorder %s190, %s191
      %p203 = scmp.eq.s32.totalorder %s29, 1
      %p204 = por %p202, %p203
      %p206 = scmp.ne.s32.totalorder %s191, %s205
      %p207 = scmp.eq.s32.totalorder %s29, 0
      %p208 = por %p206, %p207
      %s210 = sadd.s32 %s209, 1
      %p213 = scmp.eq.s32.totalorder %s23, 1
      %p214 = scmp.ne.s32.totalorder %s209, %s211
      %p215 = scmp.eq.s32.totalorder %s23, 0
      %p216 = por %p214, %p215
      %p217 = scmp.ne.s32.totalorder %s209, %s211
      %p218 = scmp.eq.s32.totalorder %s28, 1
      %p219 = por %p217, %p218
      %p220 = scmp.ne.s32.totalorder %s211, %s212
      %p221 = scmp.eq.s32.totalorder %s28, 0
      %p222 = por %p220, %p221
      %p223 = scmp.ne.s32.totalorder %s211, %s212
      %p224 = scmp.eq.s32.totalorder %s29, 1
      %p225 = por %p223, %p224
      %p227 = scmp.ne.s32.totalorder %s212, %s226
      %p228 = scmp.eq.s32.totalorder %s29, 0
      %p229 = por %p227, %p228
      %p230 = scmp.le.s32.totalorder 1, %s23
      %p231 = scmp.lt.s32.totalorder %s23, 3
      %p232 = pnand %p230, %p231
      %p233 = pneg %p232
      // Predicated region
      $region9: #{tpu_custom_call.1} parent=5 // pred_check
        _
      $region10: #{tpu_custom_call.1} parent=5 // pred_check_branch
        %235 = sbr.rel (%p232) target = $region12
      $region11: #{tpu_custom_call.1} parent=5 // pred_region
        %s236 = ssub.s32 %s23, 1
        // Predicated region
        $region13: #{tpu_custom_call.1} parent=11 // pred_check
          %p237 = pneg %p44
        $region14: #{tpu_custom_call.1} parent=11 // pred_check_branch
          %239 = sbr.rel (%p237) target = $region16
        $region15: #{tpu_custom_call.1} parent=11 // pred_region
          %s241 = ssub.s32 2048, 2048
          %242 = vsyncadd [#allocation3], %s241
          %s243 = sshll.u32 [#allocation2], 4
          %s244 = int_to_ptr.vmem [resolvable:$true] %s243
          %249 = dma.hbm_to_vmem [thread:$0]  %s0, 2048, %s244, [#allocation3], 128, 128, 8
        $region16: #{tpu_custom_call.1} parent=11 // pred_fallthru
          _
        // Predicated region
        $region17: #{tpu_custom_call.1} parent=11 // pred_check
          %p250 = pneg %p65
        $region18: #{tpu_custom_call.1} parent=11 // pred_check_branch
          %252 = sbr.rel (%p250) target = $region20
        $region19: #{tpu_custom_call.1} parent=11 // pred_region
          %s254 = ssub.s32 2048, 2048
          %255 = vsyncadd [#allocation6], %s254
          %s256 = sshll.u32 [#allocation5], 4
          %s257 = int_to_ptr.vmem [resolvable:$true] %s256
          %262 = dma.hbm_to_vmem [thread:$0]  %s1, 2048, %s257, [#allocation6], 128, 128, 8
        $region20: #{tpu_custom_call.1} parent=11 // pred_fallthru
          _
        // Predicated region
        $region21: #{tpu_custom_call.1} parent=11 // pred_check
          %p263 = pneg %p86
        $region22: #{tpu_custom_call.1} parent=11 // pred_check_branch
          %265 = sbr.rel (%p263) target = $region24
        $region23: #{tpu_custom_call.1} parent=11 // pred_region
          %s267 = ssub.s32 1024, 1024
          %268 = vsyncadd [#allocation6], %s267
          %s269 = sshll.u32 [#allocation7], 4
          %s270 = int_to_ptr.vmem [resolvable:$true] %s269
          %275 = dma.hbm_to_vmem [thread:$0]  %s2, 1024, %s270, [#allocation6], 64, 64, 4
        $region24: #{tpu_custom_call.1} parent=11 // pred_fallthru
          _
        // Predicated region
        $region25: #{tpu_custom_call.1} parent=11 // pred_check
          %p276 = pneg %p107
        $region26: #{tpu_custom_call.1} parent=11 // pred_check_branch
          %278 = sbr.rel (%p276) target = $region28
        $region27: #{tpu_custom_call.1} parent=11 // pred_region
          %s280 = ssub.s32 1024, 1024
          %281 = vsyncadd [#allocation9], %s280
          %s282 = sshll.u32 [#allocation8], 4
          %s283 = int_to_ptr.vmem [resolvable:$true] %s282
          %288 = dma.hbm_to_vmem [thread:$0]  %s3, 1024, %s283, [#allocation9], 64, 64, 4
        $region28: #{tpu_custom_call.1} parent=11 // pred_fallthru
          _
        // Predicated region
        $region29: #{tpu_custom_call.1} parent=11 // pred_check
          %p289 = pneg %p128
        $region30: #{tpu_custom_call.1} parent=11 // pred_check_branch
          %291 = sbr.rel (%p289) target = $region32
        $region31: #{tpu_custom_call.1} parent=11 // pred_region
          %s293 = ssub.s32 1024, 1024
          %294 = vsyncadd [#allocation9], %s293
          %s295 = sshll.u32 [#allocation10], 4
          %s296 = int_to_ptr.vmem [resolvable:$true] %s295
          %301 = dma.hbm_to_vmem [thread:$0]  %s4, 1024, %s296, [#allocation9], 64, 64, 4
        $region32: #{tpu_custom_call.1} parent=11 // pred_fallthru
          _
      $region12: #{tpu_custom_call.1} parent=5 // pred_fallthru
        _
      %p302 = scmp.lt.s32.totalorder %s23, 2
      // Predicated region
      $region33: #{tpu_custom_call.1} parent=5 // pred_check
        %p303 = pneg %p302
      $region34: #{tpu_custom_call.1} parent=5 // pred_check_branch
        %305 = sbr.rel (%p303) target = $region36
      $region35: #{tpu_custom_call.1} parent=5 // pred_region
        // Predicated region
        $region37: #{tpu_custom_call.1} parent=35 // pred_check
          %p306 = pneg %p148
        $region38: #{tpu_custom_call.1} parent=35 // pred_check_branch
          %308 = sbr.rel (%p306) target = $region40
        $region39: #{tpu_custom_call.1} parent=35 // pred_region
          %s309 = sand.u32 %s23, 1
          %s310 = scalar_lea.sflag [#allocation12], %s309
          %s311 = sand.u32 %s138, 1
          %s312 = smul.addr %s311, 256
          %s313 = scalar_lea.vmem [#allocation11], %s312
          %s315 = ssub.s32 4096, 4096
          %316 = vsyncadd %s310, %s315
          %s317 = smul.addr %s23, 64
          %s318 = smul.addr %s317, 64
          %s319 = scalar_lea.hbm %s5, %s318
          %s320 = sshll.u32 %s313, 4
          %s321 = int_to_ptr.vmem [resolvable:$true] %s320
          %326 = dma.hbm_to_vmem [thread:$0]  %s319, 4096, %s321, %s310, 128, 128, 8
        $region40: #{tpu_custom_call.1} parent=35 // pred_fallthru
          _
        // Predicated region
        $region41: #{tpu_custom_call.1} parent=35 // pred_check
          %p327 = pneg %p174
        $region42: #{tpu_custom_call.1} parent=35 // pred_check_branch
          %329 = sbr.rel (%p327) target = $region44
        $region43: #{tpu_custom_call.1} parent=35 // pred_region
          %s330 = sand.u32 %s23, 1
          %s331 = scalar_lea.sflag [#allocation12], %s330
          %s332 = sand.u32 %s164, 1
          %s333 = smul.addr %s332, 760
          %s334 = scalar_lea.vmem [#allocation13], %s333
          %s336 = ssub.s32 12160, 12160
          %337 = vsyncadd %s331, %s336
          %s338 = smul.addr %s23, 190
          %s339 = smul.addr %s338, 64
          %s340 = scalar_lea.hbm %s6, %s339
          %s341 = sshll.u32 %s334, 4
          %s342 = int_to_ptr.vmem [resolvable:$true] %s341
          %347 = dma.hbm_to_vmem [thread:$0]  %s340, 12160, %s342, %s331, 64, 64, 4
        $region44: #{tpu_custom_call.1} parent=35 // pred_fallthru
          _
      $region36: #{tpu_custom_call.1} parent=5 // pred_fallthru
        _
      %p348 = scmp.le.s32.totalorder 1, %s23
      %p349 = scmp.lt.s32.totalorder %s23, 3
      %p350 = pnand %p348, %p349
      %p351 = pneg %p350
      // Predicated region
      $region45: #{tpu_custom_call.1} parent=5 // pred_check
        _
      $region46: #{tpu_custom_call.1} parent=5 // pred_check_branch
        %353 = sbr.rel (%p350) target = $region48
      $region47: #{tpu_custom_call.1} parent=5 // pred_region
        %s354 = ssub.s32 %s23, 1
        // Predicated region
        $region49: #{tpu_custom_call.1} parent=47 // pred_check
          %p355 = pneg %p44
        $region50: #{tpu_custom_call.1} parent=47 // pred_check_branch
          %357 = sbr.rel (%p355) target = $region52
        $region51: #{tpu_custom_call.1} parent=47 // pred_region
          %358 = dma.done [#allocation3], 2048
        $region52: #{tpu_custom_call.1} parent=47 // pred_fallthru
          _
        // Predicated region
        $region53: #{tpu_custom_call.1} parent=47 // pred_check
          %p359 = pneg %p65
        $region54: #{tpu_custom_call.1} parent=47 // pred_check_branch
          %361 = sbr.rel (%p359) target = $region56
        $region55: #{tpu_custom_call.1} parent=47 // pred_region
          %362 = dma.done [#allocation6], 2048
        $region56: #{tpu_custom_call.1} parent=47 // pred_fallthru
          _
        // Predicated region
        $region57: #{tpu_custom_call.1} parent=47 // pred_check
          %p363 = pneg %p86
        $region58: #{tpu_custom_call.1} parent=47 // pred_check_branch
          %365 = sbr.rel (%p363) target = $region60
        $region59: #{tpu_custom_call.1} parent=47 // pred_region
          %366 = dma.done [#allocation6], 1024
        $region60: #{tpu_custom_call.1} parent=47 // pred_fallthru
          _
        // Predicated region
        $region61: #{tpu_custom_call.1} parent=47 // pred_check
          %p367 = pneg %p107
        $region62: #{tpu_custom_call.1} parent=47 // pred_check_branch
          %369 = sbr.rel (%p367) target = $region64
        $region63: #{tpu_custom_call.1} parent=47 // pred_region
          %370 = dma.done [#allocation9], 1024
        $region64: #{tpu_custom_call.1} parent=47 // pred_fallthru
          _
        // Predicated region
        $region65: #{tpu_custom_call.1} parent=47 // pred_check
          %p371 = pneg %p128
        $region66: #{tpu_custom_call.1} parent=47 // pred_check_branch
          %373 = sbr.rel (%p371) target = $region68
        $region67: #{tpu_custom_call.1} parent=47 // pred_region
          %374 = dma.done [#allocation9], 1024
        $region68: #{tpu_custom_call.1} parent=47 // pred_fallthru
          _
        %s375 = sand.u32 %s28, 1
        %s376 = scalar_lea.sflag [#allocation12], %s375
        %s377 = sand.u32 %s141, 1
        %s378 = smul.addr %s377, 256
        %s379 = scalar_lea.vmem [#allocation11], %s378
        // Predicated region
        $region69: #{tpu_custom_call.1} parent=47 // pred_check
          %p380 = pneg %p154
        $region70: #{tpu_custom_call.1} parent=47 // pred_check_branch
          %382 = sbr.rel (%p380) target = $region72
        $region71: #{tpu_custom_call.1} parent=47 // pred_region
          %383 = dma.done %s376, 4096
        $region72: #{tpu_custom_call.1} parent=47 // pred_fallthru
          _
        %s384 = sand.u32 %s28, 1
        %s385 = scalar_lea.sflag [#allocation12], %s384
        %s386 = sand.u32 %s167, 1
        %s387 = smul.addr %s386, 760
        %s388 = scalar_lea.vmem [#allocation13], %s387
        // Predicated region
        $region73: #{tpu_custom_call.1} parent=47 // pred_check
          %p389 = pneg %p180
        $region74: #{tpu_custom_call.1} parent=47 // pred_check_branch
          %391 = sbr.rel (%p389) target = $region76
        $region75: #{tpu_custom_call.1} parent=47 // pred_region
          %392 = dma.done %s385, 12160
        $region76: #{tpu_custom_call.1} parent=47 // pred_fallthru
          _
        %p393 = pneg %p44
        %p394 = pneg %p41
        %p395 = pneg %p65
        %p396 = pneg %p62
        %p397 = pneg %p86
        %p398 = pneg %p83
        %p399 = pneg %p107
        %p400 = pneg %p104
        %p401 = pneg %p128
        %p402 = pneg %p125
        %s403 = sand.u32 %s28, 1
        %s404 = scalar_lea.sflag [#allocation12], %s403
        %s405 = sand.u32 %s141, 1
        %s406 = smul.addr %s405, 256
        %s407 = scalar_lea.vmem [#allocation11], %s406
        %p408 = pneg %p154
        %p409 = pneg %p151
        %s410 = sand.u32 %s28, 1
        %s411 = scalar_lea.sflag [#allocation12], %s410
        %s412 = sand.u32 %s167, 1
        %s413 = smul.addr %s412, 760
        %s414 = scalar_lea.vmem [#allocation13], %s413
        %p415 = pneg %p180
        %p416 = pneg %p177
        %p417 = pneg %p201
        %p418 = pneg %p198
        %p419 = pneg %p222
        %p420 = pneg %p219
        %p422 = scmp.eq.s32.totalorder %s28, 0
        // Predicated region
        $region77: #{tpu_custom_call.1} parent=47 // pred_check
          %p423 = pneg %p422
        $region78: #{tpu_custom_call.1} parent=47 // pred_check_branch
          %425 = sbr.rel (%p423) target = $region80
        $region79: #{tpu_custom_call.1} parent=47 // pred_region
          %v426 = vld [vmem:[#allocation2] sm:$0xff]
          %v427 = vld [vmem:[#allocation2 + $0x8] sm:$0xff]
          %v428 = vld [vmem:[#allocation2 + $0x10] sm:$0xff]
          %v429 = vld [vmem:[#allocation2 + $0x18] sm:$0xff]
          %v430 = vld [vmem:[#allocation2 + $0x20] sm:$0xff]
          %v431 = vld [vmem:[#allocation2 + $0x28] sm:$0xff]
          %v432 = vld [vmem:[#allocation2 + $0x30] sm:$0xff]
          %v433 = vld [vmem:[#allocation2 + $0x38] sm:$0xff]
          %v434 = vld [vmem:[#allocation2 + $0x40] sm:$0xff]
          %v435 = vld [vmem:[#allocation2 + $0x48] sm:$0xff]
          %v436 = vld [vmem:[#allocation2 + $0x50] sm:$0xff]
          %v437 = vld [vmem:[#allocation2 + $0x58] sm:$0xff]
          %v438 = vld [vmem:[#allocation2 + $0x60] sm:$0xff]
          %v439 = vld [vmem:[#allocation2 + $0x68] sm:$0xff]
          %v440 = vld [vmem:[#allocation2 + $0x70] sm:$0xff]
          %v441 = vld [vmem:[#allocation2 + $0x78] sm:$0xff]
          %442 = vst [vmem:[#allocation14] sm:$0xff] %v426
          %443 = vst [vmem:[#allocation14 + $0x8] sm:$0xff] %v427
          %444 = vst [vmem:[#allocation14 + $0x10] sm:$0xff] %v428
          %445 = vst [vmem:[#allocation14 + $0x18] sm:$0xff] %v429
          %446 = vst [vmem:[#allocation14 + $0x20] sm:$0xff] %v430
          %447 = vst [vmem:[#allocation14 + $0x28] sm:$0xff] %v431
          %448 = vst [vmem:[#allocation14 + $0x30] sm:$0xff] %v432
          %449 = vst [vmem:[#allocation14 + $0x38] sm:$0xff] %v433
          %450 = vst [vmem:[#allocation14 + $0x40] sm:$0xff] %v434
          %451 = vst [vmem:[#allocation14 + $0x48] sm:$0xff] %v435
          %452 = vst [vmem:[#allocation14 + $0x50] sm:$0xff] %v436
          %453 = vst [vmem:[#allocation14 + $0x58] sm:$0xff] %v437
          %454 = vst [vmem:[#allocation14 + $0x60] sm:$0xff] %v438
          %455 = vst [vmem:[#allocation14 + $0x68] sm:$0xff] %v439
          %456 = vst [vmem:[#allocation14 + $0x70] sm:$0xff] %v440
          %457 = vst [vmem:[#allocation14 + $0x78] sm:$0xff] %v441
          %v458 = vld [vmem:[#allocation5] sm:$0xff]
          %v459 = vld [vmem:[#allocation5 + $0x8] sm:$0xff]
          %v460 = vld [vmem:[#allocation5 + $0x10] sm:$0xff]
          %v461 = vld [vmem:[#allocation5 + $0x18] sm:$0xff]
          %v462 = vld [vmem:[#allocation5 + $0x20] sm:$0xff]
          %v463 = vld [vmem:[#allocation5 + $0x28] sm:$0xff]
          %v464 = vld [vmem:[#allocation5 + $0x30] sm:$0xff]
          %v465 = vld [vmem:[#allocation5 + $0x38] sm:$0xff]
          %v466 = vld [vmem:[#allocation5 + $0x40] sm:$0xff]
          %v467 = vld [vmem:[#allocation5 + $0x48] sm:$0xff]
          %v468 = vld [vmem:[#allocation5 + $0x50] sm:$0xff]
          %v469 = vld [vmem:[#allocation5 + $0x58] sm:$0xff]
          %v470 = vld [vmem:[#allocation5 + $0x60] sm:$0xff]
          %v471 = vld [vmem:[#allocation5 + $0x68] sm:$0xff]
          %v472 = vld [vmem:[#allocation5 + $0x70] sm:$0xff]
          %v473 = vld [vmem:[#allocation5 + $0x78] sm:$0xff]
          %474 = vst [vmem:[#allocation15] sm:$0xff] %v458
          %475 = vst [vmem:[#allocation15 + $0x8] sm:$0xff] %v459
          %476 = vst [vmem:[#allocation15 + $0x10] sm:$0xff] %v460
          %477 = vst [vmem:[#allocation15 + $0x18] sm:$0xff] %v461
          %478 = vst [vmem:[#allocation15 + $0x20] sm:$0xff] %v462
          %479 = vst [vmem:[#allocation15 + $0x28] sm:$0xff] %v463
          %480 = vst [vmem:[#allocation15 + $0x30] sm:$0xff] %v464
          %481 = vst [vmem:[#allocation15 + $0x38] sm:$0xff] %v465
          %482 = vst [vmem:[#allocation15 + $0x40] sm:$0xff] %v466
          %483 = vst [vmem:[#allocation15 + $0x48] sm:$0xff] %v467
          %484 = vst [vmem:[#allocation15 + $0x50] sm:$0xff] %v468
          %485 = vst [vmem:[#allocation15 + $0x58] sm:$0xff] %v469
          %486 = vst [vmem:[#allocation15 + $0x60] sm:$0xff] %v470
          %487 = vst [vmem:[#allocation15 + $0x68] sm:$0xff] %v471
          %488 = vst [vmem:[#allocation15 + $0x70] sm:$0xff] %v472
          %489 = vst [vmem:[#allocation15 + $0x78] sm:$0xff] %v473
        $region80: #{tpu_custom_call.1} parent=47 // pred_fallthru
          _
        %v490 = vld [vmem:[#allocation14] sm:$0xff]
        %v491 = vld [vmem:[#allocation14 + $0x8] sm:$0xff]
        %v492 = vld [vmem:[#allocation14 + $0x10] sm:$0xff]
        %v493 = vld [vmem:[#allocation14 + $0x18] sm:$0xff]
        %v494 = vld [vmem:[#allocation14 + $0x20] sm:$0xff]
        %v495 = vld [vmem:[#allocation14 + $0x28] sm:$0xff]
        %v496 = vld [vmem:[#allocation14 + $0x30] sm:$0xff]
        %v497 = vld [vmem:[#allocation14 + $0x38] sm:$0xff]
        %v498 = vld [vmem:[#allocation14 + $0x40] sm:$0xff]
        %v499 = vld [vmem:[#allocation14 + $0x48] sm:$0xff]
        %v500 = vld [vmem:[#allocation14 + $0x50] sm:$0xff]
        %v501 = vld [vmem:[#allocation14 + $0x58] sm:$0xff]
        %v502 = vld [vmem:[#allocation14 + $0x60] sm:$0xff]
        %v503 = vld [vmem:[#allocation14 + $0x68] sm:$0xff]
        %v504 = vld [vmem:[#allocation14 + $0x70] sm:$0xff]
        %v505 = vld [vmem:[#allocation14 + $0x78] sm:$0xff]
        %v506 = vld [vmem:[#allocation15] sm:$0xff]
        %v507 = vld [vmem:[#allocation15 + $0x8] sm:$0xff]
        %v508 = vld [vmem:[#allocation15 + $0x10] sm:$0xff]
        %v509 = vld [vmem:[#allocation15 + $0x18] sm:$0xff]
        %v510 = vld [vmem:[#allocation15 + $0x20] sm:$0xff]
        %v511 = vld [vmem:[#allocation15 + $0x28] sm:$0xff]
        %v512 = vld [vmem:[#allocation15 + $0x30] sm:$0xff]
        %v513 = vld [vmem:[#allocation15 + $0x38] sm:$0xff]
        %v514 = vld [vmem:[#allocation15 + $0x40] sm:$0xff]
        %v515 = vld [vmem:[#allocation15 + $0x48] sm:$0xff]
        %v516 = vld [vmem:[#allocation15 + $0x50] sm:$0xff]
        %v517 = vld [vmem:[#allocation15 + $0x58] sm:$0xff]
        %v518 = vld [vmem:[#allocation15 + $0x60] sm:$0xff]
        %v519 = vld [vmem:[#allocation15 + $0x68] sm:$0xff]
        %v520 = vld [vmem:[#allocation15 + $0x70] sm:$0xff]
        %v521 = vld [vmem:[#allocation15 + $0x78] sm:$0xff]
        %v522 = vpack.c.bf16 %v491, %v490
        %v523 = vpack.c.bf16 %v493, %v492
        %v524 = vpack.c.bf16 %v495, %v494
        %v525 = vpack.c.bf16 %v497, %v496
        %v526 = vpack.c.bf16 %v499, %v498
        %v527 = vpack.c.bf16 %v501, %v500
        %v528 = vpack.c.bf16 %v503, %v502
        %v529 = vpack.c.bf16 %v505, %v504
        %v530 = vpack.c.bf16 %v507, %v506
        %v531 = vpack.c.bf16 %v509, %v508
        %v532 = vpack.c.bf16 %v511, %v510
        %v533 = vpack.c.bf16 %v513, %v512
        %v534 = vpack.c.bf16 %v515, %v514
        %v535 = vpack.c.bf16 %v517, %v516
        %v536 = vpack.c.bf16 %v519, %v518
        %v537 = vpack.c.bf16 %v521, %v520
        %v538 = vld [vmem:[#allocation7] sm:$0xf]
        %v539 = vld [vmem:[#allocation7 + $0x4] sm:$0xf]
        %v540 = vld [vmem:[#allocation7 + $0x8] sm:$0xf]
        %v541 = vld [vmem:[#allocation7 + $0xc] sm:$0xf]
        %v542 = vld [vmem:[#allocation7 + $0x10] sm:$0xf]
        %v543 = vld [vmem:[#allocation7 + $0x14] sm:$0xf]
        %v544 = vld [vmem:[#allocation7 + $0x18] sm:$0xf]
        %v545 = vld [vmem:[#allocation7 + $0x1c] sm:$0xf]
        %v546 = vld [vmem:[#allocation7 + $0x20] sm:$0xf]
        %v547 = vld [vmem:[#allocation7 + $0x24] sm:$0xf]
        %v548 = vld [vmem:[#allocation7 + $0x28] sm:$0xf]
        %v549 = vld [vmem:[#allocation7 + $0x2c] sm:$0xf]
        %v550 = vld [vmem:[#allocation7 + $0x30] sm:$0xf]
        %v551 = vld [vmem:[#allocation7 + $0x34] sm:$0xf]
        %v552 = vld [vmem:[#allocation7 + $0x38] sm:$0xf]
        %v553 = vld [vmem:[#allocation7 + $0x3c] sm:$0xf]
        %v554 = vld [vmem:[#allocation8] sm:$0xf]
        %v555 = vld [vmem:[#allocation8 + $0x4] sm:$0xf]
        %v556 = vld [vmem:[#allocation8 + $0x8] sm:$0xf]
        %v557 = vld [vmem:[#allocation8 + $0xc] sm:$0xf]
        %v558 = vld [vmem:[#allocation8 + $0x10] sm:$0xf]
        %v559 = vld [vmem:[#allocation8 + $0x14] sm:$0xf]
        %v560 = vld [vmem:[#allocation8 + $0x18] sm:$0xf]
        %v561 = vld [vmem:[#allocation8 + $0x1c] sm:$0xf]
        %v562 = vld [vmem:[#allocation8 + $0x20] sm:$0xf]
        %v563 = vld [vmem:[#allocation8 + $0x24] sm:$0xf]
        %v564 = vld [vmem:[#allocation8 + $0x28] sm:$0xf]
        %v565 = vld [vmem:[#allocation8 + $0x2c] sm:$0xf]
        %v566 = vld [vmem:[#allocation8 + $0x30] sm:$0xf]
        %v567 = vld [vmem:[#allocation8 + $0x34] sm:$0xf]
        %v568 = vld [vmem:[#allocation8 + $0x38] sm:$0xf]
        %v569 = vld [vmem:[#allocation8 + $0x3c] sm:$0xf]
        %v570 = vld [vmem:[#allocation10] sm:$0xf]
        %v571 = vld [vmem:[#allocation10 + $0x4] sm:$0xf]
        %v572 = vld [vmem:[#allocation10 + $0x8] sm:$0xf]
        %v573 = vld [vmem:[#allocation10 + $0xc] sm:$0xf]
        %v574 = vld [vmem:[#allocation10 + $0x10] sm:$0xf]
        %v575 = vld [vmem:[#allocation10 + $0x14] sm:$0xf]
        %v576 = vld [vmem:[#allocation10 + $0x18] sm:$0xf]
        %v577 = vld [vmem:[#allocation10 + $0x1c] sm:$0xf]
        %v578 = vld [vmem:[#allocation10 + $0x20] sm:$0xf]
        %v579 = vld [vmem:[#allocation10 + $0x24] sm:$0xf]
        %v580 = vld [vmem:[#allocation10 + $0x28] sm:$0xf]
        %v581 = vld [vmem:[#allocation10 + $0x2c] sm:$0xf]
        %v582 = vld [vmem:[#allocation10 + $0x30] sm:$0xf]
        %v583 = vld [vmem:[#allocation10 + $0x34] sm:$0xf]
        %v584 = vld [vmem:[#allocation10 + $0x38] sm:$0xf]
        %v585 = vld [vmem:[#allocation10 + $0x3c] sm:$0xf]
        %v586 = vld [vmem:[%s379] sm:$0xff]
        %v587 = vld [vmem:[%s379 + $0x8] sm:$0xff]
        %v588 = vld [vmem:[%s379 + $0x10] sm:$0xff]
        %v589 = vld [vmem:[%s379 + $0x18] sm:$0xff]
        %v590 = vld [vmem:[%s379 + $0x20] sm:$0xff]
        %v591 = vld [vmem:[%s379 + $0x28] sm:$0xff]
        %v592 = vld [vmem:[%s379 + $0x30] sm:$0xff]
        %v593 = vld [vmem:[%s379 + $0x38] sm:$0xff]
        %v594 = vld [vmem:[%s379 + $0x40] sm:$0xff]
        %v595 = vld [vmem:[%s379 + $0x48] sm:$0xff]
        %v596 = vld [vmem:[%s379 + $0x50] sm:$0xff]
        %v597 = vld [vmem:[%s379 + $0x58] sm:$0xff]
        %v598 = vld [vmem:[%s379 + $0x60] sm:$0xff]
        %v599 = vld [vmem:[%s379 + $0x68] sm:$0xff]
        %v600 = vld [vmem:[%s379 + $0x70] sm:$0xff]
        %v601 = vld [vmem:[%s379 + $0x78] sm:$0xff]
        %v618 = vunpack.c.l.b16 %v586
        %v619 = vunpack.c.h.b16 %v586
        %v620 = vunpack.c.l.b16 %v587
        %v621 = vunpack.c.h.b16 %v587
        %v622 = vunpack.c.l.b16 %v588
        %v623 = vunpack.c.h.b16 %v588
        %v624 = vunpack.c.l.b16 %v589
        %v625 = vunpack.c.h.b16 %v589
        %v626 = vunpack.c.l.b16 %v590
        %v627 = vunpack.c.h.b16 %v590
        %v628 = vunpack.c.l.b16 %v591
        %v629 = vunpack.c.h.b16 %v591
        %v630 = vunpack.c.l.b16 %v592
        %v631 = vunpack.c.h.b16 %v592
        %v632 = vunpack.c.l.b16 %v593
        %v633 = vunpack.c.h.b16 %v593
        %v634 = vunpack.c.l.b16 %v594
        %v635 = vunpack.c.h.b16 %v594
        %v636 = vunpack.c.l.b16 %v595
        %v637 = vunpack.c.h.b16 %v595
        %v638 = vunpack.c.l.b16 %v596
        %v639 = vunpack.c.h.b16 %v596
        %v640 = vunpack.c.l.b16 %v597
        %v641 = vunpack.c.h.b16 %v597
        %v642 = vunpack.c.l.b16 %v598
        %v643 = vunpack.c.h.b16 %v598
        %v644 = vunpack.c.l.b16 %v599
        %v645 = vunpack.c.h.b16 %v599
        %v646 = vunpack.c.l.b16 %v600
        %v647 = vunpack.c.h.b16 %v600
        %v648 = vunpack.c.l.b16 %v601
        %v649 = vunpack.c.h.b16 %v601
        %v650 = vpack.c.b16 %v620, %v618
        %v651 = vpack.c.b16 %v621, %v619
        %v652 = vpack.c.b16 %v624, %v622
        %v653 = vpack.c.b16 %v625, %v623
        %v654 = vpack.c.b16 %v628, %v626
        %v655 = vpack.c.b16 %v629, %v627
        %v656 = vpack.c.b16 %v632, %v630
        %v657 = vpack.c.b16 %v633, %v631
        %v658 = vpack.c.b16 %v636, %v634
        %v659 = vpack.c.b16 %v637, %v635
        %v660 = vpack.c.b16 %v640, %v638
        %v661 = vpack.c.b16 %v641, %v639
        %v662 = vpack.c.b16 %v644, %v642
        %v663 = vpack.c.b16 %v645, %v643
        %v664 = vpack.c.b16 %v648, %v646
        %v665 = vpack.c.b16 %v649, %v647
        %682 = vmatprep.subr.bf16.mxu0 %v651
        %683 = vmatpush1.bf16.msra.mxu0 %v650
        %684 = vmatprep.subr.bf16.mxu0 %v653
        %685 = vmatpush1.bf16.msra.mxu0 %v652
        %686 = vmatprep.subr.bf16.mxu0 %v655
        %687 = vmatpush1.bf16.msra.mxu0 %v654
        %688 = vmatprep.subr.bf16.mxu0 %v657
        %689 = vmatpush1.bf16.msra.mxu0 %v656
        %690 = vmatprep.subr.bf16.mxu0 %v659
        %691 = vmatpush1.bf16.msra.mxu0 %v658
        %692 = vmatprep.subr.bf16.mxu0 %v661
        %693 = vmatpush1.bf16.msra.mxu0 %v660
        %694 = vmatprep.subr.bf16.mxu0 %v663
        %695 = vmatpush1.bf16.msra.mxu0 %v662
        %696 = vmatprep.subr.bf16.mxu0 %v665
        %697 = vmatpush1.bf16.msra.mxu0 %v664
        %698 = vmatprep.subr.bf16.mxu0 0
        %699 = vmatpush1.bf16.msra.mxu0 0
        %700 = vmatprep.subr.bf16.mxu0 0
        %701 = vmatpush1.bf16.msra.mxu0 0
        %702 = vmatprep.subr.bf16.mxu0 0
        %703 = vmatpush1.bf16.msra.mxu0 0
        %704 = vmatprep.subr.bf16.mxu0 0
        %705 = vmatpush1.bf16.msra.mxu0 0
        %706 = vmatprep.subr.bf16.mxu0 0
        %707 = vmatpush1.bf16.msra.mxu0 0
        %708 = vmatprep.subr.bf16.mxu0 0
        %709 = vmatpush1.bf16.msra.mxu0 0
        %710 = vmatprep.subr.bf16.mxu0 0
        %711 = vmatpush1.bf16.msra.mxu0 0
        %712 = vmatprep.subr.bf16.mxu0 0
        %713 = vmatpush1.bf16.msra.mxu0 0
        %714 = vmatprep.mubr.bf16.mxu0 0
        %715 = vmatmul.mubr.bf16.gmra.mrb[0].mxu0 %v522
        %v716 = vpop.f32.mrb[0].mxu0
        %v717 = vadd.f32 0.0, %v716
        %v718 = vpop.f32.mrb[0].mxu0
        %v719 = vadd.f32 0.0, %v718
        %v720 = vpop.f32.mrb[0].mxu0
        %v721 = vadd.f32 0.0, %v720
        %v722 = vpop.f32.mrb[0].mxu0
        %v723 = vadd.f32 0.0, %v722
        %724 = vmatprep.mubr.bf16.mxu0 0
        %725 = vmatmul.mubr.bf16.gmra.mrb[0].mxu0 %v523
        %v726 = vpop.f32.mrb[0].mxu0
        %v727 = vadd.f32 0.0, %v726
        %v728 = vpop.f32.mrb[0].mxu0
        %v729 = vadd.f32 0.0, %v728
        %v730 = vpop.f32.mrb[0].mxu0
        %v731 = vadd.f32 0.0, %v730
        %v732 = vpop.f32.mrb[0].mxu0
        %v733 = vadd.f32 0.0, %v732
        %734 = vmatprep.mubr.bf16.mxu0 0
        %735 = vmatmul.mubr.bf16.gmra.mrb[0].mxu0 %v524
        %v736 = vpop.f32.mrb[0].mxu0
        %v737 = vadd.f32 0.0, %v736
        %v738 = vpop.f32.mrb[0].mxu0
        %v739 = vadd.f32 0.0, %v738
        %v740 = vpop.f32.mrb[0].mxu0
        %v741 = vadd.f32 0.0, %v740
        %v742 = vpop.f32.mrb[0].mxu0
        %v743 = vadd.f32 0.0, %v742
        %744 = vmatprep.mubr.bf16.mxu0 0
        %745 = vmatmul.mubr.bf16.gmra.mrb[0].mxu0 %v525
        %v746 = vpop.f32.mrb[0].mxu0
        %v747 = vadd.f32 0.0, %v746
        %v748 = vpop.f32.mrb[0].mxu0
        %v749 = vadd.f32 0.0, %v748
        %v750 = vpop.f32.mrb[0].mxu0
        %v751 = vadd.f32 0.0, %v750
        %v752 = vpop.f32.mrb[0].mxu0
        %v753 = vadd.f32 0.0, %v752
        %754 = vmatprep.mubr.bf16.mxu0 0
        %755 = vmatmul.mubr.bf16.gmra.mrb[0].mxu0 %v526
        %v756 = vpop.f32.mrb[0].mxu0
        %v757 = vadd.f32 0.0, %v756
        %v758 = vpop.f32.mrb[0].mxu0
        %v759 = vadd.f32 0.0, %v758
        %v760 = vpop.f32.mrb[0].mxu0
        %v761 = vadd.f32 0.0, %v760
        %v762 = vpop.f32.mrb[0].mxu0
        %v763 = vadd.f32 0.0, %v762
        %764 = vmatprep.mubr.bf16.mxu0 0
        %765 = vmatmul.mubr.bf16.gmra.mrb[0].mxu0 %v527
        %v766 = vpop.f32.mrb[0].mxu0
        %v767 = vadd.f32 0.0, %v766
        %v768 = vpop.f32.mrb[0].mxu0
        %v769 = vadd.f32 0.0, %v768
        %v770 = vpop.f32.mrb[0].mxu0
        %v771 = vadd.f32 0.0, %v770
        %v772 = vpop.f32.mrb[0].mxu0
        %v773 = vadd.f32 0.0, %v772
        %774 = vmatprep.mubr.bf16.mxu0 0
        %775 = vmatmul.mubr.bf16.gmra.mrb[0].mxu0 %v528
        %v776 = vpop.f32.mrb[0].mxu0
        %v777 = vadd.f32 0.0, %v776
        %v778 = vpop.f32.mrb[0].mxu0
        %v779 = vadd.f32 0.0, %v778
        %v780 = vpop.f32.mrb[0].mxu0
        %v781 = vadd.f32 0.0, %v780
        %v782 = vpop.f32.mrb[0].mxu0
        %v783 = vadd.f32 0.0, %v782
        %784 = vmatprep.mubr.bf16.mxu0 0
        %785 = vmatmul.mubr.bf16.gmra.mrb[0].mxu0 %v529
        %v786 = vpop.f32.mrb[0].mxu0
        %v787 = vadd.f32 0.0, %v786
        %v788 = vpop.f32.mrb[0].mxu0
        %v789 = vadd.f32 0.0, %v788
        %v790 = vpop.f32.mrb[0].mxu0
        %v791 = vadd.f32 0.0, %v790
        %v792 = vpop.f32.mrb[0].mxu0
        %v793 = vadd.f32 0.0, %v792
        %794 = vdwg.mxu0
        %v795 = vpack.c.bf16 %v721, %v717
        %v796 = vpack.c.bf16 %v731, %v727
        %v797 = vpack.c.bf16 %v741, %v737
        %v798 = vpack.c.bf16 %v751, %v747
        %v799 = vpack.c.bf16 %v761, %v757
        %v800 = vpack.c.bf16 %v771, %v767
        %v801 = vpack.c.bf16 %v781, %v777
        %v802 = vpack.c.bf16 %v791, %v787
        %v803 = vpack.c.bf16 %v723, %v719
        %v804 = vpack.c.bf16 %v733, %v729
        %v805 = vpack.c.bf16 %v743, %v739
        %v806 = vpack.c.bf16 %v753, %v749
        %v807 = vpack.c.bf16 %v763, %v759
        %v808 = vpack.c.bf16 %v773, %v769
        %v809 = vpack.c.bf16 %v783, %v779
        %v810 = vpack.c.bf16 %v793, %v789
        %v827 = vunpack.c.l.b16 %v538
        %v828 = vunpack.c.l.b16 %v539
        %v829 = vunpack.c.l.b16 %v540
        %v830 = vunpack.c.l.b16 %v541
        %v831 = vunpack.c.l.b16 %v542
        %v832 = vunpack.c.l.b16 %v543
        %v833 = vunpack.c.l.b16 %v544
        %v834 = vunpack.c.l.b16 %v545
        %v835 = vunpack.c.l.b16 %v546
        %v836 = vunpack.c.l.b16 %v547
        %v837 = vunpack.c.l.b16 %v548
        %v838 = vunpack.c.l.b16 %v549
        %v839 = vunpack.c.l.b16 %v550
        %v840 = vunpack.c.l.b16 %v551
        %v841 = vunpack.c.l.b16 %v552
        %v842 = vunpack.c.l.b16 %v553
        %v843 = vpack.c.b16 %v828, %v827
        %v844 = vpack.c.b16 %v830, %v829
        %v845 = vpack.c.b16 %v832, %v831
        %v846 = vpack.c.b16 %v834, %v833
        %v847 = vpack.c.b16 %v836, %v835
        %v848 = vpack.c.b16 %v838, %v837
        %v849 = vpack.c.b16 %v840, %v839
        %v850 = vpack.c.b16 %v842, %v841
        %859 = vmatprep.subr.bf16.mxu0 0
        %860 = vmatpush1.bf16.msra.mxu0 %v803
        %861 = vmatprep.subr.bf16.mxu0 0
        %862 = vmatpush1.bf16.msra.mxu0 %v804
        %863 = vmatprep.subr.bf16.mxu0 0
        %864 = vmatpush1.bf16.msra.mxu0 %v805
        %865 = vmatprep.subr.bf16.mxu0 0
        %866 = vmatpush1.bf16.msra.mxu0 %v806
        %867 = vmatprep.subr.bf16.mxu0 0
        %868 = vmatpush1.bf16.msra.mxu0 %v807
        %869 = vmatprep.subr.bf16.mxu0 0
        %870 = vmatpush1.bf16.msra.mxu0 %v808
        %871 = vmatprep.subr.bf16.mxu0 0
        %872 = vmatpush1.bf16.msra.mxu0 %v809
        %873 = vmatprep.subr.bf16.mxu0 0
        %874 = vmatpush1.bf16.msra.mxu0 %v810
        %875 = vmatprep.subr.bf16.mxu0 0
        %876 = vmatpush1.bf16.msra.mxu0 0
        %877 = vmatprep.subr.bf16.mxu0 0
        %878 = vmatpush1.bf16.msra.mxu0 0
        %879 = vmatprep.subr.bf16.mxu0 0
        %880 = vmatpush1.bf16.msra.mxu0 0
        %881 = vmatprep.subr.bf16.mxu0 0
        %882 = vmatpush1.bf16.msra.mxu0 0
        %883 = vmatprep.subr.bf16.mxu0 0
        %884 = vmatpush1.bf16.msra.mxu0 0
        %885 = vmatprep.subr.bf16.mxu0 0
        %886 = vmatpush1.bf16.msra.mxu0 0
        %887 = vmatprep.subr.bf16.mxu0 0
        %888 = vmatpush1.bf16.msra.mxu0 0
        %889 = vmatprep.subr.bf16.mxu0 0
        %890 = vmatpush1.bf16.msra.mxu0 0
        %891 = vmatprep.mubr.bf16.mxu0 0
        %892 = vmatmul.mubr.bf16.gmra.mrb[0].mxu0 %v843
        %v893 = vpop.f32.mrb[0].mxu0
        %v894 = vadd.f32 0.0, %v893
        %v895 = vpop.f32.mrb[0].mxu0
        %v896 = vpop.f32.mrb[0].mxu0
        %v897 = vadd.f32 0.0, %v896
        %v898 = vpop.f32.mrb[0].mxu0
        %899 = vmatprep.mubr.bf16.mxu0 0
        %900 = vmatmul.mubr.bf16.gmra.mrb[0].mxu0 %v844
        %v901 = vpop.f32.mrb[0].mxu0
        %v902 = vadd.f32 0.0, %v901
        %v903 = vpop.f32.mrb[0].mxu0
        %v904 = vpop.f32.mrb[0].mxu0
        %v905 = vadd.f32 0.0, %v904
        %v906 = vpop.f32.mrb[0].mxu0
        %907 = vmatprep.mubr.bf16.mxu0 0
        %908 = vmatmul.mubr.bf16.gmra.mrb[0].mxu0 %v845
        %v909 = vpop.f32.mrb[0].mxu0
        %v910 = vadd.f32 0.0, %v909
        %v911 = vpop.f32.mrb[0].mxu0
        %v912 = vpop.f32.mrb[0].mxu0
        %v913 = vadd.f32 0.0, %v912
        %v914 = vpop.f32.mrb[0].mxu0
        %915 = vmatprep.mubr.bf16.mxu0 0
        %916 = vmatmul.mubr.bf16.gmra.mrb[0].mxu0 %v846
        %v917 = vpop.f32.mrb[0].mxu0
        %v918 = vadd.f32 0.0, %v917
        %v919 = vpop.f32.mrb[0].mxu0
        %v920 = vpop.f32.mrb[0].mxu0
        %v921 = vadd.f32 0.0, %v920
        %v922 = vpop.f32.mrb[0].mxu0
        %923 = vmatprep.mubr.bf16.mxu0 0
        %924 = vmatmul.mubr.bf16.gmra.mrb[0].mxu0 %v847
        %v925 = vpop.f32.mrb[0].mxu0
        %v926 = vadd.f32 0.0, %v925
        %v927 = vpop.f32.mrb[0].mxu0
        %v928 = vpop.f32.mrb[0].mxu0
        %v929 = vadd.f32 0.0, %v928
        %v930 = vpop.f32.mrb[0].mxu0
        %931 = vmatprep.mubr.bf16.mxu0 0
        %932 = vmatmul.mubr.bf16.gmra.mrb[0].mxu0 %v848
        %v933 = vpop.f32.mrb[0].mxu0
        %v934 = vadd.f32 0.0, %v933
        %v935 = vpop.f32.mrb[0].mxu0
        %v936 = vpop.f32.mrb[0].mxu0
        %v937 = vadd.f32 0.0, %v936
        %v938 = vpop.f32.mrb[0].mxu0
        %939 = vmatprep.mubr.bf16.mxu0 0
        %940 = vmatmul.mubr.bf16.gmra.mrb[0].mxu0 %v849
        %v941 = vpop.f32.mrb[0].mxu0
        %v942 = vadd.f32 0.0, %v941
        %v943 = vpop.f32.mrb[0].mxu0
        %v944 = vpop.f32.mrb[0].mxu0
        %v945 = vadd.f32 0.0, %v944
        %v946 = vpop.f32.mrb[0].mxu0
        %947 = vmatprep.mubr.bf16.mxu0 0
        %948 = vmatmul.mubr.bf16.gmra.mrb[0].mxu0 %v850
        %v949 = vpop.f32.mrb[0].mxu0
        %v950 = vadd.f32 0.0, %v949
        %v951 = vpop.f32.mrb[0].mxu0
        %v952 = vpop.f32.mrb[0].mxu0
        %v953 = vadd.f32 0.0, %v952
        %v954 = vpop.f32.mrb[0].mxu0
        %955 = vdwg.mxu0
        %v972 = vunpack.c.l.b16 %v554
        %v973 = vunpack.c.l.b16 %v555
        %v974 = vunpack.c.l.b16 %v556
        %v975 = vunpack.c.l.b16 %v557
        %v976 = vunpack.c.l.b16 %v558
        %v977 = vunpack.c.l.b16 %v559
        %v978 = vunpack.c.l.b16 %v560
        %v979 = vunpack.c.l.b16 %v561
        %v980 = vunpack.c.l.b16 %v562
        %v981 = vunpack.c.l.b16 %v563
        %v982 = vunpack.c.l.b16 %v564
        %v983 = vunpack.c.l.b16 %v565
        %v984 = vunpack.c.l.b16 %v566
        %v985 = vunpack.c.l.b16 %v567
        %v986 = vunpack.c.l.b16 %v568
        %v987 = vunpack.c.l.b16 %v569
        %v988 = vpack.c.b16 %v973, %v972
        %v989 = vpack.c.b16 %v975, %v974
        %v990 = vpack.c.b16 %v977, %v976
        %v991 = vpack.c.b16 %v979, %v978
        %v992 = vpack.c.b16 %v981, %v980
        %v993 = vpack.c.b16 %v983, %v982
        %v994 = vpack.c.b16 %v985, %v984
        %v995 = vpack.c.b16 %v987, %v986
        %1004 = vmatprep.subr.bf16.mxu0 0
        %1005 = vmatpush1.bf16.msra.mxu0 %v795
        %1006 = vmatprep.subr.bf16.mxu0 0
        %1007 = vmatpush1.bf16.msra.mxu0 %v796
        %1008 = vmatprep.subr.bf16.mxu0 0
        %1009 = vmatpush1.bf16.msra.mxu0 %v797
        %1010 = vmatprep.subr.bf16.mxu0 0
        %1011 = vmatpush1.bf16.msra.mxu0 %v798
        %1012 = vmatprep.subr.bf16.mxu0 0
        %1013 = vmatpush1.bf16.msra.mxu0 %v799
        %1014 = vmatprep.subr.bf16.mxu0 0
        %1015 = vmatpush1.bf16.msra.mxu0 %v800
        %1016 = vmatprep.subr.bf16.mxu0 0
        %1017 = vmatpush1.bf16.msra.mxu0 %v801
        %1018 = vmatprep.subr.bf16.mxu0 0
        %1019 = vmatpush1.bf16.msra.mxu0 %v802
        %1020 = vmatprep.subr.bf16.mxu0 0
        %1021 = vmatpush1.bf16.msra.mxu0 0
        %1022 = vmatprep.subr.bf16.mxu0 0
        %1023 = vmatpush1.bf16.msra.mxu0 0
        %1024 = vmatprep.subr.bf16.mxu0 0
        %1025 = vmatpush1.bf16.msra.mxu0 0
        %1026 = vmatprep.subr.bf16.mxu0 0
        %1027 = vmatpush1.bf16.msra.mxu0 0
        %1028 = vmatprep.subr.bf16.mxu0 0
        %1029 = vmatpush1.bf16.msra.mxu0 0
        %1030 = vmatprep.subr.bf16.mxu0 0
        %1031 = vmatpush1.bf16.msra.mxu0 0
        %1032 = vmatprep.subr.bf16.mxu0 0
        %1033 = vmatpush1.bf16.msra.mxu0 0
        %1034 = vmatprep.subr.bf16.mxu0 0
        %1035 = vmatpush1.bf16.msra.mxu0 0
        %1036 = vmatprep.mubr.bf16.mxu0 0
        %1037 = vmatmul.mubr.bf16.gmra.mrb[0].mxu0 %v988
        %v1038 = vpop.f32.mrb[0].mxu0
        %v1039 = vadd.f32 %v894, %v1038
        %v1040 = vpop.f32.mrb[0].mxu0
        %v1041 = vpop.f32.mrb[0].mxu0
        %v1042 = vadd.f32 %v897, %v1041
        %v1043 = vpop.f32.mrb[0].mxu0
        %1044 = vmatprep.mubr.bf16.mxu0 0
        %1045 = vmatmul.mubr.bf16.gmra.mrb[0].mxu0 %v989
        %v1046 = vpop.f32.mrb[0].mxu0
        %v1047 = vadd.f32 %v902, %v1046
        %v1048 = vpop.f32.mrb[0].mxu0
        %v1049 = vpop.f32.mrb[0].mxu0
        %v1050 = vadd.f32 %v905, %v1049
        %v1051 = vpop.f32.mrb[0].mxu0
        %1052 = vmatprep.mubr.bf16.mxu0 0
        %1053 = vmatmul.mubr.bf16.gmra.mrb[0].mxu0 %v990
        %v1054 = vpop.f32.mrb[0].mxu0
        %v1055 = vadd.f32 %v910, %v1054
        %v1056 = vpop.f32.mrb[0].mxu0
        %v1057 = vpop.f32.mrb[0].mxu0
        %v1058 = vadd.f32 %v913, %v1057
        %v1059 = vpop.f32.mrb[0].mxu0
        %1060 = vmatprep.mubr.bf16.mxu0 0
        %1061 = vmatmul.mubr.bf16.gmra.mrb[0].mxu0 %v991
        %v1062 = vpop.f32.mrb[0].mxu0
        %v1063 = vadd.f32 %v918, %v1062
        %v1064 = vpop.f32.mrb[0].mxu0
        %v1065 = vpop.f32.mrb[0].mxu0
        %v1066 = vadd.f32 %v921, %v1065
        %v1067 = vpop.f32.mrb[0].mxu0
        %1068 = vmatprep.mubr.bf16.mxu0 0
        %1069 = vmatmul.mubr.bf16.gmra.mrb[0].mxu0 %v992
        %v1070 = vpop.f32.mrb[0].mxu0
        %v1071 = vadd.f32 %v926, %v1070
        %v1072 = vpop.f32.mrb[0].mxu0
        %v1073 = vpop.f32.mrb[0].mxu0
        %v1074 = vadd.f32 %v929, %v1073
        %v1075 = vpop.f32.mrb[0].mxu0
        %1076 = vmatprep.mubr.bf16.mxu0 0
        %1077 = vmatmul.mubr.bf16.gmra.mrb[0].mxu0 %v993
        %v1078 = vpop.f32.mrb[0].mxu0
        %v1079 = vadd.f32 %v934, %v1078
        %v1080 = vpop.f32.mrb[0].mxu0
        %v1081 = vpop.f32.mrb[0].mxu0
        %v1082 = vadd.f32 %v937, %v1081
        %v1083 = vpop.f32.mrb[0].mxu0
        %1084 = vmatprep.mubr.bf16.mxu0 0
        %1085 = vmatmul.mubr.bf16.gmra.mrb[0].mxu0 %v994
        %v1086 = vpop.f32.mrb[0].mxu0
        %v1087 = vadd.f32 %v942, %v1086
        %v1088 = vpop.f32.mrb[0].mxu0
        %v1089 = vpop.f32.mrb[0].mxu0
        %v1090 = vadd.f32 %v945, %v1089
        %v1091 = vpop.f32.mrb[0].mxu0
        %1092 = vmatprep.mubr.bf16.mxu0 0
        %1093 = vmatmul.mubr.bf16.gmra.mrb[0].mxu0 %v995
        %v1094 = vpop.f32.mrb[0].mxu0
        %v1095 = vadd.f32 %v950, %v1094
        %v1096 = vpop.f32.mrb[0].mxu0
        %v1097 = vpop.f32.mrb[0].mxu0
        %v1098 = vadd.f32 %v953, %v1097
        %v1099 = vpop.f32.mrb[0].mxu0
        %1100 = vdwg.mxu0
        %v1101 = vld [vmem:[%s388] sm:$0xf]
        %v1102 = vld [vmem:[%s388 + $0x4] sm:$0xf]
        %v1103 = vld [vmem:[%s388 + $0x8] sm:$0xf]
        %v1104 = vld [vmem:[%s388 + $0xc] sm:$0xf]
        %v1105 = vld [vmem:[%s388 + $0x10] sm:$0xf]
        %v1106 = vld [vmem:[%s388 + $0x14] sm:$0xf]
        %v1107 = vld [vmem:[%s388 + $0x18] sm:$0xf]
        %v1108 = vld [vmem:[%s388 + $0x1c] sm:$0xf]
        %v1109 = vld [vmem:[%s388 + $0x20] sm:$0xf]
        %v1110 = vld [vmem:[%s388 + $0x24] sm:$0xf]
        %v1111 = vld [vmem:[%s388 + $0x28] sm:$0xf]
        %v1112 = vld [vmem:[%s388 + $0x2c] sm:$0xf]
        %v1113 = vld [vmem:[%s388 + $0x30] sm:$0xf]
        %v1114 = vld [vmem:[%s388 + $0x34] sm:$0xf]
        %v1115 = vld [vmem:[%s388 + $0x38] sm:$0xf]
        %v1116 = vld [vmem:[%s388 + $0x3c] sm:$0xf]
        %v1133 = vunpack.c.l.b16 %v1101
        %v1134 = vunpack.c.l.b16 %v1102
        %v1135 = vunpack.c.l.b16 %v1103
        %v1136 = vunpack.c.l.b16 %v1104
        %v1137 = vunpack.c.l.b16 %v1105
        %v1138 = vunpack.c.l.b16 %v1106
        %v1139 = vunpack.c.l.b16 %v1107
        %v1140 = vunpack.c.l.b16 %v1108
        %v1141 = vunpack.c.l.b16 %v1109
        %v1142 = vunpack.c.l.b16 %v1110
        %v1143 = vunpack.c.l.b16 %v1111
        %v1144 = vunpack.c.l.b16 %v1112
        %v1145 = vunpack.c.l.b16 %v1113
        %v1146 = vunpack.c.l.b16 %v1114
        %v1147 = vunpack.c.l.b16 %v1115
        %v1148 = vunpack.c.l.b16 %v1116
        %v1149 = vpack.c.b16 %v1134, %v1133
        %v1150 = vpack.c.b16 %v1136, %v1135
        %v1151 = vpack.c.b16 %v1138, %v1137
        %v1152 = vpack.c.b16 %v1140, %v1139
        %v1153 = vpack.c.b16 %v1142, %v1141
        %v1154 = vpack.c.b16 %v1144, %v1143
        %v1155 = vpack.c.b16 %v1146, %v1145
        %v1156 = vpack.c.b16 %v1148, %v1147
        %1165 = vmatprep.subr.bf16.mxu0 0
        %1166 = vmatpush1.bf16.msra.mxu0 %v1149
        %1167 = vmatprep.subr.bf16.mxu0 0
        %1168 = vmatpush1.bf16.msra.mxu0 %v1150
        %1169 = vmatprep.subr.bf16.mxu0 0
        %1170 = vmatpush1.bf16.msra.mxu0 %v1151
        %1171 = vmatprep.subr.bf16.mxu0 0
        %1172 = vmatpush1.bf16.msra.mxu0 %v1152
        %1173 = vmatprep.subr.bf16.mxu0 0
        %1174 = vmatpush1.bf16.msra.mxu0 %v1153
        %1175 = vmatprep.subr.bf16.mxu0 0
        %1176 = vmatpush1.bf16.msra.mxu0 %v1154
        %1177 = vmatprep.subr.bf16.mxu0 0
        %1178 = vmatpush1.bf16.msra.mxu0 %v1155
        %1179 = vmatprep.subr.bf16.mxu0 0
        %1180 = vmatpush1.bf16.msra.mxu0 %v1156
        %1181 = vmatprep.subr.bf16.mxu0 0
        %1182 = vmatpush1.bf16.msra.mxu0 0
        %1183 = vmatprep.subr.bf16.mxu0 0
        %1184 = vmatpush1.bf16.msra.mxu0 0
        %1185 = vmatprep.subr.bf16.mxu0 0
        %1186 = vmatpush1.bf16.msra.mxu0 0
        %1187 = vmatprep.subr.bf16.mxu0 0
        %1188 = vmatpush1.bf16.msra.mxu0 0
        %1189 = vmatprep.subr.bf16.mxu0 0
        %1190 = vmatpush1.bf16.msra.mxu0 0
        %1191 = vmatprep.subr.bf16.mxu0 0
        %1192 = vmatpush1.bf16.msra.mxu0 0
        %1193 = vmatprep.subr.bf16.mxu0 0
        %1194 = vmatpush1.bf16.msra.mxu0 0
        %1195 = vmatprep.subr.bf16.mxu0 0
        %1196 = vmatpush1.bf16.msra.mxu0 0
        %1197 = vmatprep.mubr.bf16.mxu0 0
        %1198 = vmatmul.mubr.bf16.gmra.mrb[0].mxu0 %v530
        %v1199 = vpop.f32.mrb[0].mxu0
        %v1200 = vadd.f32 0.0, %v1199
        %v1201 = vpop.f32.mrb[0].mxu0
        %v1202 = vpop.f32.mrb[0].mxu0
        %v1203 = vadd.f32 0.0, %v1202
        %v1204 = vpop.f32.mrb[0].mxu0
        %1205 = vmatprep.mubr.bf16.mxu0 0
        %1206 = vmatmul.mubr.bf16.gmra.mrb[0].mxu0 %v531
        %v1207 = vpop.f32.mrb[0].mxu0
        %v1208 = vadd.f32 0.0, %v1207
        %v1209 = vpop.f32.mrb[0].mxu0
        %v1210 = vpop.f32.mrb[0].mxu0
        %v1211 = vadd.f32 0.0, %v1210
        %v1212 = vpop.f32.mrb[0].mxu0
        %1213 = vmatprep.mubr.bf16.mxu0 0
        %1214 = vmatmul.mubr.bf16.gmra.mrb[0].mxu0 %v532
        %v1215 = vpop.f32.mrb[0].mxu0
        %v1216 = vadd.f32 0.0, %v1215
        %v1217 = vpop.f32.mrb[0].mxu0
        %v1218 = vpop.f32.mrb[0].mxu0
        %v1219 = vadd.f32 0.0, %v1218
        %v1220 = vpop.f32.mrb[0].mxu0
        %1221 = vmatprep.mubr.bf16.mxu0 0
        %1222 = vmatmul.mubr.bf16.gmra.mrb[0].mxu0 %v533
        %v1223 = vpop.f32.mrb[0].mxu0
        %v1224 = vadd.f32 0.0, %v1223
        %v1225 = vpop.f32.mrb[0].mxu0
        %v1226 = vpop.f32.mrb[0].mxu0
        %v1227 = vadd.f32 0.0, %v1226
        %v1228 = vpop.f32.mrb[0].mxu0
        %1229 = vmatprep.mubr.bf16.mxu0 0
        %1230 = vmatmul.mubr.bf16.gmra.mrb[0].mxu0 %v534
        %v1231 = vpop.f32.mrb[0].mxu0
        %v1232 = vadd.f32 0.0, %v1231
        %v1233 = vpop.f32.mrb[0].mxu0
        %v1234 = vpop.f32.mrb[0].mxu0
        %v1235 = vadd.f32 0.0, %v1234
        %v1236 = vpop.f32.mrb[0].mxu0
        %1237 = vmatprep.mubr.bf16.mxu0 0
        %1238 = vmatmul.mubr.bf16.gmra.mrb[0].mxu0 %v535
        %v1239 = vpop.f32.mrb[0].mxu0
        %v1240 = vadd.f32 0.0, %v1239
        %v1241 = vpop.f32.mrb[0].mxu0
        %v1242 = vpop.f32.mrb[0].mxu0
        %v1243 = vadd.f32 0.0, %v1242
        %v1244 = vpop.f32.mrb[0].mxu0
        %1245 = vmatprep.mubr.bf16.mxu0 0
        %1246 = vmatmul.mubr.bf16.gmra.mrb[0].mxu0 %v536
        %v1247 = vpop.f32.mrb[0].mxu0
        %v1248 = vadd.f32 0.0, %v1247
        %v1249 = vpop.f32.mrb[0].mxu0
        %v1250 = vpop.f32.mrb[0].mxu0
        %v1251 = vadd.f32 0.0, %v1250
        %v1252 = vpop.f32.mrb[0].mxu0
        %1253 = vmatprep.mubr.bf16.mxu0 0
        %1254 = vmatmul.mubr.bf16.gmra.mrb[0].mxu0 %v537
        %v1255 = vpop.f32.mrb[0].mxu0
        %v1256 = vadd.f32 0.0, %v1255
        %v1257 = vpop.f32.mrb[0].mxu0
        %v1258 = vpop.f32.mrb[0].mxu0
        %v1259 = vadd.f32 0.0, %v1258
        %v1260 = vpop.f32.mrb[0].mxu0
        %1261 = vdwg.mxu0
        %v1262 = vadd.f32 %v1039, %v1200
        %v1263 = vadd.f32 %v1042, %v1203
        %v1264 = vadd.f32 %v1047, %v1208
        %v1265 = vadd.f32 %v1050, %v1211
        %v1266 = vadd.f32 %v1055, %v1216
        %v1267 = vadd.f32 %v1058, %v1219
        %v1268 = vadd.f32 %v1063, %v1224
        %v1269 = vadd.f32 %v1066, %v1227
        %v1270 = vadd.f32 %v1071, %v1232
        %v1271 = vadd.f32 %v1074, %v1235
        %v1272 = vadd.f32 %v1079, %v1240
        %v1273 = vadd.f32 %v1082, %v1243
        %v1274 = vadd.f32 %v1087, %v1248
        %v1275 = vadd.f32 %v1090, %v1251
        %v1276 = vadd.f32 %v1095, %v1256
        %v1277 = vadd.f32 %v1098, %v1259
        %v1278 = vld [vmem:[%s388 + $0x40] sm:$0x1]
        %v1279 = vunpack.c.l.bf16 %v1278
        %v1280 = vlaneseq
        %v1281 = vshrl.u32 %v1280, 7
        %v1282 = vsub.s32 0, %v1281
        %v1283 = vrot.slane %v1279, %v1282
        %v1284 = vadd.f32 %v1262, %v1283
        %v1285 = vadd.f32 %v1263, %v1283
        %v1286 = vadd.f32 %v1264, %v1283
        %v1287 = vadd.f32 %v1265, %v1283
        %v1288 = vadd.f32 %v1266, %v1283
        %v1289 = vadd.f32 %v1267, %v1283
        %v1290 = vadd.f32 %v1268, %v1283
        %v1291 = vadd.f32 %v1269, %v1283
        %v1292 = vadd.f32 %v1270, %v1283
        %v1293 = vadd.f32 %v1271, %v1283
        %v1294 = vadd.f32 %v1272, %v1283
        %v1295 = vadd.f32 %v1273, %v1283
        %v1296 = vadd.f32 %v1274, %v1283
        %v1297 = vadd.f32 %v1275, %v1283
        %v1298 = vadd.f32 %v1276, %v1283
        %v1299 = vadd.f32 %v1277, %v1283
        %v1300 = vmax.f32 %v1284, 0.0
        %v1301 = vmax.f32 %v1285, 0.0
        %v1302 = vmax.f32 %v1286, 0.0
        %v1303 = vmax.f32 %v1287, 0.0
        %v1304 = vmax.f32 %v1288, 0.0
        %v1305 = vmax.f32 %v1289, 0.0
        %v1306 = vmax.f32 %v1290, 0.0
        %v1307 = vmax.f32 %v1291, 0.0
        %v1308 = vmax.f32 %v1292, 0.0
        %v1309 = vmax.f32 %v1293, 0.0
        %v1310 = vmax.f32 %v1294, 0.0
        %v1311 = vmax.f32 %v1295, 0.0
        %v1312 = vmax.f32 %v1296, 0.0
        %v1313 = vmax.f32 %v1297, 0.0
        %v1314 = vmax.f32 %v1298, 0.0
        %v1315 = vmax.f32 %v1299, 0.0
        %v1316 = vld [vmem:[%s388 + $0x48] sm:$0xf]
        %v1317 = vld [vmem:[%s388 + $0x4c] sm:$0xf]
        %v1318 = vld [vmem:[%s388 + $0x50] sm:$0xf]
        %v1319 = vld [vmem:[%s388 + $0x54] sm:$0xf]
        %v1320 = vld [vmem:[%s388 + $0x58] sm:$0xf]
        %v1321 = vld [vmem:[%s388 + $0x5c] sm:$0xf]
        %v1322 = vld [vmem:[%s388 + $0x60] sm:$0xf]
        %v1323 = vld [vmem:[%s388 + $0x64] sm:$0xf]
        %v1324 = vld [vmem:[%s388 + $0x68] sm:$0xf]
        %v1325 = vld [vmem:[%s388 + $0x6c] sm:$0xf]
        %v1326 = vld [vmem:[%s388 + $0x70] sm:$0xf]
        %v1327 = vld [vmem:[%s388 + $0x74] sm:$0xf]
        %v1328 = vld [vmem:[%s388 + $0x78] sm:$0xf]
        %v1329 = vld [vmem:[%s388 + $0x7c] sm:$0xf]
        %v1330 = vld [vmem:[%s388 + $0x80] sm:$0xf]
        %v1331 = vld [vmem:[%s388 + $0x84] sm:$0xf]
        %v1332 = vld [vmem:[%s388 + $0x88] sm:$0x1]
        %v1333 = vunpack.c.l.bf16 %v1332
        %v1334 = vpack.c.bf16 %v1301, %v1300
        %v1335 = vpack.c.bf16 %v1303, %v1302
        %v1336 = vpack.c.bf16 %v1305, %v1304
        %v1337 = vpack.c.bf16 %v1307, %v1306
        %v1338 = vpack.c.bf16 %v1309, %v1308
        %v1339 = vpack.c.bf16 %v1311, %v1310
        %v1340 = vpack.c.bf16 %v1313, %v1312
        %v1341 = vpack.c.bf16 %v1315, %v1314
        %v1342 = vlaneseq
        %v1343 = vshrl.u32 %v1342, 7
        %v1344 = vsub.s32 0, %v1343
        %v1345 = vrot.slane %v1333, %v1344
        %v1362 = vunpack.c.l.b16 %v1316
        %v1363 = vunpack.c.l.b16 %v1317
        %v1364 = vunpack.c.l.b16 %v1318
        %v1365 = vunpack.c.l.b16 %v1319
        %v1366 = vunpack.c.l.b16 %v1320
        %v1367 = vunpack.c.l.b16 %v1321
        %v1368 = vunpack.c.l.b16 %v1322
        %v1369 = vunpack.c.l.b16 %v1323
        %v1370 = vunpack.c.l.b16 %v1324
        %v1371 = vunpack.c.l.b16 %v1325
        %v1372 = vunpack.c.l.b16 %v1326
        %v1373 = vunpack.c.l.b16 %v1327
        %v1374 = vunpack.c.l.b16 %v1328
        %v1375 = vunpack.c.l.b16 %v1329
        %v1376 = vunpack.c.l.b16 %v1330
        %v1377 = vunpack.c.l.b16 %v1331
        %v1378 = vpack.c.b16 %v1363, %v1362
        %v1379 = vpack.c.b16 %v1365, %v1364
        %v1380 = vpack.c.b16 %v1367, %v1366
        %v1381 = vpack.c.b16 %v1369, %v1368
        %v1382 = vpack.c.b16 %v1371, %v1370
        %v1383 = vpack.c.b16 %v1373, %v1372
        %v1384 = vpack.c.b16 %v1375, %v1374
        %v1385 = vpack.c.b16 %v1377, %v1376
        %1394 = vmatprep.subr.bf16.mxu0 0
        %1395 = vmatpush1.bf16.msra.mxu0 %v1378
        %1396 = vmatprep.subr.bf16.mxu0 0
        %1397 = vmatpush1.bf16.msra.mxu0 %v1379
        %1398 = vmatprep.subr.bf16.mxu0 0
        %1399 = vmatpush1.bf16.msra.mxu0 %v1380
        %1400 = vmatprep.subr.bf16.mxu0 0
        %1401 = vmatpush1.bf16.msra.mxu0 %v1381
        %1402 = vmatprep.subr.bf16.mxu0 0
        %1403 = vmatpush1.bf16.msra.mxu0 %v1382
        %1404 = vmatprep.subr.bf16.mxu0 0
        %1405 = vmatpush1.bf16.msra.mxu0 %v1383
        %1406 = vmatprep.subr.bf16.mxu0 0
        %1407 = vmatpush1.bf16.msra.mxu0 %v1384
        %1408 = vmatprep.subr.bf16.mxu0 0
        %1409 = vmatpush1.bf16.msra.mxu0 %v1385
        %1410 = vmatprep.subr.bf16.mxu0 0
        %1411 = vmatpush1.bf16.msra.mxu0 0
        %1412 = vmatprep.subr.bf16.mxu0 0
        %1413 = vmatpush1.bf16.msra.mxu0 0
        %1414 = vmatprep.subr.bf16.mxu0 0
        %1415 = vmatpush1.bf16.msra.mxu0 0
        %1416 = vmatprep.subr.bf16.mxu0 0
        %1417 = vmatpush1.bf16.msra.mxu0 0
        %1418 = vmatprep.subr.bf16.mxu0 0
        %1419 = vmatpush1.bf16.msra.mxu0 0
        %1420 = vmatprep.subr.bf16.mxu0 0
        %1421 = vmatpush1.bf16.msra.mxu0 0
        %1422 = vmatprep.subr.bf16.mxu0 0
        %1423 = vmatpush1.bf16.msra.mxu0 0
        %1424 = vmatprep.subr.bf16.mxu0 0
        %1425 = vmatpush1.bf16.msra.mxu0 0
        %1426 = vmatprep.mubr.bf16.mxu0 0
        %1427 = vmatmul.mubr.bf16.gmra.mrb[0].mxu0 %v1334
        %v1428 = vpop.f32.mrb[0].mxu0
        %v1429 = vadd.f32 %v1345, %v1428
        %v1430 = vpop.f32.mrb[0].mxu0
        %v1431 = vpop.f32.mrb[0].mxu0
        %v1432 = vadd.f32 %v1345, %v1431
        %v1433 = vpop.f32.mrb[0].mxu0
        %1434 = vmatprep.mubr.bf16.mxu0 0
        %1435 = vmatmul.mubr.bf16.gmra.mrb[0].mxu0 %v1335
        %v1436 = vpop.f32.mrb[0].mxu0
        %v1437 = vadd.f32 %v1345, %v1436
        %v1438 = vpop.f32.mrb[0].mxu0
        %v1439 = vpop.f32.mrb[0].mxu0
        %v1440 = vadd.f32 %v1345, %v1439
        %v1441 = vpop.f32.mrb[0].mxu0
        %1442 = vmatprep.mubr.bf16.mxu0 0
        %1443 = vmatmul.mubr.bf16.gmra.mrb[0].mxu0 %v1336
        %v1444 = vpop.f32.mrb[0].mxu0
        %v1445 = vadd.f32 %v1345, %v1444
        %v1446 = vpop.f32.mrb[0].mxu0
        %v1447 = vpop.f32.mrb[0].mxu0
        %v1448 = vadd.f32 %v1345, %v1447
        %v1449 = vpop.f32.mrb[0].mxu0
        %1450 = vmatprep.mubr.bf16.mxu0 0
        %1451 = vmatmul.mubr.bf16.gmra.mrb[0].mxu0 %v1337
        %v1452 = vpop.f32.mrb[0].mxu0
        %v1453 = vadd.f32 %v1345, %v1452
        %v1454 = vpop.f32.mrb[0].mxu0
        %v1455 = vpop.f32.mrb[0].mxu0
        %v1456 = vadd.f32 %v1345, %v1455
        %v1457 = vpop.f32.mrb[0].mxu0
        %1458 = vmatprep.mubr.bf16.mxu0 0
        %1459 = vmatmul.mubr.bf16.gmra.mrb[0].mxu0 %v1338
        %v1460 = vpop.f32.mrb[0].mxu0
        %v1461 = vadd.f32 %v1345, %v1460
        %v1462 = vpop.f32.mrb[0].mxu0
        %v1463 = vpop.f32.mrb[0].mxu0
        %v1464 = vadd.f32 %v1345, %v1463
        %v1465 = vpop.f32.mrb[0].mxu0
        %1466 = vmatprep.mubr.bf16.mxu0 0
        %1467 = vmatmul.mubr.bf16.gmra.mrb[0].mxu0 %v1339
        %v1468 = vpop.f32.mrb[0].mxu0
        %v1469 = vadd.f32 %v1345, %v1468
        %v1470 = vpop.f32.mrb[0].mxu0
        %v1471 = vpop.f32.mrb[0].mxu0
        %v1472 = vadd.f32 %v1345, %v1471
        %v1473 = vpop.f32.mrb[0].mxu0
        %1474 = vmatprep.mubr.bf16.mxu0 0
        %1475 = vmatmul.mubr.bf16.gmra.mrb[0].mxu0 %v1340
        %v1476 = vpop.f32.mrb[0].mxu0
        %v1477 = vadd.f32 %v1345, %v1476
        %v1478 = vpop.f32.mrb[0].mxu0
        %v1479 = vpop.f32.mrb[0].mxu0
        %v1480 = vadd.f32 %v1345, %v1479
        %v1481 = vpop.f32.mrb[0].mxu0
        %1482 = vmatprep.mubr.bf16.mxu0 0
        %1483 = vmatmul.mubr.bf16.gmra.mrb[0].mxu0 %v1341
        %v1484 = vpop.f32.mrb[0].mxu0
        %v1485 = vadd.f32 %v1345, %v1484
        %v1486 = vpop.f32.mrb[0].mxu0
        %v1487 = vpop.f32.mrb[0].mxu0
        %v1488 = vadd.f32 %v1345, %v1487
        %v1489 = vpop.f32.mrb[0].mxu0
        %1490 = vdwg.mxu0
        %v1491 = vmax.f32 %v1429, 0.0
        %v1492 = vmax.f32 %v1432, 0.0
        %v1493 = vmax.f32 %v1437, 0.0
        %v1494 = vmax.f32 %v1440, 0.0
        %v1495 = vmax.f32 %v1445, 0.0
        %v1496 = vmax.f32 %v1448, 0.0
        %v1497 = vmax.f32 %v1453, 0.0
        %v1498 = vmax.f32 %v1456, 0.0
        %v1499 = vmax.f32 %v1461, 0.0
        %v1500 = vmax.f32 %v1464, 0.0
        %v1501 = vmax.f32 %v1469, 0.0
        %v1502 = vmax.f32 %v1472, 0.0
        %v1503 = vmax.f32 %v1477, 0.0
        %v1504 = vmax.f32 %v1480, 0.0
        %v1505 = vmax.f32 %v1485, 0.0
        %v1506 = vmax.f32 %v1488, 0.0
        %v1507 = vld [vmem:[%s388 + $0x90] sm:$0xf]
        %v1508 = vld [vmem:[%s388 + $0x94] sm:$0xf]
        %v1509 = vld [vmem:[%s388 + $0x98] sm:$0xf]
        %v1510 = vld [vmem:[%s388 + $0x9c] sm:$0xf]
        %v1511 = vld [vmem:[%s388 + $0xa0] sm:$0xf]
        %v1512 = vld [vmem:[%s388 + $0xa4] sm:$0xf]
        %v1513 = vld [vmem:[%s388 + $0xa8] sm:$0xf]
        %v1514 = vld [vmem:[%s388 + $0xac] sm:$0xf]
        %v1515 = vld [vmem:[%s388 + $0xb0] sm:$0xf]
        %v1516 = vld [vmem:[%s388 + $0xb4] sm:$0xf]
        %v1517 = vld [vmem:[%s388 + $0xb8] sm:$0xf]
        %v1518 = vld [vmem:[%s388 + $0xbc] sm:$0xf]
        %v1519 = vld [vmem:[%s388 + $0xc0] sm:$0xf]
        %v1520 = vld [vmem:[%s388 + $0xc4] sm:$0xf]
        %v1521 = vld [vmem:[%s388 + $0xc8] sm:$0xf]
        %v1522 = vld [vmem:[%s388 + $0xcc] sm:$0xf]
        %v1523 = vld [vmem:[%s388 + $0xd0] sm:$0x1]
        %v1524 = vunpack.c.l.bf16 %v1523
        %v1525 = vpack.c.bf16 %v1492, %v1491
        %v1526 = vpack.c.bf16 %v1494, %v1493
        %v1527 = vpack.c.bf16 %v1496, %v1495
        %v1528 = vpack.c.bf16 %v1498, %v1497
        %v1529 = vpack.c.bf16 %v1500, %v1499
        %v1530 = vpack.c.bf16 %v1502, %v1501
        %v1531 = vpack.c.bf16 %v1504, %v1503
        %v1532 = vpack.c.bf16 %v1506, %v1505
        %v1533 = vlaneseq
        %v1534 = vshrl.u32 %v1533, 7
        %v1535 = vsub.s32 0, %v1534
        %v1536 = vrot.slane %v1524, %v1535
        %v1553 = vunpack.c.l.b16 %v1507
        %v1554 = vunpack.c.l.b16 %v1508
        %v1555 = vunpack.c.l.b16 %v1509
        %v1556 = vunpack.c.l.b16 %v1510
        %v1557 = vunpack.c.l.b16 %v1511
        %v1558 = vunpack.c.l.b16 %v1512
        %v1559 = vunpack.c.l.b16 %v1513
        %v1560 = vunpack.c.l.b16 %v1514
        %v1561 = vunpack.c.l.b16 %v1515
        %v1562 = vunpack.c.l.b16 %v1516
        %v1563 = vunpack.c.l.b16 %v1517
        %v1564 = vunpack.c.l.b16 %v1518
        %v1565 = vunpack.c.l.b16 %v1519
        %v1566 = vunpack.c.l.b16 %v1520
        %v1567 = vunpack.c.l.b16 %v1521
        %v1568 = vunpack.c.l.b16 %v1522
        %v1569 = vpack.c.b16 %v1554, %v1553
        %v1570 = vpack.c.b16 %v1556, %v1555
        %v1571 = vpack.c.b16 %v1558, %v1557
        %v1572 = vpack.c.b16 %v1560, %v1559
        %v1573 = vpack.c.b16 %v1562, %v1561
        %v1574 = vpack.c.b16 %v1564, %v1563
        %v1575 = vpack.c.b16 %v1566, %v1565
        %v1576 = vpack.c.b16 %v1568, %v1567
        %1585 = vmatprep.subr.bf16.mxu0 0
        %1586 = vmatpush1.bf16.msra.mxu0 %v1569
        %1587 = vmatprep.subr.bf16.mxu0 0
        %1588 = vmatpush1.bf16.msra.mxu0 %v1570
        %1589 = vmatprep.subr.bf16.mxu0 0
        %1590 = vmatpush1.bf16.msra.mxu0 %v1571
        %1591 = vmatprep.subr.bf16.mxu0 0
        %1592 = vmatpush1.bf16.msra.mxu0 %v1572
        %1593 = vmatprep.subr.bf16.mxu0 0
        %1594 = vmatpush1.bf16.msra.mxu0 %v1573
        %1595 = vmatprep.subr.bf16.mxu0 0
        %1596 = vmatpush1.bf16.msra.mxu0 %v1574
        %1597 = vmatprep.subr.bf16.mxu0 0
        %1598 = vmatpush1.bf16.msra.mxu0 %v1575
        %1599 = vmatprep.subr.bf16.mxu0 0
        %1600 = vmatpush1.bf16.msra.mxu0 %v1576
        %1601 = vmatprep.subr.bf16.mxu0 0
        %1602 = vmatpush1.bf16.msra.mxu0 0
        %1603 = vmatprep.subr.bf16.mxu0 0
        %1604 = vmatpush1.bf16.msra.mxu0 0
        %1605 = vmatprep.subr.bf16.mxu0 0
        %1606 = vmatpush1.bf16.msra.mxu0 0
        %1607 = vmatprep.subr.bf16.mxu0 0
        %1608 = vmatpush1.bf16.msra.mxu0 0
        %1609 = vmatprep.subr.bf16.mxu0 0
        %1610 = vmatpush1.bf16.msra.mxu0 0
        %1611 = vmatprep.subr.bf16.mxu0 0
        %1612 = vmatpush1.bf16.msra.mxu0 0
        %1613 = vmatprep.subr.bf16.mxu0 0
        %1614 = vmatpush1.bf16.msra.mxu0 0
        %1615 = vmatprep.subr.bf16.mxu0 0
        %1616 = vmatpush1.bf16.msra.mxu0 0
        %1617 = vmatprep.mubr.bf16.mxu0 0
        %1618 = vmatmul.mubr.bf16.gmra.mrb[0].mxu0 %v1525
        %v1619 = vpop.f32.mrb[0].mxu0
        %v1620 = vadd.f32 %v1536, %v1619
        %v1621 = vpop.f32.mrb[0].mxu0
        %v1622 = vpop.f32.mrb[0].mxu0
        %v1623 = vadd.f32 %v1536, %v1622
        %v1624 = vpop.f32.mrb[0].mxu0
        %1625 = vmatprep.mubr.bf16.mxu0 0
        %1626 = vmatmul.mubr.bf16.gmra.mrb[0].mxu0 %v1526
        %v1627 = vpop.f32.mrb[0].mxu0
        %v1628 = vadd.f32 %v1536, %v1627
        %v1629 = vpop.f32.mrb[0].mxu0
        %v1630 = vpop.f32.mrb[0].mxu0
        %v1631 = vadd.f32 %v1536, %v1630
        %v1632 = vpop.f32.mrb[0].mxu0
        %1633 = vmatprep.mubr.bf16.mxu0 0
        %1634 = vmatmul.mubr.bf16.gmra.mrb[0].mxu0 %v1527
        %v1635 = vpop.f32.mrb[0].mxu0
        %v1636 = vadd.f32 %v1536, %v1635
        %v1637 = vpop.f32.mrb[0].mxu0
        %v1638 = vpop.f32.mrb[0].mxu0
        %v1639 = vadd.f32 %v1536, %v1638
        %v1640 = vpop.f32.mrb[0].mxu0
        %1641 = vmatprep.mubr.bf16.mxu0 0
        %1642 = vmatmul.mubr.bf16.gmra.mrb[0].mxu0 %v1528
        %v1643 = vpop.f32.mrb[0].mxu0
        %v1644 = vadd.f32 %v1536, %v1643
        %v1645 = vpop.f32.mrb[0].mxu0
        %v1646 = vpop.f32.mrb[0].mxu0
        %v1647 = vadd.f32 %v1536, %v1646
        %v1648 = vpop.f32.mrb[0].mxu0
        %1649 = vmatprep.mubr.bf16.mxu0 0
        %1650 = vmatmul.mubr.bf16.gmra.mrb[0].mxu0 %v1529
        %v1651 = vpop.f32.mrb[0].mxu0
        %v1652 = vadd.f32 %v1536, %v1651
        %v1653 = vpop.f32.mrb[0].mxu0
        %v1654 = vpop.f32.mrb[0].mxu0
        %v1655 = vadd.f32 %v1536, %v1654
        %v1656 = vpop.f32.mrb[0].mxu0
        %1657 = vmatprep.mubr.bf16.mxu0 0
        %1658 = vmatmul.mubr.bf16.gmra.mrb[0].mxu0 %v1530
        %v1659 = vpop.f32.mrb[0].mxu0
        %v1660 = vadd.f32 %v1536, %v1659
        %v1661 = vpop.f32.mrb[0].mxu0
        %v1662 = vpop.f32.mrb[0].mxu0
        %v1663 = vadd.f32 %v1536, %v1662
        %v1664 = vpop.f32.mrb[0].mxu0
        %1665 = vmatprep.mubr.bf16.mxu0 0
        %1666 = vmatmul.mubr.bf16.gmra.mrb[0].mxu0 %v1531
        %v1667 = vpop.f32.mrb[0].mxu0
        %v1668 = vadd.f32 %v1536, %v1667
        %v1669 = vpop.f32.mrb[0].mxu0
        %v1670 = vpop.f32.mrb[0].mxu0
        %v1671 = vadd.f32 %v1536, %v1670
        %v1672 = vpop.f32.mrb[0].mxu0
        %1673 = vmatprep.mubr.bf16.mxu0 0
        %1674 = vmatmul.mubr.bf16.gmra.mrb[0].mxu0 %v1532
        %v1675 = vpop.f32.mrb[0].mxu0
        %v1676 = vadd.f32 %v1536, %v1675
        %v1677 = vpop.f32.mrb[0].mxu0
        %v1678 = vpop.f32.mrb[0].mxu0
        %v1679 = vadd.f32 %v1536, %v1678
        %v1680 = vpop.f32.mrb[0].mxu0
        %1681 = vdwg.mxu0
        %v1682 = vld [vmem:[%s388 + $0xd8] sm:$0x1]
        %v1683 = vunpack.c.l.bf16 %v1682
        %v1684 = vld [vmem:[%s388 + $0xe0] sm:$0x1]
        %v1685 = vunpack.c.l.bf16 %v1684
        %v1686 = vlaneseq
        %v1687 = vand.u32 %v1686, 127
        %vm1688 = vcmp.lt.s32.totalorder %v1687, 32
        %v1689 = vsel %vm1688, 1, 0
        %v1690 = vcvt.s32.f32 %v1689
        %1691 = vadd.xlane.f32.xlu0 %v1620
        %v1692 = vpop.xlane.xlu0 %1691
        %1693 = vadd.xlane.f32.xlu0 %v1623
        %v1694 = vpop.xlane.xlu0 %1693
        %1695 = vadd.xlane.f32.xlu0 %v1628
        %v1696 = vpop.xlane.xlu0 %1695
        %1697 = vadd.xlane.f32.xlu0 %v1631
        %v1698 = vpop.xlane.xlu0 %1697
        %1699 = vadd.xlane.f32.xlu0 %v1636
        %v1700 = vpop.xlane.xlu0 %1699
        %1701 = vadd.xlane.f32.xlu0 %v1639
        %v1702 = vpop.xlane.xlu0 %1701
        %1703 = vadd.xlane.f32.xlu0 %v1644
        %v1704 = vpop.xlane.xlu0 %1703
        %1705 = vadd.xlane.f32.xlu0 %v1647
        %v1706 = vpop.xlane.xlu0 %1705
        %1707 = vadd.xlane.f32.xlu0 %v1652
        %v1708 = vpop.xlane.xlu0 %1707
        %1709 = vadd.xlane.f32.xlu0 %v1655
        %v1710 = vpop.xlane.xlu0 %1709
        %1711 = vadd.xlane.f32.xlu0 %v1660
        %v1712 = vpop.xlane.xlu0 %1711
        %1713 = vadd.xlane.f32.xlu0 %v1663
        %v1714 = vpop.xlane.xlu0 %1713
        %1715 = vadd.xlane.f32.xlu0 %v1668
        %v1716 = vpop.xlane.xlu0 %1715
        %1717 = vadd.xlane.f32.xlu0 %v1671
        %v1718 = vpop.xlane.xlu0 %1717
        %1719 = vadd.xlane.f32.xlu0 %v1676
        %v1720 = vpop.xlane.xlu0 %1719
        %1721 = vadd.xlane.f32.xlu0 %v1679
        %v1722 = vpop.xlane.xlu0 %1721
        %v1723 = vmul.f32 %v1692, 0.03125
        %v1724 = vmul.f32 %v1694, 0.03125
        %v1725 = vmul.f32 %v1696, 0.03125
        %v1726 = vmul.f32 %v1698, 0.03125
        %v1727 = vmul.f32 %v1700, 0.03125
        %v1728 = vmul.f32 %v1702, 0.03125
        %v1729 = vmul.f32 %v1704, 0.03125
        %v1730 = vmul.f32 %v1706, 0.03125
        %v1731 = vmul.f32 %v1708, 0.03125
        %v1732 = vmul.f32 %v1710, 0.03125
        %v1733 = vmul.f32 %v1712, 0.03125
        %v1734 = vmul.f32 %v1714, 0.03125
        %v1735 = vmul.f32 %v1716, 0.03125
        %v1736 = vmul.f32 %v1718, 0.03125
        %v1737 = vmul.f32 %v1720, 0.03125
        %v1738 = vmul.f32 %v1722, 0.03125
        %v1739 = vsub.f32 %v1620, %v1723
        %v1740 = vsub.f32 %v1623, %v1724
        %v1741 = vsub.f32 %v1628, %v1725
        %v1742 = vsub.f32 %v1631, %v1726
        %v1743 = vsub.f32 %v1636, %v1727
        %v1744 = vsub.f32 %v1639, %v1728
        %v1745 = vsub.f32 %v1644, %v1729
        %v1746 = vsub.f32 %v1647, %v1730
        %v1747 = vsub.f32 %v1652, %v1731
        %v1748 = vsub.f32 %v1655, %v1732
        %v1749 = vsub.f32 %v1660, %v1733
        %v1750 = vsub.f32 %v1663, %v1734
        %v1751 = vsub.f32 %v1668, %v1735
        %v1752 = vsub.f32 %v1671, %v1736
        %v1753 = vsub.f32 %v1676, %v1737
        %v1754 = vsub.f32 %v1679, %v1738
        %v1755 = vmul.f32 %v1739, %v1690
        %v1756 = vmul.f32 %v1740, %v1690
        %v1757 = vmul.f32 %v1741, %v1690
        %v1758 = vmul.f32 %v1742, %v1690
        %v1759 = vmul.f32 %v1743, %v1690
        %v1760 = vmul.f32 %v1744, %v1690
        %v1761 = vmul.f32 %v1745, %v1690
        %v1762 = vmul.f32 %v1746, %v1690
        %v1763 = vmul.f32 %v1747, %v1690
        %v1764 = vmul.f32 %v1748, %v1690
        %v1765 = vmul.f32 %v1749, %v1690
        %v1766 = vmul.f32 %v1750, %v1690
        %v1767 = vmul.f32 %v1751, %v1690
        %v1768 = vmul.f32 %v1752, %v1690
        %v1769 = vmul.f32 %v1753, %v1690
        %v1770 = vmul.f32 %v1754, %v1690
        %v1771 = vmul.f32 %v1755, %v1755
        %v1772 = vmul.f32 %v1756, %v1756
        %v1773 = vmul.f32 %v1757, %v1757
        %v1774 = vmul.f32 %v1758, %v1758
        %v1775 = vmul.f32 %v1759, %v1759
        %v1776 = vmul.f32 %v1760, %v1760
        %v1777 = vmul.f32 %v1761, %v1761
        %v1778 = vmul.f32 %v1762, %v1762
        %v1779 = vmul.f32 %v1763, %v1763
        %v1780 = vmul.f32 %v1764, %v1764
        %v1781 = vmul.f32 %v1765, %v1765
        %v1782 = vmul.f32 %v1766, %v1766
        %v1783 = vmul.f32 %v1767, %v1767
        %v1784 = vmul.f32 %v1768, %v1768
        %v1785 = vmul.f32 %v1769, %v1769
        %v1786 = vmul.f32 %v1770, %v1770
        %1787 = vadd.xlane.f32.xlu0 %v1771
        %v1788 = vpop.xlane.xlu0 %1787
        %1789 = vadd.xlane.f32.xlu0 %v1772
        %v1790 = vpop.xlane.xlu0 %1789
        %1791 = vadd.xlane.f32.xlu0 %v1773
        %v1792 = vpop.xlane.xlu0 %1791
        %1793 = vadd.xlane.f32.xlu0 %v1774
        %v1794 = vpop.xlane.xlu0 %1793
        %1795 = vadd.xlane.f32.xlu0 %v1775
        %v1796 = vpop.xlane.xlu0 %1795
        %1797 = vadd.xlane.f32.xlu0 %v1776
        %v1798 = vpop.xlane.xlu0 %1797
        %1799 = vadd.xlane.f32.xlu0 %v1777
        %v1800 = vpop.xlane.xlu0 %1799
        %1801 = vadd.xlane.f32.xlu0 %v1778
        %v1802 = vpop.xlane.xlu0 %1801
        %1803 = vadd.xlane.f32.xlu0 %v1779
        %v1804 = vpop.xlane.xlu0 %1803
        %1805 = vadd.xlane.f32.xlu0 %v1780
        %v1806 = vpop.xlane.xlu0 %1805
        %1807 = vadd.xlane.f32.xlu0 %v1781
        %v1808 = vpop.xlane.xlu0 %1807
        %1809 = vadd.xlane.f32.xlu0 %v1782
        %v1810 = vpop.xlane.xlu0 %1809
        %1811 = vadd.xlane.f32.xlu0 %v1783
        %v1812 = vpop.xlane.xlu0 %1811
        %1813 = vadd.xlane.f32.xlu0 %v1784
        %v1814 = vpop.xlane.xlu0 %1813
        %1815 = vadd.xlane.f32.xlu0 %v1785
        %v1816 = vpop.xlane.xlu0 %1815
        %1817 = vadd.xlane.f32.xlu0 %v1786
        %v1818 = vpop.xlane.xlu0 %1817
        %v1819 = vmul.f32 %v1788, 0.03125
        %v1820 = vmul.f32 %v1790, 0.03125
        %v1821 = vmul.f32 %v1792, 0.03125
        %v1822 = vmul.f32 %v1794, 0.03125
        %v1823 = vmul.f32 %v1796, 0.03125
        %v1824 = vmul.f32 %v1798, 0.03125
        %v1825 = vmul.f32 %v1800, 0.03125
        %v1826 = vmul.f32 %v1802, 0.03125
        %v1827 = vmul.f32 %v1804, 0.03125
        %v1828 = vmul.f32 %v1806, 0.03125
        %v1829 = vmul.f32 %v1808, 0.03125
        %v1830 = vmul.f32 %v1810, 0.03125
        %v1831 = vmul.f32 %v1812, 0.03125
        %v1832 = vmul.f32 %v1814, 0.03125
        %v1833 = vmul.f32 %v1816, 0.03125
        %v1834 = vmul.f32 %v1818, 0.03125
        %v1835 = vadd.f32 %v1819, 1e-05
        %v1836 = vadd.f32 %v1820, 1e-05
        %v1837 = vadd.f32 %v1821, 1e-05
        %v1838 = vadd.f32 %v1822, 1e-05
        %v1839 = vadd.f32 %v1823, 1e-05
        %v1840 = vadd.f32 %v1824, 1e-05
        %v1841 = vadd.f32 %v1825, 1e-05
        %v1842 = vadd.f32 %v1826, 1e-05
        %v1843 = vadd.f32 %v1827, 1e-05
        %v1844 = vadd.f32 %v1828, 1e-05
        %v1845 = vadd.f32 %v1829, 1e-05
        %v1846 = vadd.f32 %v1830, 1e-05
        %v1847 = vadd.f32 %v1831, 1e-05
        %v1848 = vadd.f32 %v1832, 1e-05
        %v1849 = vadd.f32 %v1833, 1e-05
        %v1850 = vadd.f32 %v1834, 1e-05
        %v1851 = vrsqrt.pop %v1835
        %v1852 = vrsqrt.pop %v1836
        %v1853 = vrsqrt.pop %v1837
        %v1854 = vrsqrt.pop %v1838
        %v1855 = vrsqrt.pop %v1839
        %v1856 = vrsqrt.pop %v1840
        %v1857 = vrsqrt.pop %v1841
        %v1858 = vrsqrt.pop %v1842
        %v1859 = vrsqrt.pop %v1843
        %v1860 = vrsqrt.pop %v1844
        %v1861 = vrsqrt.pop %v1845
        %v1862 = vrsqrt.pop %v1846
        %v1863 = vrsqrt.pop %v1847
        %v1864 = vrsqrt.pop %v1848
        %v1865 = vrsqrt.pop %v1849
        %v1866 = vrsqrt.pop %v1850
        %v1867 = vmul.f32 %v1755, %v1851
        %v1868 = vmul.f32 %v1756, %v1852
        %v1869 = vmul.f32 %v1757, %v1853
        %v1870 = vmul.f32 %v1758, %v1854
        %v1871 = vmul.f32 %v1759, %v1855
        %v1872 = vmul.f32 %v1760, %v1856
        %v1873 = vmul.f32 %v1761, %v1857
        %v1874 = vmul.f32 %v1762, %v1858
        %v1875 = vmul.f32 %v1763, %v1859
        %v1876 = vmul.f32 %v1764, %v1860
        %v1877 = vmul.f32 %v1765, %v1861
        %v1878 = vmul.f32 %v1766, %v1862
        %v1879 = vmul.f32 %v1767, %v1863
        %v1880 = vmul.f32 %v1768, %v1864
        %v1881 = vmul.f32 %v1769, %v1865
        %v1882 = vmul.f32 %v1770, %v1866
        %v1883 = vlaneseq
        %v1884 = vshrl.u32 %v1883, 7
        %v1885 = vsub.s32 0, %v1884
        %v1886 = vrot.slane %v1683, %v1885
        %v1887 = vmul.f32 %v1867, %v1886
        %v1888 = vmul.f32 %v1868, %v1886
        %v1889 = vmul.f32 %v1869, %v1886
        %v1890 = vmul.f32 %v1870, %v1886
        %v1891 = vmul.f32 %v1871, %v1886
        %v1892 = vmul.f32 %v1872, %v1886
        %v1893 = vmul.f32 %v1873, %v1886
        %v1894 = vmul.f32 %v1874, %v1886
        %v1895 = vmul.f32 %v1875, %v1886
        %v1896 = vmul.f32 %v1876, %v1886
        %v1897 = vmul.f32 %v1877, %v1886
        %v1898 = vmul.f32 %v1878, %v1886
        %v1899 = vmul.f32 %v1879, %v1886
        %v1900 = vmul.f32 %v1880, %v1886
        %v1901 = vmul.f32 %v1881, %v1886
        %v1902 = vmul.f32 %v1882, %v1886
        %v1903 = vlaneseq
        %v1904 = vshrl.u32 %v1903, 7
        %v1905 = vsub.s32 0, %v1904
        %v1906 = vrot.slane %v1685, %v1905
        %v1907 = vadd.f32 %v1887, %v1906
        %v1908 = vadd.f32 %v1888, %v1906
        %v1909 = vadd.f32 %v1889, %v1906
        %v1910 = vadd.f32 %v1890, %v1906
        %v1911 = vadd.f32 %v1891, %v1906
        %v1912 = vadd.f32 %v1892, %v1906
        %v1913 = vadd.f32 %v1893, %v1906
        %v1914 = vadd.f32 %v1894, %v1906
        %v1915 = vadd.f32 %v1895, %v1906
        %v1916 = vadd.f32 %v1896, %v1906
        %v1917 = vadd.f32 %v1897, %v1906
        %v1918 = vadd.f32 %v1898, %v1906
        %v1919 = vadd.f32 %v1899, %v1906
        %v1920 = vadd.f32 %v1900, %v1906
        %v1921 = vadd.f32 %v1901, %v1906
        %v1922 = vadd.f32 %v1902, %v1906
        %v1923 = vpack.c.bf16 %v1908, %v1907
        %v1924 = vpack.c.bf16 %v1910, %v1909
        %v1925 = vpack.c.bf16 %v1912, %v1911
        %v1926 = vpack.c.bf16 %v1914, %v1913
        %v1927 = vpack.c.bf16 %v1916, %v1915
        %v1928 = vpack.c.bf16 %v1918, %v1917
        %v1929 = vpack.c.bf16 %v1920, %v1919
        %v1930 = vpack.c.bf16 %v1922, %v1921
        %v1947 = vunpack.c.l.b16 %v570
        %v1948 = vunpack.c.l.b16 %v571
        %v1949 = vunpack.c.l.b16 %v572
        %v1950 = vunpack.c.l.b16 %v573
        %v1951 = vunpack.c.l.b16 %v574
        %v1952 = vunpack.c.l.b16 %v575
        %v1953 = vunpack.c.l.b16 %v576
        %v1954 = vunpack.c.l.b16 %v577
        %v1955 = vunpack.c.l.b16 %v578
        %v1956 = vunpack.c.l.b16 %v579
        %v1957 = vunpack.c.l.b16 %v580
        %v1958 = vunpack.c.l.b16 %v581
        %v1959 = vunpack.c.l.b16 %v582
        %v1960 = vunpack.c.l.b16 %v583
        %v1961 = vunpack.c.l.b16 %v584
        %v1962 = vunpack.c.l.b16 %v585
        %v1963 = vpack.c.b16 %v1948, %v1947
        %v1964 = vpack.c.b16 %v1950, %v1949
        %v1965 = vpack.c.b16 %v1952, %v1951
        %v1966 = vpack.c.b16 %v1954, %v1953
        %v1967 = vpack.c.b16 %v1956, %v1955
        %v1968 = vpack.c.b16 %v1958, %v1957
        %v1969 = vpack.c.b16 %v1960, %v1959
        %v1970 = vpack.c.b16 %v1962, %v1961
        %1979 = vmatprep.subr.bf16.mxu0 0
        %1980 = vmatpush1.bf16.msra.mxu0 %v1923
        %1981 = vmatprep.subr.bf16.mxu0 0
        %1982 = vmatpush1.bf16.msra.mxu0 %v1924
        %1983 = vmatprep.subr.bf16.mxu0 0
        %1984 = vmatpush1.bf16.msra.mxu0 %v1925
        %1985 = vmatprep.subr.bf16.mxu0 0
        %1986 = vmatpush1.bf16.msra.mxu0 %v1926
        %1987 = vmatprep.subr.bf16.mxu0 0
        %1988 = vmatpush1.bf16.msra.mxu0 %v1927
        %1989 = vmatprep.subr.bf16.mxu0 0
        %1990 = vmatpush1.bf16.msra.mxu0 %v1928
        %1991 = vmatprep.subr.bf16.mxu0 0
        %1992 = vmatpush1.bf16.msra.mxu0 %v1929
        %1993 = vmatprep.subr.bf16.mxu0 0
        %1994 = vmatpush1.bf16.msra.mxu0 %v1930
        %1995 = vmatprep.subr.bf16.mxu0 0
        %1996 = vmatpush1.bf16.msra.mxu0 0
        %1997 = vmatprep.subr.bf16.mxu0 0
        %1998 = vmatpush1.bf16.msra.mxu0 0
        %1999 = vmatprep.subr.bf16.mxu0 0
        %2000 = vmatpush1.bf16.msra.mxu0 0
        %2001 = vmatprep.subr.bf16.mxu0 0
        %2002 = vmatpush1.bf16.msra.mxu0 0
        %2003 = vmatprep.subr.bf16.mxu0 0
        %2004 = vmatpush1.bf16.msra.mxu0 0
        %2005 = vmatprep.subr.bf16.mxu0 0
        %2006 = vmatpush1.bf16.msra.mxu0 0
        %2007 = vmatprep.subr.bf16.mxu0 0
        %2008 = vmatpush1.bf16.msra.mxu0 0
        %2009 = vmatprep.subr.bf16.mxu0 0
        %2010 = vmatpush1.bf16.msra.mxu0 0
        %2011 = vmatprep.mubr.bf16.mxu0 0
        %2012 = vmatmul.mubr.bf16.gmra.mrb[0].mxu0 %v1963
        %v2013 = vpop.f32.mrb[0].mxu0
        %v2014 = vadd.f32 0.0, %v2013
        %v2015 = vpop.f32.mrb[0].mxu0
        %v2016 = vpop.f32.mrb[0].mxu0
        %v2017 = vadd.f32 0.0, %v2016
        %v2018 = vpop.f32.mrb[0].mxu0
        %2019 = vmatprep.mubr.bf16.mxu0 0
        %2020 = vmatmul.mubr.bf16.gmra.mrb[0].mxu0 %v1964
        %v2021 = vpop.f32.mrb[0].mxu0
        %v2022 = vadd.f32 0.0, %v2021
        %v2023 = vpop.f32.mrb[0].mxu0
        %v2024 = vpop.f32.mrb[0].mxu0
        %v2025 = vadd.f32 0.0, %v2024
        %v2026 = vpop.f32.mrb[0].mxu0
        %2027 = vmatprep.mubr.bf16.mxu0 0
        %2028 = vmatmul.mubr.bf16.gmra.mrb[0].mxu0 %v1965
        %v2029 = vpop.f32.mrb[0].mxu0
        %v2030 = vadd.f32 0.0, %v2029
        %v2031 = vpop.f32.mrb[0].mxu0
        %v2032 = vpop.f32.mrb[0].mxu0
        %v2033 = vadd.f32 0.0, %v2032
        %v2034 = vpop.f32.mrb[0].mxu0
        %2035 = vmatprep.mubr.bf16.mxu0 0
        %2036 = vmatmul.mubr.bf16.gmra.mrb[0].mxu0 %v1966
        %v2037 = vpop.f32.mrb[0].mxu0
        %v2038 = vadd.f32 0.0, %v2037
        %v2039 = vpop.f32.mrb[0].mxu0
        %v2040 = vpop.f32.mrb[0].mxu0
        %v2041 = vadd.f32 0.0, %v2040
        %v2042 = vpop.f32.mrb[0].mxu0
        %2043 = vmatprep.mubr.bf16.mxu0 0
        %2044 = vmatmul.mubr.bf16.gmra.mrb[0].mxu0 %v1967
        %v2045 = vpop.f32.mrb[0].mxu0
        %v2046 = vadd.f32 0.0, %v2045
        %v2047 = vpop.f32.mrb[0].mxu0
        %v2048 = vpop.f32.mrb[0].mxu0
        %v2049 = vadd.f32 0.0, %v2048
        %v2050 = vpop.f32.mrb[0].mxu0
        %2051 = vmatprep.mubr.bf16.mxu0 0
        %2052 = vmatmul.mubr.bf16.gmra.mrb[0].mxu0 %v1968
        %v2053 = vpop.f32.mrb[0].mxu0
        %v2054 = vadd.f32 0.0, %v2053
        %v2055 = vpop.f32.mrb[0].mxu0
        %v2056 = vpop.f32.mrb[0].mxu0
        %v2057 = vadd.f32 0.0, %v2056
        %v2058 = vpop.f32.mrb[0].mxu0
        %2059 = vmatprep.mubr.bf16.mxu0 0
        %2060 = vmatmul.mubr.bf16.gmra.mrb[0].mxu0 %v1969
        %v2061 = vpop.f32.mrb[0].mxu0
        %v2062 = vadd.f32 0.0, %v2061
        %v2063 = vpop.f32.mrb[0].mxu0
        %v2064 = vpop.f32.mrb[0].mxu0
        %v2065 = vadd.f32 0.0, %v2064
        %v2066 = vpop.f32.mrb[0].mxu0
        %2067 = vmatprep.mubr.bf16.mxu0 0
        %2068 = vmatmul.mubr.bf16.gmra.mrb[0].mxu0 %v1970
        %v2069 = vpop.f32.mrb[0].mxu0
        %v2070 = vadd.f32 0.0, %v2069
        %v2071 = vpop.f32.mrb[0].mxu0
        %v2072 = vpop.f32.mrb[0].mxu0
        %v2073 = vadd.f32 0.0, %v2072
        %v2074 = vpop.f32.mrb[0].mxu0
        %2075 = vdwg.mxu0
        %v2076 = vpack.c.bf16 %v2017, %v2014
        %v2077 = vpack.c.bf16 %v2025, %v2022
        %v2078 = vpack.c.bf16 %v2033, %v2030
        %v2079 = vpack.c.bf16 %v2041, %v2038
        %v2080 = vpack.c.bf16 %v2049, %v2046
        %v2081 = vpack.c.bf16 %v2057, %v2054
        %v2082 = vpack.c.bf16 %v2065, %v2062
        %v2083 = vpack.c.bf16 %v2073, %v2070
        %v2084 = vld [vmem:[%s388 + $0xe8] sm:$0xf]
        %v2085 = vld [vmem:[%s388 + $0xec] sm:$0xf]
        %v2086 = vld [vmem:[%s388 + $0xf0] sm:$0xf]
        %v2087 = vld [vmem:[%s388 + $0xf4] sm:$0xf]
        %v2088 = vld [vmem:[%s388 + $0xf8] sm:$0xf]
        %v2089 = vld [vmem:[%s388 + $0xfc] sm:$0xf]
        %v2090 = vld [vmem:[%s388 + $0x100] sm:$0xf]
        %v2091 = vld [vmem:[%s388 + $0x104] sm:$0xf]
        %v2092 = vld [vmem:[%s388 + $0x108] sm:$0xf]
        %v2093 = vld [vmem:[%s388 + $0x10c] sm:$0xf]
        %v2094 = vld [vmem:[%s388 + $0x110] sm:$0xf]
        %v2095 = vld [vmem:[%s388 + $0x114] sm:$0xf]
        %v2096 = vld [vmem:[%s388 + $0x118] sm:$0xf]
        %v2097 = vld [vmem:[%s388 + $0x11c] sm:$0xf]
        %v2098 = vld [vmem:[%s388 + $0x120] sm:$0xf]
        %v2099 = vld [vmem:[%s388 + $0x124] sm:$0xf]
        %v2100 = vld [vmem:[%s388 + $0x128] sm:$0xf]
        %v2101 = vld [vmem:[%s388 + $0x12c] sm:$0xf]
        %v2102 = vld [vmem:[%s388 + $0x130] sm:$0xf]
        %v2103 = vld [vmem:[%s388 + $0x134] sm:$0xf]
        %v2104 = vld [vmem:[%s388 + $0x138] sm:$0xf]
        %v2105 = vld [vmem:[%s388 + $0x13c] sm:$0xf]
        %v2106 = vld [vmem:[%s388 + $0x140] sm:$0xf]
        %v2107 = vld [vmem:[%s388 + $0x144] sm:$0xf]
        %v2108 = vld [vmem:[%s388 + $0x148] sm:$0xf]
        %v2109 = vld [vmem:[%s388 + $0x14c] sm:$0xf]
        %v2110 = vld [vmem:[%s388 + $0x150] sm:$0xf]
        %v2111 = vld [vmem:[%s388 + $0x154] sm:$0xf]
        %v2112 = vld [vmem:[%s388 + $0x158] sm:$0xf]
        %v2113 = vld [vmem:[%s388 + $0x15c] sm:$0xf]
        %v2114 = vld [vmem:[%s388 + $0x160] sm:$0xf]
        %v2115 = vld [vmem:[%s388 + $0x164] sm:$0xf]
        %v2132 = vunpack.c.l.b16 %v2100
        %v2133 = vunpack.c.l.b16 %v2101
        %v2134 = vunpack.c.l.b16 %v2102
        %v2135 = vunpack.c.l.b16 %v2103
        %v2136 = vunpack.c.l.b16 %v2104
        %v2137 = vunpack.c.l.b16 %v2105
        %v2138 = vunpack.c.l.b16 %v2106
        %v2139 = vunpack.c.l.b16 %v2107
        %v2140 = vunpack.c.l.b16 %v2108
        %v2141 = vunpack.c.l.b16 %v2109
        %v2142 = vunpack.c.l.b16 %v2110
        %v2143 = vunpack.c.l.b16 %v2111
        %v2144 = vunpack.c.l.b16 %v2112
        %v2145 = vunpack.c.l.b16 %v2113
        %v2146 = vunpack.c.l.b16 %v2114
        %v2147 = vunpack.c.l.b16 %v2115
        %v2148 = vpack.c.b16 %v2133, %v2132
        %v2149 = vpack.c.b16 %v2135, %v2134
        %v2150 = vpack.c.b16 %v2137, %v2136
        %v2151 = vpack.c.b16 %v2139, %v2138
        %v2152 = vpack.c.b16 %v2141, %v2140
        %v2153 = vpack.c.b16 %v2143, %v2142
        %v2154 = vpack.c.b16 %v2145, %v2144
        %v2155 = vpack.c.b16 %v2147, %v2146
        %2164 = vmatprep.subr.bf16.mxu0 0
        %2165 = vmatpush1.bf16.msra.mxu0 %v2148
        %2166 = vmatprep.subr.bf16.mxu0 0
        %2167 = vmatpush1.bf16.msra.mxu0 %v2149
        %2168 = vmatprep.subr.bf16.mxu0 0
        %2169 = vmatpush1.bf16.msra.mxu0 %v2150
        %2170 = vmatprep.subr.bf16.mxu0 0
        %2171 = vmatpush1.bf16.msra.mxu0 %v2151
        %2172 = vmatprep.subr.bf16.mxu0 0
        %2173 = vmatpush1.bf16.msra.mxu0 %v2152
        %2174 = vmatprep.subr.bf16.mxu0 0
        %2175 = vmatpush1.bf16.msra.mxu0 %v2153
        %2176 = vmatprep.subr.bf16.mxu0 0
        %2177 = vmatpush1.bf16.msra.mxu0 %v2154
        %2178 = vmatprep.subr.bf16.mxu0 0
        %2179 = vmatpush1.bf16.msra.mxu0 %v2155
        %2180 = vmatprep.subr.bf16.mxu0 0
        %2181 = vmatpush1.bf16.msra.mxu0 0
        %2182 = vmatprep.subr.bf16.mxu0 0
        %2183 = vmatpush1.bf16.msra.mxu0 0
        %2184 = vmatprep.subr.bf16.mxu0 0
        %2185 = vmatpush1.bf16.msra.mxu0 0
        %2186 = vmatprep.subr.bf16.mxu0 0
        %2187 = vmatpush1.bf16.msra.mxu0 0
        %2188 = vmatprep.subr.bf16.mxu0 0
        %2189 = vmatpush1.bf16.msra.mxu0 0
        %2190 = vmatprep.subr.bf16.mxu0 0
        %2191 = vmatpush1.bf16.msra.mxu0 0
        %2192 = vmatprep.subr.bf16.mxu0 0
        %2193 = vmatpush1.bf16.msra.mxu0 0
        %2194 = vmatprep.subr.bf16.mxu0 0
        %2195 = vmatpush1.bf16.msra.mxu0 0
        %2196 = vmatprep.mubr.bf16.mxu0 0
        %2197 = vmatmul.mubr.bf16.gmra.mrb[0].mxu0 %v522
        %v2198 = vpop.f32.mrb[0].mxu0
        %v2199 = vadd.f32 0.0, %v2198
        %v2200 = vpop.f32.mrb[0].mxu0
        %v2201 = vpop.f32.mrb[0].mxu0
        %v2202 = vadd.f32 0.0, %v2201
        %v2203 = vpop.f32.mrb[0].mxu0
        %2204 = vmatprep.mubr.bf16.mxu0 0
        %2205 = vmatmul.mubr.bf16.gmra.mrb[0].mxu0 %v523
        %v2206 = vpop.f32.mrb[0].mxu0
        %v2207 = vadd.f32 0.0, %v2206
        %v2208 = vpop.f32.mrb[0].mxu0
        %v2209 = vpop.f32.mrb[0].mxu0
        %v2210 = vadd.f32 0.0, %v2209
        %v2211 = vpop.f32.mrb[0].mxu0
        %2212 = vmatprep.mubr.bf16.mxu0 0
        %2213 = vmatmul.mubr.bf16.gmra.mrb[0].mxu0 %v524
        %v2214 = vpop.f32.mrb[0].mxu0
        %v2215 = vadd.f32 0.0, %v2214
        %v2216 = vpop.f32.mrb[0].mxu0
        %v2217 = vpop.f32.mrb[0].mxu0
        %v2218 = vadd.f32 0.0, %v2217
        %v2219 = vpop.f32.mrb[0].mxu0
        %2220 = vmatprep.mubr.bf16.mxu0 0
        %2221 = vmatmul.mubr.bf16.gmra.mrb[0].mxu0 %v525
        %v2222 = vpop.f32.mrb[0].mxu0
        %v2223 = vadd.f32 0.0, %v2222
        %v2224 = vpop.f32.mrb[0].mxu0
        %v2225 = vpop.f32.mrb[0].mxu0
        %v2226 = vadd.f32 0.0, %v2225
        %v2227 = vpop.f32.mrb[0].mxu0
        %2228 = vmatprep.mubr.bf16.mxu0 0
        %2229 = vmatmul.mubr.bf16.gmra.mrb[0].mxu0 %v526
        %v2230 = vpop.f32.mrb[0].mxu0
        %v2231 = vadd.f32 0.0, %v2230
        %v2232 = vpop.f32.mrb[0].mxu0
        %v2233 = vpop.f32.mrb[0].mxu0
        %v2234 = vadd.f32 0.0, %v2233
        %v2235 = vpop.f32.mrb[0].mxu0
        %2236 = vmatprep.mubr.bf16.mxu0 0
        %2237 = vmatmul.mubr.bf16.gmra.mrb[0].mxu0 %v527
        %v2238 = vpop.f32.mrb[0].mxu0
        %v2239 = vadd.f32 0.0, %v2238
        %v2240 = vpop.f32.mrb[0].mxu0
        %v2241 = vpop.f32.mrb[0].mxu0
        %v2242 = vadd.f32 0.0, %v2241
        %v2243 = vpop.f32.mrb[0].mxu0
        %2244 = vmatprep.mubr.bf16.mxu0 0
        %2245 = vmatmul.mubr.bf16.gmra.mrb[0].mxu0 %v528
        %v2246 = vpop.f32.mrb[0].mxu0
        %v2247 = vadd.f32 0.0, %v2246
        %v2248 = vpop.f32.mrb[0].mxu0
        %v2249 = vpop.f32.mrb[0].mxu0
        %v2250 = vadd.f32 0.0, %v2249
        %v2251 = vpop.f32.mrb[0].mxu0
        %2252 = vmatprep.mubr.bf16.mxu0 0
        %2253 = vmatmul.mubr.bf16.gmra.mrb[0].mxu0 %v529
        %v2254 = vpop.f32.mrb[0].mxu0
        %v2255 = vadd.f32 0.0, %v2254
        %v2256 = vpop.f32.mrb[0].mxu0
        %v2257 = vpop.f32.mrb[0].mxu0
        %v2258 = vadd.f32 0.0, %v2257
        %v2259 = vpop.f32.mrb[0].mxu0
        %2260 = vdwg.mxu0
        %v2277 = vunpack.c.l.b16 %v2084
        %v2278 = vunpack.c.l.b16 %v2085
        %v2279 = vunpack.c.l.b16 %v2086
        %v2280 = vunpack.c.l.b16 %v2087
        %v2281 = vunpack.c.l.b16 %v2088
        %v2282 = vunpack.c.l.b16 %v2089
        %v2283 = vunpack.c.l.b16 %v2090
        %v2284 = vunpack.c.l.b16 %v2091
        %v2285 = vunpack.c.l.b16 %v2092
        %v2286 = vunpack.c.l.b16 %v2093
        %v2287 = vunpack.c.l.b16 %v2094
        %v2288 = vunpack.c.l.b16 %v2095
        %v2289 = vunpack.c.l.b16 %v2096
        %v2290 = vunpack.c.l.b16 %v2097
        %v2291 = vunpack.c.l.b16 %v2098
        %v2292 = vunpack.c.l.b16 %v2099
        %v2293 = vpack.c.b16 %v2278, %v2277
        %v2294 = vpack.c.b16 %v2280, %v2279
        %v2295 = vpack.c.b16 %v2282, %v2281
        %v2296 = vpack.c.b16 %v2284, %v2283
        %v2297 = vpack.c.b16 %v2286, %v2285
        %v2298 = vpack.c.b16 %v2288, %v2287
        %v2299 = vpack.c.b16 %v2290, %v2289
        %v2300 = vpack.c.b16 %v2292, %v2291
        %2309 = vmatprep.subr.bf16.mxu0 0
        %2310 = vmatpush1.bf16.msra.mxu0 %v2293
        %2311 = vmatprep.subr.bf16.mxu0 0
        %2312 = vmatpush1.bf16.msra.mxu0 %v2294
        %2313 = vmatprep.subr.bf16.mxu0 0
        %2314 = vmatpush1.bf16.msra.mxu0 %v2295
        %2315 = vmatprep.subr.bf16.mxu0 0
        %2316 = vmatpush1.bf16.msra.mxu0 %v2296
        %2317 = vmatprep.subr.bf16.mxu0 0
        %2318 = vmatpush1.bf16.msra.mxu0 %v2297
        %2319 = vmatprep.subr.bf16.mxu0 0
        %2320 = vmatpush1.bf16.msra.mxu0 %v2298
        %2321 = vmatprep.subr.bf16.mxu0 0
        %2322 = vmatpush1.bf16.msra.mxu0 %v2299
        %2323 = vmatprep.subr.bf16.mxu0 0
        %2324 = vmatpush1.bf16.msra.mxu0 %v2300
        %2325 = vmatprep.subr.bf16.mxu0 0
        %2326 = vmatpush1.bf16.msra.mxu0 0
        %2327 = vmatprep.subr.bf16.mxu0 0
        %2328 = vmatpush1.bf16.msra.mxu0 0
        %2329 = vmatprep.subr.bf16.mxu0 0
        %2330 = vmatpush1.bf16.msra.mxu0 0
        %2331 = vmatprep.subr.bf16.mxu0 0
        %2332 = vmatpush1.bf16.msra.mxu0 0
        %2333 = vmatprep.subr.bf16.mxu0 0
        %2334 = vmatpush1.bf16.msra.mxu0 0
        %2335 = vmatprep.subr.bf16.mxu0 0
        %2336 = vmatpush1.bf16.msra.mxu0 0
        %2337 = vmatprep.subr.bf16.mxu0 0
        %2338 = vmatpush1.bf16.msra.mxu0 0
        %2339 = vmatprep.subr.bf16.mxu0 0
        %2340 = vmatpush1.bf16.msra.mxu0 0
        %2341 = vmatprep.mubr.bf16.mxu0 0
        %2342 = vmatmul.mubr.bf16.gmra.mrb[0].mxu0 %v2076
        %v2343 = vpop.f32.mrb[0].mxu0
        %v2344 = vadd.f32 %v2199, %v2343
        %v2345 = vpop.f32.mrb[0].mxu0
        %v2346 = vpop.f32.mrb[0].mxu0
        %v2347 = vadd.f32 %v2202, %v2346
        %v2348 = vpop.f32.mrb[0].mxu0
        %2349 = vmatprep.mubr.bf16.mxu0 0
        %2350 = vmatmul.mubr.bf16.gmra.mrb[0].mxu0 %v2077
        %v2351 = vpop.f32.mrb[0].mxu0
        %v2352 = vadd.f32 %v2207, %v2351
        %v2353 = vpop.f32.mrb[0].mxu0
        %v2354 = vpop.f32.mrb[0].mxu0
        %v2355 = vadd.f32 %v2210, %v2354
        %v2356 = vpop.f32.mrb[0].mxu0
        %2357 = vmatprep.mubr.bf16.mxu0 0
        %2358 = vmatmul.mubr.bf16.gmra.mrb[0].mxu0 %v2078
        %v2359 = vpop.f32.mrb[0].mxu0
        %v2360 = vadd.f32 %v2215, %v2359
        %v2361 = vpop.f32.mrb[0].mxu0
        %v2362 = vpop.f32.mrb[0].mxu0
        %v2363 = vadd.f32 %v2218, %v2362
        %v2364 = vpop.f32.mrb[0].mxu0
        %2365 = vmatprep.mubr.bf16.mxu0 0
        %2366 = vmatmul.mubr.bf16.gmra.mrb[0].mxu0 %v2079
        %v2367 = vpop.f32.mrb[0].mxu0
        %v2368 = vadd.f32 %v2223, %v2367
        %v2369 = vpop.f32.mrb[0].mxu0
        %v2370 = vpop.f32.mrb[0].mxu0
        %v2371 = vadd.f32 %v2226, %v2370
        %v2372 = vpop.f32.mrb[0].mxu0
        %2373 = vmatprep.mubr.bf16.mxu0 0
        %2374 = vmatmul.mubr.bf16.gmra.mrb[0].mxu0 %v2080
        %v2375 = vpop.f32.mrb[0].mxu0
        %v2376 = vadd.f32 %v2231, %v2375
        %v2377 = vpop.f32.mrb[0].mxu0
        %v2378 = vpop.f32.mrb[0].mxu0
        %v2379 = vadd.f32 %v2234, %v2378
        %v2380 = vpop.f32.mrb[0].mxu0
        %2381 = vmatprep.mubr.bf16.mxu0 0
        %2382 = vmatmul.mubr.bf16.gmra.mrb[0].mxu0 %v2081
        %v2383 = vpop.f32.mrb[0].mxu0
        %v2384 = vadd.f32 %v2239, %v2383
        %v2385 = vpop.f32.mrb[0].mxu0
        %v2386 = vpop.f32.mrb[0].mxu0
        %v2387 = vadd.f32 %v2242, %v2386
        %v2388 = vpop.f32.mrb[0].mxu0
        %2389 = vmatprep.mubr.bf16.mxu0 0
        %2390 = vmatmul.mubr.bf16.gmra.mrb[0].mxu0 %v2082
        %v2391 = vpop.f32.mrb[0].mxu0
        %v2392 = vadd.f32 %v2247, %v2391
        %v2393 = vpop.f32.mrb[0].mxu0
        %v2394 = vpop.f32.mrb[0].mxu0
        %v2395 = vadd.f32 %v2250, %v2394
        %v2396 = vpop.f32.mrb[0].mxu0
        %2397 = vmatprep.mubr.bf16.mxu0 0
        %2398 = vmatmul.mubr.bf16.gmra.mrb[0].mxu0 %v2083
        %v2399 = vpop.f32.mrb[0].mxu0
        %v2400 = vadd.f32 %v2255, %v2399
        %v2401 = vpop.f32.mrb[0].mxu0
        %v2402 = vpop.f32.mrb[0].mxu0
        %v2403 = vadd.f32 %v2258, %v2402
        %v2404 = vpop.f32.mrb[0].mxu0
        %2405 = vdwg.mxu0
        %v2406 = vld [vmem:[%s388 + $0x168] sm:$0x1]
        %v2407 = vunpack.c.l.bf16 %v2406
        %v2408 = vlaneseq
        %v2409 = vshrl.u32 %v2408, 7
        %v2410 = vsub.s32 0, %v2409
        %v2411 = vrot.slane %v2407, %v2410
        %v2412 = vadd.f32 %v2344, %v2411
        %v2413 = vadd.f32 %v2347, %v2411
        %v2414 = vadd.f32 %v2352, %v2411
        %v2415 = vadd.f32 %v2355, %v2411
        %v2416 = vadd.f32 %v2360, %v2411
        %v2417 = vadd.f32 %v2363, %v2411
        %v2418 = vadd.f32 %v2368, %v2411
        %v2419 = vadd.f32 %v2371, %v2411
        %v2420 = vadd.f32 %v2376, %v2411
        %v2421 = vadd.f32 %v2379, %v2411
        %v2422 = vadd.f32 %v2384, %v2411
        %v2423 = vadd.f32 %v2387, %v2411
        %v2424 = vadd.f32 %v2392, %v2411
        %v2425 = vadd.f32 %v2395, %v2411
        %v2426 = vadd.f32 %v2400, %v2411
        %v2427 = vadd.f32 %v2403, %v2411
        %v2428 = vmax.f32 %v2412, 0.0
        %v2429 = vmax.f32 %v2413, 0.0
        %v2430 = vmax.f32 %v2414, 0.0
        %v2431 = vmax.f32 %v2415, 0.0
        %v2432 = vmax.f32 %v2416, 0.0
        %v2433 = vmax.f32 %v2417, 0.0
        %v2434 = vmax.f32 %v2418, 0.0
        %v2435 = vmax.f32 %v2419, 0.0
        %v2436 = vmax.f32 %v2420, 0.0
        %v2437 = vmax.f32 %v2421, 0.0
        %v2438 = vmax.f32 %v2422, 0.0
        %v2439 = vmax.f32 %v2423, 0.0
        %v2440 = vmax.f32 %v2424, 0.0
        %v2441 = vmax.f32 %v2425, 0.0
        %v2442 = vmax.f32 %v2426, 0.0
        %v2443 = vmax.f32 %v2427, 0.0
        %v2444 = vld [vmem:[%s388 + $0x170] sm:$0xf]
        %v2445 = vld [vmem:[%s388 + $0x174] sm:$0xf]
        %v2446 = vld [vmem:[%s388 + $0x178] sm:$0xf]
        %v2447 = vld [vmem:[%s388 + $0x17c] sm:$0xf]
        %v2448 = vld [vmem:[%s388 + $0x180] sm:$0xf]
        %v2449 = vld [vmem:[%s388 + $0x184] sm:$0xf]
        %v2450 = vld [vmem:[%s388 + $0x188] sm:$0xf]
        %v2451 = vld [vmem:[%s388 + $0x18c] sm:$0xf]
        %v2452 = vld [vmem:[%s388 + $0x190] sm:$0xf]
        %v2453 = vld [vmem:[%s388 + $0x194] sm:$0xf]
        %v2454 = vld [vmem:[%s388 + $0x198] sm:$0xf]
        %v2455 = vld [vmem:[%s388 + $0x19c] sm:$0xf]
        %v2456 = vld [vmem:[%s388 + $0x1a0] sm:$0xf]
        %v2457 = vld [vmem:[%s388 + $0x1a4] sm:$0xf]
        %v2458 = vld [vmem:[%s388 + $0x1a8] sm:$0xf]
        %v2459 = vld [vmem:[%s388 + $0x1ac] sm:$0xf]
        %v2460 = vld [vmem:[%s388 + $0x1b0] sm:$0x1]
        %v2461 = vunpack.c.l.bf16 %v2460
        %v2462 = vpack.c.bf16 %v2429, %v2428
        %v2463 = vpack.c.bf16 %v2431, %v2430
        %v2464 = vpack.c.bf16 %v2433, %v2432
        %v2465 = vpack.c.bf16 %v2435, %v2434
        %v2466 = vpack.c.bf16 %v2437, %v2436
        %v2467 = vpack.c.bf16 %v2439, %v2438
        %v2468 = vpack.c.bf16 %v2441, %v2440
        %v2469 = vpack.c.bf16 %v2443, %v2442
        %v2470 = vlaneseq
        %v2471 = vshrl.u32 %v2470, 7
        %v2472 = vsub.s32 0, %v2471
        %v2473 = vrot.slane %v2461, %v2472
        %v2490 = vunpack.c.l.b16 %v2444
        %v2491 = vunpack.c.l.b16 %v2445
        %v2492 = vunpack.c.l.b16 %v2446
        %v2493 = vunpack.c.l.b16 %v2447
        %v2494 = vunpack.c.l.b16 %v2448
        %v2495 = vunpack.c.l.b16 %v2449
        %v2496 = vunpack.c.l.b16 %v2450
        %v2497 = vunpack.c.l.b16 %v2451
        %v2498 = vunpack.c.l.b16 %v2452
        %v2499 = vunpack.c.l.b16 %v2453
        %v2500 = vunpack.c.l.b16 %v2454
        %v2501 = vunpack.c.l.b16 %v2455
        %v2502 = vunpack.c.l.b16 %v2456
        %v2503 = vunpack.c.l.b16 %v2457
        %v2504 = vunpack.c.l.b16 %v2458
        %v2505 = vunpack.c.l.b16 %v2459
        %v2506 = vpack.c.b16 %v2491, %v2490
        %v2507 = vpack.c.b16 %v2493, %v2492
        %v2508 = vpack.c.b16 %v2495, %v2494
        %v2509 = vpack.c.b16 %v2497, %v2496
        %v2510 = vpack.c.b16 %v2499, %v2498
        %v2511 = vpack.c.b16 %v2501, %v2500
        %v2512 = vpack.c.b16 %v2503, %v2502
        %v2513 = vpack.c.b16 %v2505, %v2504
        %2522 = vmatprep.subr.bf16.mxu0 0
        %2523 = vmatpush1.bf16.msra.mxu0 %v2506
        %2524 = vmatprep.subr.bf16.mxu0 0
        %2525 = vmatpush1.bf16.msra.mxu0 %v2507
        %2526 = vmatprep.subr.bf16.mxu0 0
        %2527 = vmatpush1.bf16.msra.mxu0 %v2508
        %2528 = vmatprep.subr.bf16.mxu0 0
        %2529 = vmatpush1.bf16.msra.mxu0 %v2509
        %2530 = vmatprep.subr.bf16.mxu0 0
        %2531 = vmatpush1.bf16.msra.mxu0 %v2510
        %2532 = vmatprep.subr.bf16.mxu0 0
        %2533 = vmatpush1.bf16.msra.mxu0 %v2511
        %2534 = vmatprep.subr.bf16.mxu0 0
        %2535 = vmatpush1.bf16.msra.mxu0 %v2512
        %2536 = vmatprep.subr.bf16.mxu0 0
        %2537 = vmatpush1.bf16.msra.mxu0 %v2513
        %2538 = vmatprep.subr.bf16.mxu0 0
        %2539 = vmatpush1.bf16.msra.mxu0 0
        %2540 = vmatprep.subr.bf16.mxu0 0
        %2541 = vmatpush1.bf16.msra.mxu0 0
        %2542 = vmatprep.subr.bf16.mxu0 0
        %2543 = vmatpush1.bf16.msra.mxu0 0
        %2544 = vmatprep.subr.bf16.mxu0 0
        %2545 = vmatpush1.bf16.msra.mxu0 0
        %2546 = vmatprep.subr.bf16.mxu0 0
        %2547 = vmatpush1.bf16.msra.mxu0 0
        %2548 = vmatprep.subr.bf16.mxu0 0
        %2549 = vmatpush1.bf16.msra.mxu0 0
        %2550 = vmatprep.subr.bf16.mxu0 0
        %2551 = vmatpush1.bf16.msra.mxu0 0
        %2552 = vmatprep.subr.bf16.mxu0 0
        %2553 = vmatpush1.bf16.msra.mxu0 0
        %2554 = vmatprep.mubr.bf16.mxu0 0
        %2555 = vmatmul.mubr.bf16.gmra.mrb[0].mxu0 %v2462
        %v2556 = vpop.f32.mrb[0].mxu0
        %v2557 = vadd.f32 %v2473, %v2556
        %v2558 = vpop.f32.mrb[0].mxu0
        %v2559 = vpop.f32.mrb[0].mxu0
        %v2560 = vadd.f32 %v2473, %v2559
        %v2561 = vpop.f32.mrb[0].mxu0
        %2562 = vmatprep.mubr.bf16.mxu0 0
        %2563 = vmatmul.mubr.bf16.gmra.mrb[0].mxu0 %v2463
        %v2564 = vpop.f32.mrb[0].mxu0
        %v2565 = vadd.f32 %v2473, %v2564
        %v2566 = vpop.f32.mrb[0].mxu0
        %v2567 = vpop.f32.mrb[0].mxu0
        %v2568 = vadd.f32 %v2473, %v2567
        %v2569 = vpop.f32.mrb[0].mxu0
        %2570 = vmatprep.mubr.bf16.mxu0 0
        %2571 = vmatmul.mubr.bf16.gmra.mrb[0].mxu0 %v2464
        %v2572 = vpop.f32.mrb[0].mxu0
        %v2573 = vadd.f32 %v2473, %v2572
        %v2574 = vpop.f32.mrb[0].mxu0
        %v2575 = vpop.f32.mrb[0].mxu0
        %v2576 = vadd.f32 %v2473, %v2575
        %v2577 = vpop.f32.mrb[0].mxu0
        %2578 = vmatprep.mubr.bf16.mxu0 0
        %2579 = vmatmul.mubr.bf16.gmra.mrb[0].mxu0 %v2465
        %v2580 = vpop.f32.mrb[0].mxu0
        %v2581 = vadd.f32 %v2473, %v2580
        %v2582 = vpop.f32.mrb[0].mxu0
        %v2583 = vpop.f32.mrb[0].mxu0
        %v2584 = vadd.f32 %v2473, %v2583
        %v2585 = vpop.f32.mrb[0].mxu0
        %2586 = vmatprep.mubr.bf16.mxu0 0
        %2587 = vmatmul.mubr.bf16.gmra.mrb[0].mxu0 %v2466
        %v2588 = vpop.f32.mrb[0].mxu0
        %v2589 = vadd.f32 %v2473, %v2588
        %v2590 = vpop.f32.mrb[0].mxu0
        %v2591 = vpop.f32.mrb[0].mxu0
        %v2592 = vadd.f32 %v2473, %v2591
        %v2593 = vpop.f32.mrb[0].mxu0
        %2594 = vmatprep.mubr.bf16.mxu0 0
        %2595 = vmatmul.mubr.bf16.gmra.mrb[0].mxu0 %v2467
        %v2596 = vpop.f32.mrb[0].mxu0
        %v2597 = vadd.f32 %v2473, %v2596
        %v2598 = vpop.f32.mrb[0].mxu0
        %v2599 = vpop.f32.mrb[0].mxu0
        %v2600 = vadd.f32 %v2473, %v2599
        %v2601 = vpop.f32.mrb[0].mxu0
        %2602 = vmatprep.mubr.bf16.mxu0 0
        %2603 = vmatmul.mubr.bf16.gmra.mrb[0].mxu0 %v2468
        %v2604 = vpop.f32.mrb[0].mxu0
        %v2605 = vadd.f32 %v2473, %v2604
        %v2606 = vpop.f32.mrb[0].mxu0
        %v2607 = vpop.f32.mrb[0].mxu0
        %v2608 = vadd.f32 %v2473, %v2607
        %v2609 = vpop.f32.mrb[0].mxu0
        %2610 = vmatprep.mubr.bf16.mxu0 0
        %2611 = vmatmul.mubr.bf16.gmra.mrb[0].mxu0 %v2469
        %v2612 = vpop.f32.mrb[0].mxu0
        %v2613 = vadd.f32 %v2473, %v2612
        %v2614 = vpop.f32.mrb[0].mxu0
        %v2615 = vpop.f32.mrb[0].mxu0
        %v2616 = vadd.f32 %v2473, %v2615
        %v2617 = vpop.f32.mrb[0].mxu0
        %2618 = vdwg.mxu0
        %v2619 = vmax.f32 %v2557, 0.0
        %v2620 = vmax.f32 %v2560, 0.0
        %v2621 = vmax.f32 %v2565, 0.0
        %v2622 = vmax.f32 %v2568, 0.0
        %v2623 = vmax.f32 %v2573, 0.0
        %v2624 = vmax.f32 %v2576, 0.0
        %v2625 = vmax.f32 %v2581, 0.0
        %v2626 = vmax.f32 %v2584, 0.0
        %v2627 = vmax.f32 %v2589, 0.0
        %v2628 = vmax.f32 %v2592, 0.0
        %v2629 = vmax.f32 %v2597, 0.0
        %v2630 = vmax.f32 %v2600, 0.0
        %v2631 = vmax.f32 %v2605, 0.0
        %v2632 = vmax.f32 %v2608, 0.0
        %v2633 = vmax.f32 %v2613, 0.0
        %v2634 = vmax.f32 %v2616, 0.0
        %v2635 = vld [vmem:[%s388 + $0x1b8] sm:$0xf]
        %v2636 = vld [vmem:[%s388 + $0x1bc] sm:$0xf]
        %v2637 = vld [vmem:[%s388 + $0x1c0] sm:$0xf]
        %v2638 = vld [vmem:[%s388 + $0x1c4] sm:$0xf]
        %v2639 = vld [vmem:[%s388 + $0x1c8] sm:$0xf]
        %v2640 = vld [vmem:[%s388 + $0x1cc] sm:$0xf]
        %v2641 = vld [vmem:[%s388 + $0x1d0] sm:$0xf]
        %v2642 = vld [vmem:[%s388 + $0x1d4] sm:$0xf]
        %v2643 = vld [vmem:[%s388 + $0x1d8] sm:$0xf]
        %v2644 = vld [vmem:[%s388 + $0x1dc] sm:$0xf]
        %v2645 = vld [vmem:[%s388 + $0x1e0] sm:$0xf]
        %v2646 = vld [vmem:[%s388 + $0x1e4] sm:$0xf]
        %v2647 = vld [vmem:[%s388 + $0x1e8] sm:$0xf]
        %v2648 = vld [vmem:[%s388 + $0x1ec] sm:$0xf]
        %v2649 = vld [vmem:[%s388 + $0x1f0] sm:$0xf]
        %v2650 = vld [vmem:[%s388 + $0x1f4] sm:$0xf]
        %v2651 = vld [vmem:[%s388 + $0x1f8] sm:$0x1]
        %v2652 = vunpack.c.l.bf16 %v2651
        %v2653 = vpack.c.bf16 %v2620, %v2619
        %v2654 = vpack.c.bf16 %v2622, %v2621
        %v2655 = vpack.c.bf16 %v2624, %v2623
        %v2656 = vpack.c.bf16 %v2626, %v2625
        %v2657 = vpack.c.bf16 %v2628, %v2627
        %v2658 = vpack.c.bf16 %v2630, %v2629
        %v2659 = vpack.c.bf16 %v2632, %v2631
        %v2660 = vpack.c.bf16 %v2634, %v2633
        %v2661 = vlaneseq
        %v2662 = vshrl.u32 %v2661, 7
        %v2663 = vsub.s32 0, %v2662
        %v2664 = vrot.slane %v2652, %v2663
        %v2681 = vunpack.c.l.b16 %v2635
        %v2682 = vunpack.c.l.b16 %v2636
        %v2683 = vunpack.c.l.b16 %v2637
        %v2684 = vunpack.c.l.b16 %v2638
        %v2685 = vunpack.c.l.b16 %v2639
        %v2686 = vunpack.c.l.b16 %v2640
        %v2687 = vunpack.c.l.b16 %v2641
        %v2688 = vunpack.c.l.b16 %v2642
        %v2689 = vunpack.c.l.b16 %v2643
        %v2690 = vunpack.c.l.b16 %v2644
        %v2691 = vunpack.c.l.b16 %v2645
        %v2692 = vunpack.c.l.b16 %v2646
        %v2693 = vunpack.c.l.b16 %v2647
        %v2694 = vunpack.c.l.b16 %v2648
        %v2695 = vunpack.c.l.b16 %v2649
        %v2696 = vunpack.c.l.b16 %v2650
        %v2697 = vpack.c.b16 %v2682, %v2681
        %v2698 = vpack.c.b16 %v2684, %v2683
        %v2699 = vpack.c.b16 %v2686, %v2685
        %v2700 = vpack.c.b16 %v2688, %v2687
        %v2701 = vpack.c.b16 %v2690, %v2689
        %v2702 = vpack.c.b16 %v2692, %v2691
        %v2703 = vpack.c.b16 %v2694, %v2693
        %v2704 = vpack.c.b16 %v2696, %v2695
        %2713 = vmatprep.subr.bf16.mxu0 0
        %2714 = vmatpush1.bf16.msra.mxu0 %v2697
        %2715 = vmatprep.subr.bf16.mxu0 0
        %2716 = vmatpush1.bf16.msra.mxu0 %v2698
        %2717 = vmatprep.subr.bf16.mxu0 0
        %2718 = vmatpush1.bf16.msra.mxu0 %v2699
        %2719 = vmatprep.subr.bf16.mxu0 0
        %2720 = vmatpush1.bf16.msra.mxu0 %v2700
        %2721 = vmatprep.subr.bf16.mxu0 0
        %2722 = vmatpush1.bf16.msra.mxu0 %v2701
        %2723 = vmatprep.subr.bf16.mxu0 0
        %2724 = vmatpush1.bf16.msra.mxu0 %v2702
        %2725 = vmatprep.subr.bf16.mxu0 0
        %2726 = vmatpush1.bf16.msra.mxu0 %v2703
        %2727 = vmatprep.subr.bf16.mxu0 0
        %2728 = vmatpush1.bf16.msra.mxu0 %v2704
        %2729 = vmatprep.subr.bf16.mxu0 0
        %2730 = vmatpush1.bf16.msra.mxu0 0
        %2731 = vmatprep.subr.bf16.mxu0 0
        %2732 = vmatpush1.bf16.msra.mxu0 0
        %2733 = vmatprep.subr.bf16.mxu0 0
        %2734 = vmatpush1.bf16.msra.mxu0 0
        %2735 = vmatprep.subr.bf16.mxu0 0
        %2736 = vmatpush1.bf16.msra.mxu0 0
        %2737 = vmatprep.subr.bf16.mxu0 0
        %2738 = vmatpush1.bf16.msra.mxu0 0
        %2739 = vmatprep.subr.bf16.mxu0 0
        %2740 = vmatpush1.bf16.msra.mxu0 0
        %2741 = vmatprep.subr.bf16.mxu0 0
        %2742 = vmatpush1.bf16.msra.mxu0 0
        %2743 = vmatprep.subr.bf16.mxu0 0
        %2744 = vmatpush1.bf16.msra.mxu0 0
        %2745 = vmatprep.mubr.bf16.mxu0 0
        %2746 = vmatmul.mubr.bf16.gmra.mrb[0].mxu0 %v2653
        %v2747 = vpop.f32.mrb[0].mxu0
        %v2748 = vadd.f32 %v2664, %v2747
        %v2749 = vpop.f32.mrb[0].mxu0
        %v2750 = vpop.f32.mrb[0].mxu0
        %v2751 = vadd.f32 %v2664, %v2750
        %v2752 = vpop.f32.mrb[0].mxu0
        %2753 = vmatprep.mubr.bf16.mxu0 0
        %2754 = vmatmul.mubr.bf16.gmra.mrb[0].mxu0 %v2654
        %v2755 = vpop.f32.mrb[0].mxu0
        %v2756 = vadd.f32 %v2664, %v2755
        %v2757 = vpop.f32.mrb[0].mxu0
        %v2758 = vpop.f32.mrb[0].mxu0
        %v2759 = vadd.f32 %v2664, %v2758
        %v2760 = vpop.f32.mrb[0].mxu0
        %2761 = vmatprep.mubr.bf16.mxu0 0
        %2762 = vmatmul.mubr.bf16.gmra.mrb[0].mxu0 %v2655
        %v2763 = vpop.f32.mrb[0].mxu0
        %v2764 = vadd.f32 %v2664, %v2763
        %v2765 = vpop.f32.mrb[0].mxu0
        %v2766 = vpop.f32.mrb[0].mxu0
        %v2767 = vadd.f32 %v2664, %v2766
        %v2768 = vpop.f32.mrb[0].mxu0
        %2769 = vmatprep.mubr.bf16.mxu0 0
        %2770 = vmatmul.mubr.bf16.gmra.mrb[0].mxu0 %v2656
        %v2771 = vpop.f32.mrb[0].mxu0
        %v2772 = vadd.f32 %v2664, %v2771
        %v2773 = vpop.f32.mrb[0].mxu0
        %v2774 = vpop.f32.mrb[0].mxu0
        %v2775 = vadd.f32 %v2664, %v2774
        %v2776 = vpop.f32.mrb[0].mxu0
        %2777 = vmatprep.mubr.bf16.mxu0 0
        %2778 = vmatmul.mubr.bf16.gmra.mrb[0].mxu0 %v2657
        %v2779 = vpop.f32.mrb[0].mxu0
        %v2780 = vadd.f32 %v2664, %v2779
        %v2781 = vpop.f32.mrb[0].mxu0
        %v2782 = vpop.f32.mrb[0].mxu0
        %v2783 = vadd.f32 %v2664, %v2782
        %v2784 = vpop.f32.mrb[0].mxu0
        %2785 = vmatprep.mubr.bf16.mxu0 0
        %2786 = vmatmul.mubr.bf16.gmra.mrb[0].mxu0 %v2658
        %v2787 = vpop.f32.mrb[0].mxu0
        %v2788 = vadd.f32 %v2664, %v2787
        %v2789 = vpop.f32.mrb[0].mxu0
        %v2790 = vpop.f32.mrb[0].mxu0
        %v2791 = vadd.f32 %v2664, %v2790
        %v2792 = vpop.f32.mrb[0].mxu0
        %2793 = vmatprep.mubr.bf16.mxu0 0
        %2794 = vmatmul.mubr.bf16.gmra.mrb[0].mxu0 %v2659
        %v2795 = vpop.f32.mrb[0].mxu0
        %v2796 = vadd.f32 %v2664, %v2795
        %v2797 = vpop.f32.mrb[0].mxu0
        %v2798 = vpop.f32.mrb[0].mxu0
        %v2799 = vadd.f32 %v2664, %v2798
        %v2800 = vpop.f32.mrb[0].mxu0
        %2801 = vmatprep.mubr.bf16.mxu0 0
        %2802 = vmatmul.mubr.bf16.gmra.mrb[0].mxu0 %v2660
        %v2803 = vpop.f32.mrb[0].mxu0
        %v2804 = vadd.f32 %v2664, %v2803
        %v2805 = vpop.f32.mrb[0].mxu0
        %v2806 = vpop.f32.mrb[0].mxu0
        %v2807 = vadd.f32 %v2664, %v2806
        %v2808 = vpop.f32.mrb[0].mxu0
        %2809 = vdwg.mxu0
        %v2810 = vld [vmem:[%s388 + $0x200] sm:$0x1]
        %v2811 = vunpack.c.l.bf16 %v2810
        %v2812 = vld [vmem:[%s388 + $0x208] sm:$0x1]
        %v2813 = vunpack.c.l.bf16 %v2812
        %2814 = vadd.xlane.f32.xlu0 %v2748
        %v2815 = vpop.xlane.xlu0 %2814
        %2816 = vadd.xlane.f32.xlu0 %v2751
        %v2817 = vpop.xlane.xlu0 %2816
        %2818 = vadd.xlane.f32.xlu0 %v2756
        %v2819 = vpop.xlane.xlu0 %2818
        %2820 = vadd.xlane.f32.xlu0 %v2759
        %v2821 = vpop.xlane.xlu0 %2820
        %2822 = vadd.xlane.f32.xlu0 %v2764
        %v2823 = vpop.xlane.xlu0 %2822
        %2824 = vadd.xlane.f32.xlu0 %v2767
        %v2825 = vpop.xlane.xlu0 %2824
        %2826 = vadd.xlane.f32.xlu0 %v2772
        %v2827 = vpop.xlane.xlu0 %2826
        %2828 = vadd.xlane.f32.xlu0 %v2775
        %v2829 = vpop.xlane.xlu0 %2828
        %2830 = vadd.xlane.f32.xlu0 %v2780
        %v2831 = vpop.xlane.xlu0 %2830
        %2832 = vadd.xlane.f32.xlu0 %v2783
        %v2833 = vpop.xlane.xlu0 %2832
        %2834 = vadd.xlane.f32.xlu0 %v2788
        %v2835 = vpop.xlane.xlu0 %2834
        %2836 = vadd.xlane.f32.xlu0 %v2791
        %v2837 = vpop.xlane.xlu0 %2836
        %2838 = vadd.xlane.f32.xlu0 %v2796
        %v2839 = vpop.xlane.xlu0 %2838
        %2840 = vadd.xlane.f32.xlu0 %v2799
        %v2841 = vpop.xlane.xlu0 %2840
        %2842 = vadd.xlane.f32.xlu0 %v2804
        %v2843 = vpop.xlane.xlu0 %2842
        %2844 = vadd.xlane.f32.xlu0 %v2807
        %v2845 = vpop.xlane.xlu0 %2844
        %v2846 = vmul.f32 %v2815, 0.03125
        %v2847 = vmul.f32 %v2817, 0.03125
        %v2848 = vmul.f32 %v2819, 0.03125
        %v2849 = vmul.f32 %v2821, 0.03125
        %v2850 = vmul.f32 %v2823, 0.03125
        %v2851 = vmul.f32 %v2825, 0.03125
        %v2852 = vmul.f32 %v2827, 0.03125
        %v2853 = vmul.f32 %v2829, 0.03125
        %v2854 = vmul.f32 %v2831, 0.03125
        %v2855 = vmul.f32 %v2833, 0.03125
        %v2856 = vmul.f32 %v2835, 0.03125
        %v2857 = vmul.f32 %v2837, 0.03125
        %v2858 = vmul.f32 %v2839, 0.03125
        %v2859 = vmul.f32 %v2841, 0.03125
        %v2860 = vmul.f32 %v2843, 0.03125
        %v2861 = vmul.f32 %v2845, 0.03125
        %v2862 = vsub.f32 %v2748, %v2846
        %v2863 = vsub.f32 %v2751, %v2847
        %v2864 = vsub.f32 %v2756, %v2848
        %v2865 = vsub.f32 %v2759, %v2849
        %v2866 = vsub.f32 %v2764, %v2850
        %v2867 = vsub.f32 %v2767, %v2851
        %v2868 = vsub.f32 %v2772, %v2852
        %v2869 = vsub.f32 %v2775, %v2853
        %v2870 = vsub.f32 %v2780, %v2854
        %v2871 = vsub.f32 %v2783, %v2855
        %v2872 = vsub.f32 %v2788, %v2856
        %v2873 = vsub.f32 %v2791, %v2857
        %v2874 = vsub.f32 %v2796, %v2858
        %v2875 = vsub.f32 %v2799, %v2859
        %v2876 = vsub.f32 %v2804, %v2860
        %v2877 = vsub.f32 %v2807, %v2861
        %v2878 = vmul.f32 %v2862, %v1690
        %v2879 = vmul.f32 %v2863, %v1690
        %v2880 = vmul.f32 %v2864, %v1690
        %v2881 = vmul.f32 %v2865, %v1690
        %v2882 = vmul.f32 %v2866, %v1690
        %v2883 = vmul.f32 %v2867, %v1690
        %v2884 = vmul.f32 %v2868, %v1690
        %v2885 = vmul.f32 %v2869, %v1690
        %v2886 = vmul.f32 %v2870, %v1690
        %v2887 = vmul.f32 %v2871, %v1690
        %v2888 = vmul.f32 %v2872, %v1690
        %v2889 = vmul.f32 %v2873, %v1690
        %v2890 = vmul.f32 %v2874, %v1690
        %v2891 = vmul.f32 %v2875, %v1690
        %v2892 = vmul.f32 %v2876, %v1690
        %v2893 = vmul.f32 %v2877, %v1690
        %v2894 = vmul.f32 %v2878, %v2878
        %v2895 = vmul.f32 %v2879, %v2879
        %v2896 = vmul.f32 %v2880, %v2880
        %v2897 = vmul.f32 %v2881, %v2881
        %v2898 = vmul.f32 %v2882, %v2882
        %v2899 = vmul.f32 %v2883, %v2883
        %v2900 = vmul.f32 %v2884, %v2884
        %v2901 = vmul.f32 %v2885, %v2885
        %v2902 = vmul.f32 %v2886, %v2886
        %v2903 = vmul.f32 %v2887, %v2887
        %v2904 = vmul.f32 %v2888, %v2888
        %v2905 = vmul.f32 %v2889, %v2889
        %v2906 = vmul.f32 %v2890, %v2890
        %v2907 = vmul.f32 %v2891, %v2891
        %v2908 = vmul.f32 %v2892, %v2892
        %v2909 = vmul.f32 %v2893, %v2893
        %2910 = vadd.xlane.f32.xlu0 %v2894
        %v2911 = vpop.xlane.xlu0 %2910
        %2912 = vadd.xlane.f32.xlu0 %v2895
        %v2913 = vpop.xlane.xlu0 %2912
        %2914 = vadd.xlane.f32.xlu0 %v2896
        %v2915 = vpop.xlane.xlu0 %2914
        %2916 = vadd.xlane.f32.xlu0 %v2897
        %v2917 = vpop.xlane.xlu0 %2916
        %2918 = vadd.xlane.f32.xlu0 %v2898
        %v2919 = vpop.xlane.xlu0 %2918
        %2920 = vadd.xlane.f32.xlu0 %v2899
        %v2921 = vpop.xlane.xlu0 %2920
        %2922 = vadd.xlane.f32.xlu0 %v2900
        %v2923 = vpop.xlane.xlu0 %2922
        %2924 = vadd.xlane.f32.xlu0 %v2901
        %v2925 = vpop.xlane.xlu0 %2924
        %2926 = vadd.xlane.f32.xlu0 %v2902
        %v2927 = vpop.xlane.xlu0 %2926
        %2928 = vadd.xlane.f32.xlu0 %v2903
        %v2929 = vpop.xlane.xlu0 %2928
        %2930 = vadd.xlane.f32.xlu0 %v2904
        %v2931 = vpop.xlane.xlu0 %2930
        %2932 = vadd.xlane.f32.xlu0 %v2905
        %v2933 = vpop.xlane.xlu0 %2932
        %2934 = vadd.xlane.f32.xlu0 %v2906
        %v2935 = vpop.xlane.xlu0 %2934
        %2936 = vadd.xlane.f32.xlu0 %v2907
        %v2937 = vpop.xlane.xlu0 %2936
        %2938 = vadd.xlane.f32.xlu0 %v2908
        %v2939 = vpop.xlane.xlu0 %2938
        %2940 = vadd.xlane.f32.xlu0 %v2909
        %v2941 = vpop.xlane.xlu0 %2940
        %v2942 = vmul.f32 %v2911, 0.03125
        %v2943 = vmul.f32 %v2913, 0.03125
        %v2944 = vmul.f32 %v2915, 0.03125
        %v2945 = vmul.f32 %v2917, 0.03125
        %v2946 = vmul.f32 %v2919, 0.03125
        %v2947 = vmul.f32 %v2921, 0.03125
        %v2948 = vmul.f32 %v2923, 0.03125
        %v2949 = vmul.f32 %v2925, 0.03125
        %v2950 = vmul.f32 %v2927, 0.03125
        %v2951 = vmul.f32 %v2929, 0.03125
        %v2952 = vmul.f32 %v2931, 0.03125
        %v2953 = vmul.f32 %v2933, 0.03125
        %v2954 = vmul.f32 %v2935, 0.03125
        %v2955 = vmul.f32 %v2937, 0.03125
        %v2956 = vmul.f32 %v2939, 0.03125
        %v2957 = vmul.f32 %v2941, 0.03125
        %v2958 = vadd.f32 %v2942, 1e-05
        %v2959 = vadd.f32 %v2943, 1e-05
        %v2960 = vadd.f32 %v2944, 1e-05
        %v2961 = vadd.f32 %v2945, 1e-05
        %v2962 = vadd.f32 %v2946, 1e-05
        %v2963 = vadd.f32 %v2947, 1e-05
        %v2964 = vadd.f32 %v2948, 1e-05
        %v2965 = vadd.f32 %v2949, 1e-05
        %v2966 = vadd.f32 %v2950, 1e-05
        %v2967 = vadd.f32 %v2951, 1e-05
        %v2968 = vadd.f32 %v2952, 1e-05
        %v2969 = vadd.f32 %v2953, 1e-05
        %v2970 = vadd.f32 %v2954, 1e-05
        %v2971 = vadd.f32 %v2955, 1e-05
        %v2972 = vadd.f32 %v2956, 1e-05
        %v2973 = vadd.f32 %v2957, 1e-05
        %v2974 = vrsqrt.pop %v2958
        %v2975 = vrsqrt.pop %v2959
        %v2976 = vrsqrt.pop %v2960
        %v2977 = vrsqrt.pop %v2961
        %v2978 = vrsqrt.pop %v2962
        %v2979 = vrsqrt.pop %v2963
        %v2980 = vrsqrt.pop %v2964
        %v2981 = vrsqrt.pop %v2965
        %v2982 = vrsqrt.pop %v2966
        %v2983 = vrsqrt.pop %v2967
        %v2984 = vrsqrt.pop %v2968
        %v2985 = vrsqrt.pop %v2969
        %v2986 = vrsqrt.pop %v2970
        %v2987 = vrsqrt.pop %v2971
        %v2988 = vrsqrt.pop %v2972
        %v2989 = vrsqrt.pop %v2973
        %v2990 = vmul.f32 %v2878, %v2974
        %v2991 = vmul.f32 %v2879, %v2975
        %v2992 = vmul.f32 %v2880, %v2976
        %v2993 = vmul.f32 %v2881, %v2977
        %v2994 = vmul.f32 %v2882, %v2978
        %v2995 = vmul.f32 %v2883, %v2979
        %v2996 = vmul.f32 %v2884, %v2980
        %v2997 = vmul.f32 %v2885, %v2981
        %v2998 = vmul.f32 %v2886, %v2982
        %v2999 = vmul.f32 %v2887, %v2983
        %v3000 = vmul.f32 %v2888, %v2984
        %v3001 = vmul.f32 %v2889, %v2985
        %v3002 = vmul.f32 %v2890, %v2986
        %v3003 = vmul.f32 %v2891, %v2987
        %v3004 = vmul.f32 %v2892, %v2988
        %v3005 = vmul.f32 %v2893, %v2989
        %v3006 = vlaneseq
        %v3007 = vshrl.u32 %v3006, 7
        %v3008 = vsub.s32 0, %v3007
        %v3009 = vrot.slane %v2811, %v3008
        %v3010 = vmul.f32 %v2990, %v3009
        %v3011 = vmul.f32 %v2991, %v3009
        %v3012 = vmul.f32 %v2992, %v3009
        %v3013 = vmul.f32 %v2993, %v3009
        %v3014 = vmul.f32 %v2994, %v3009
        %v3015 = vmul.f32 %v2995, %v3009
        %v3016 = vmul.f32 %v2996, %v3009
        %v3017 = vmul.f32 %v2997, %v3009
        %v3018 = vmul.f32 %v2998, %v3009
        %v3019 = vmul.f32 %v2999, %v3009
        %v3020 = vmul.f32 %v3000, %v3009
        %v3021 = vmul.f32 %v3001, %v3009
        %v3022 = vmul.f32 %v3002, %v3009
        %v3023 = vmul.f32 %v3003, %v3009
        %v3024 = vmul.f32 %v3004, %v3009
        %v3025 = vmul.f32 %v3005, %v3009
        %v3026 = vlaneseq
        %v3027 = vshrl.u32 %v3026, 7
        %v3028 = vsub.s32 0, %v3027
        %v3029 = vrot.slane %v2813, %v3028
        %v3030 = vadd.f32 %v3010, %v3029
        %v3031 = vadd.f32 %v3011, %v3029
        %v3032 = vadd.f32 %v3012, %v3029
        %v3033 = vadd.f32 %v3013, %v3029
        %v3034 = vadd.f32 %v3014, %v3029
        %v3035 = vadd.f32 %v3015, %v3029
        %v3036 = vadd.f32 %v3016, %v3029
        %v3037 = vadd.f32 %v3017, %v3029
        %v3038 = vadd.f32 %v3018, %v3029
        %v3039 = vadd.f32 %v3019, %v3029
        %v3040 = vadd.f32 %v3020, %v3029
        %v3041 = vadd.f32 %v3021, %v3029
        %v3042 = vadd.f32 %v3022, %v3029
        %v3043 = vadd.f32 %v3023, %v3029
        %v3044 = vadd.f32 %v3024, %v3029
        %v3045 = vadd.f32 %v3025, %v3029
        %v3046 = vpack.c.bf16 %v3031, %v3030
        %v3047 = vpack.c.bf16 %v3033, %v3032
        %v3048 = vpack.c.bf16 %v3035, %v3034
        %v3049 = vpack.c.bf16 %v3037, %v3036
        %v3050 = vpack.c.bf16 %v3039, %v3038
        %v3051 = vpack.c.bf16 %v3041, %v3040
        %v3052 = vpack.c.bf16 %v3043, %v3042
        %v3053 = vpack.c.bf16 %v3045, %v3044
        %v3054 = vld [vmem:[%s379 + $0x80] sm:$0xff]
        %v3055 = vld [vmem:[%s379 + $0x88] sm:$0xff]
        %v3056 = vld [vmem:[%s379 + $0x90] sm:$0xff]
        %v3057 = vld [vmem:[%s379 + $0x98] sm:$0xff]
        %v3058 = vld [vmem:[%s379 + $0xa0] sm:$0xff]
        %v3059 = vld [vmem:[%s379 + $0xa8] sm:$0xff]
        %v3060 = vld [vmem:[%s379 + $0xb0] sm:$0xff]
        %v3061 = vld [vmem:[%s379 + $0xb8] sm:$0xff]
        %v3062 = vld [vmem:[%s379 + $0xc0] sm:$0xff]
        %v3063 = vld [vmem:[%s379 + $0xc8] sm:$0xff]
        %v3064 = vld [vmem:[%s379 + $0xd0] sm:$0xff]
        %v3065 = vld [vmem:[%s379 + $0xd8] sm:$0xff]
        %v3066 = vld [vmem:[%s379 + $0xe0] sm:$0xff]
        %v3067 = vld [vmem:[%s379 + $0xe8] sm:$0xff]
        %v3068 = vld [vmem:[%s379 + $0xf0] sm:$0xff]
        %v3069 = vld [vmem:[%s379 + $0xf8] sm:$0xff]
        %v3086 = vunpack.c.l.b16 %v3054
        %v3087 = vunpack.c.h.b16 %v3054
        %v3088 = vunpack.c.l.b16 %v3055
        %v3089 = vunpack.c.h.b16 %v3055
        %v3090 = vunpack.c.l.b16 %v3056
        %v3091 = vunpack.c.h.b16 %v3056
        %v3092 = vunpack.c.l.b16 %v3057
        %v3093 = vunpack.c.h.b16 %v3057
        %v3094 = vunpack.c.l.b16 %v3058
        %v3095 = vunpack.c.h.b16 %v3058
        %v3096 = vunpack.c.l.b16 %v3059
        %v3097 = vunpack.c.h.b16 %v3059
        %v3098 = vunpack.c.l.b16 %v3060
        %v3099 = vunpack.c.h.b16 %v3060
        %v3100 = vunpack.c.l.b16 %v3061
        %v3101 = vunpack.c.h.b16 %v3061
        %v3102 = vunpack.c.l.b16 %v3062
        %v3103 = vunpack.c.h.b16 %v3062
        %v3104 = vunpack.c.l.b16 %v3063
        %v3105 = vunpack.c.h.b16 %v3063
        %v3106 = vunpack.c.l.b16 %v3064
        %v3107 = vunpack.c.h.b16 %v3064
        %v3108 = vunpack.c.l.b16 %v3065
        %v3109 = vunpack.c.h.b16 %v3065
        %v3110 = vunpack.c.l.b16 %v3066
        %v3111 = vunpack.c.h.b16 %v3066
        %v3112 = vunpack.c.l.b16 %v3067
        %v3113 = vunpack.c.h.b16 %v3067
        %v3114 = vunpack.c.l.b16 %v3068
        %v3115 = vunpack.c.h.b16 %v3068
        %v3116 = vunpack.c.l.b16 %v3069
        %v3117 = vunpack.c.h.b16 %v3069
        %v3118 = vpack.c.b16 %v3088, %v3086
        %v3119 = vpack.c.b16 %v3089, %v3087
        %v3120 = vpack.c.b16 %v3092, %v3090
        %v3121 = vpack.c.b16 %v3093, %v3091
        %v3122 = vpack.c.b16 %v3096, %v3094
        %v3123 = vpack.c.b16 %v3097, %v3095
        %v3124 = vpack.c.b16 %v3100, %v3098
        %v3125 = vpack.c.b16 %v3101, %v3099
        %v3126 = vpack.c.b16 %v3104, %v3102
        %v3127 = vpack.c.b16 %v3105, %v3103
        %v3128 = vpack.c.b16 %v3108, %v3106
        %v3129 = vpack.c.b16 %v3109, %v3107
        %v3130 = vpack.c.b16 %v3112, %v3110
        %v3131 = vpack.c.b16 %v3113, %v3111
        %v3132 = vpack.c.b16 %v3116, %v3114
        %v3133 = vpack.c.b16 %v3117, %v3115
        %3150 = vmatprep.subr.bf16.mxu0 %v3119
        %3151 = vmatpush1.bf16.msra.mxu0 %v3118
        %3152 = vmatprep.subr.bf16.mxu0 %v3121
        %3153 = vmatpush1.bf16.msra.mxu0 %v3120
        %3154 = vmatprep.subr.bf16.mxu0 %v3123
        %3155 = vmatpush1.bf16.msra.mxu0 %v3122
        %3156 = vmatprep.subr.bf16.mxu0 %v3125
        %3157 = vmatpush1.bf16.msra.mxu0 %v3124
        %3158 = vmatprep.subr.bf16.mxu0 %v3127
        %3159 = vmatpush1.bf16.msra.mxu0 %v3126
        %3160 = vmatprep.subr.bf16.mxu0 %v3129
        %3161 = vmatpush1.bf16.msra.mxu0 %v3128
        %3162 = vmatprep.subr.bf16.mxu0 %v3131
        %3163 = vmatpush1.bf16.msra.mxu0 %v3130
        %3164 = vmatprep.subr.bf16.mxu0 %v3133
        %3165 = vmatpush1.bf16.msra.mxu0 %v3132
        %3166 = vmatprep.subr.bf16.mxu0 0
        %3167 = vmatpush1.bf16.msra.mxu0 0
        %3168 = vmatprep.subr.bf16.mxu0 0
        %3169 = vmatpush1.bf16.msra.mxu0 0
        %3170 = vmatprep.subr.bf16.mxu0 0
        %3171 = vmatpush1.bf16.msra.mxu0 0
        %3172 = vmatprep.subr.bf16.mxu0 0
        %3173 = vmatpush1.bf16.msra.mxu0 0
        %3174 = vmatprep.subr.bf16.mxu0 0
        %3175 = vmatpush1.bf16.msra.mxu0 0
        %3176 = vmatprep.subr.bf16.mxu0 0
        %3177 = vmatpush1.bf16.msra.mxu0 0
        %3178 = vmatprep.subr.bf16.mxu0 0
        %3179 = vmatpush1.bf16.msra.mxu0 0
        %3180 = vmatprep.subr.bf16.mxu0 0
        %3181 = vmatpush1.bf16.msra.mxu0 0
        %3182 = vmatprep.mubr.bf16.mxu0 0
        %3183 = vmatmul.mubr.bf16.gmra.mrb[0].mxu0 %v3046
        %v3184 = vpop.f32.mrb[0].mxu0
        %v3185 = vadd.f32 0.0, %v3184
        %v3186 = vpop.f32.mrb[0].mxu0
        %v3187 = vadd.f32 0.0, %v3186
        %v3188 = vpop.f32.mrb[0].mxu0
        %v3189 = vadd.f32 0.0, %v3188
        %v3190 = vpop.f32.mrb[0].mxu0
        %v3191 = vadd.f32 0.0, %v3190
        %3192 = vmatprep.mubr.bf16.mxu0 0
        %3193 = vmatmul.mubr.bf16.gmra.mrb[0].mxu0 %v3047
        %v3194 = vpop.f32.mrb[0].mxu0
        %v3195 = vadd.f32 0.0, %v3194
        %v3196 = vpop.f32.mrb[0].mxu0
        %v3197 = vadd.f32 0.0, %v3196
        %v3198 = vpop.f32.mrb[0].mxu0
        %v3199 = vadd.f32 0.0, %v3198
        %v3200 = vpop.f32.mrb[0].mxu0
        %v3201 = vadd.f32 0.0, %v3200
        %3202 = vmatprep.mubr.bf16.mxu0 0
        %3203 = vmatmul.mubr.bf16.gmra.mrb[0].mxu0 %v3048
        %v3204 = vpop.f32.mrb[0].mxu0
        %v3205 = vadd.f32 0.0, %v3204
        %v3206 = vpop.f32.mrb[0].mxu0
        %v3207 = vadd.f32 0.0, %v3206
        %v3208 = vpop.f32.mrb[0].mxu0
        %v3209 = vadd.f32 0.0, %v3208
        %v3210 = vpop.f32.mrb[0].mxu0
        %v3211 = vadd.f32 0.0, %v3210
        %3212 = vmatprep.mubr.bf16.mxu0 0
        %3213 = vmatmul.mubr.bf16.gmra.mrb[0].mxu0 %v3049
        %v3214 = vpop.f32.mrb[0].mxu0
        %v3215 = vadd.f32 0.0, %v3214
        %v3216 = vpop.f32.mrb[0].mxu0
        %v3217 = vadd.f32 0.0, %v3216
        %v3218 = vpop.f32.mrb[0].mxu0
        %v3219 = vadd.f32 0.0, %v3218
        %v3220 = vpop.f32.mrb[0].mxu0
        %v3221 = vadd.f32 0.0, %v3220
        %3222 = vmatprep.mubr.bf16.mxu0 0
        %3223 = vmatmul.mubr.bf16.gmra.mrb[0].mxu0 %v3050
        %v3224 = vpop.f32.mrb[0].mxu0
        %v3225 = vadd.f32 0.0, %v3224
        %v3226 = vpop.f32.mrb[0].mxu0
        %v3227 = vadd.f32 0.0, %v3226
        %v3228 = vpop.f32.mrb[0].mxu0
        %v3229 = vadd.f32 0.0, %v3228
        %v3230 = vpop.f32.mrb[0].mxu0
        %v3231 = vadd.f32 0.0, %v3230
        %3232 = vmatprep.mubr.bf16.mxu0 0
        %3233 = vmatmul.mubr.bf16.gmra.mrb[0].mxu0 %v3051
        %v3234 = vpop.f32.mrb[0].mxu0
        %v3235 = vadd.f32 0.0, %v3234
        %v3236 = vpop.f32.mrb[0].mxu0
        %v3237 = vadd.f32 0.0, %v3236
        %v3238 = vpop.f32.mrb[0].mxu0
        %v3239 = vadd.f32 0.0, %v3238
        %v3240 = vpop.f32.mrb[0].mxu0
        %v3241 = vadd.f32 0.0, %v3240
        %3242 = vmatprep.mubr.bf16.mxu0 0
        %3243 = vmatmul.mubr.bf16.gmra.mrb[0].mxu0 %v3052
        %v3244 = vpop.f32.mrb[0].mxu0
        %v3245 = vadd.f32 0.0, %v3244
        %v3246 = vpop.f32.mrb[0].mxu0
        %v3247 = vadd.f32 0.0, %v3246
        %v3248 = vpop.f32.mrb[0].mxu0
        %v3249 = vadd.f32 0.0, %v3248
        %v3250 = vpop.f32.mrb[0].mxu0
        %v3251 = vadd.f32 0.0, %v3250
        %3252 = vmatprep.mubr.bf16.mxu0 0
        %3253 = vmatmul.mubr.bf16.gmra.mrb[0].mxu0 %v3053
        %v3254 = vpop.f32.mrb[0].mxu0
        %v3255 = vadd.f32 0.0, %v3254
        %v3256 = vpop.f32.mrb[0].mxu0
        %v3257 = vadd.f32 0.0, %v3256
        %v3258 = vpop.f32.mrb[0].mxu0
        %v3259 = vadd.f32 0.0, %v3258
        %v3260 = vpop.f32.mrb[0].mxu0
        %v3261 = vadd.f32 0.0, %v3260
        %3262 = vdwg.mxu0
        %v3263 = vpack.c.bf16 %v3189, %v3185
        %v3264 = vpack.c.bf16 %v3199, %v3195
        %v3265 = vpack.c.bf16 %v3209, %v3205
        %v3266 = vpack.c.bf16 %v3219, %v3215
        %v3267 = vpack.c.bf16 %v3229, %v3225
        %v3268 = vpack.c.bf16 %v3239, %v3235
        %v3269 = vpack.c.bf16 %v3249, %v3245
        %v3270 = vpack.c.bf16 %v3259, %v3255
        %v3271 = vpack.c.bf16 %v3191, %v3187
        %v3272 = vpack.c.bf16 %v3201, %v3197
        %v3273 = vpack.c.bf16 %v3211, %v3207
        %v3274 = vpack.c.bf16 %v3221, %v3217
        %v3275 = vpack.c.bf16 %v3231, %v3227
        %v3276 = vpack.c.bf16 %v3241, %v3237
        %v3277 = vpack.c.bf16 %v3251, %v3247
        %v3278 = vpack.c.bf16 %v3261, %v3257
        %3279 = vmatprep.subr.bf16.mxu0 0
        %3280 = vmatpush1.bf16.msra.mxu0 %v3271
        %3281 = vmatprep.subr.bf16.mxu0 0
        %3282 = vmatpush1.bf16.msra.mxu0 %v3272
        %3283 = vmatprep.subr.bf16.mxu0 0
        %3284 = vmatpush1.bf16.msra.mxu0 %v3273
        %3285 = vmatprep.subr.bf16.mxu0 0
        %3286 = vmatpush1.bf16.msra.mxu0 %v3274
        %3287 = vmatprep.subr.bf16.mxu0 0
        %3288 = vmatpush1.bf16.msra.mxu0 %v3275
        %3289 = vmatprep.subr.bf16.mxu0 0
        %3290 = vmatpush1.bf16.msra.mxu0 %v3276
        %3291 = vmatprep.subr.bf16.mxu0 0
        %3292 = vmatpush1.bf16.msra.mxu0 %v3277
        %3293 = vmatprep.subr.bf16.mxu0 0
        %3294 = vmatpush1.bf16.msra.mxu0 %v3278
        %3295 = vmatprep.subr.bf16.mxu0 0
        %3296 = vmatpush1.bf16.msra.mxu0 0
        %3297 = vmatprep.subr.bf16.mxu0 0
        %3298 = vmatpush1.bf16.msra.mxu0 0
        %3299 = vmatprep.subr.bf16.mxu0 0
        %3300 = vmatpush1.bf16.msra.mxu0 0
        %3301 = vmatprep.subr.bf16.mxu0 0
        %3302 = vmatpush1.bf16.msra.mxu0 0
        %3303 = vmatprep.subr.bf16.mxu0 0
        %3304 = vmatpush1.bf16.msra.mxu0 0
        %3305 = vmatprep.subr.bf16.mxu0 0
        %3306 = vmatpush1.bf16.msra.mxu0 0
        %3307 = vmatprep.subr.bf16.mxu0 0
        %3308 = vmatpush1.bf16.msra.mxu0 0
        %3309 = vmatprep.subr.bf16.mxu0 0
        %3310 = vmatpush1.bf16.msra.mxu0 0
        %3311 = vmatprep.mubr.bf16.mxu0 0
        %3312 = vmatmul.mubr.bf16.gmra.mrb[0].mxu0 %v988
        %v3313 = vpop.f32.mrb[0].mxu0
        %v3314 = vadd.f32 0.0, %v3313
        %v3315 = vpop.f32.mrb[0].mxu0
        %v3316 = vpop.f32.mrb[0].mxu0
        %v3317 = vadd.f32 0.0, %v3316
        %v3318 = vpop.f32.mrb[0].mxu0
        %3319 = vmatprep.mubr.bf16.mxu0 0
        %3320 = vmatmul.mubr.bf16.gmra.mrb[0].mxu0 %v989
        %v3321 = vpop.f32.mrb[0].mxu0
        %v3322 = vadd.f32 0.0, %v3321
        %v3323 = vpop.f32.mrb[0].mxu0
        %v3324 = vpop.f32.mrb[0].mxu0
        %v3325 = vadd.f32 0.0, %v3324
        %v3326 = vpop.f32.mrb[0].mxu0
        %3327 = vmatprep.mubr.bf16.mxu0 0
        %3328 = vmatmul.mubr.bf16.gmra.mrb[0].mxu0 %v990
        %v3329 = vpop.f32.mrb[0].mxu0
        %v3330 = vadd.f32 0.0, %v3329
        %v3331 = vpop.f32.mrb[0].mxu0
        %v3332 = vpop.f32.mrb[0].mxu0
        %v3333 = vadd.f32 0.0, %v3332
        %v3334 = vpop.f32.mrb[0].mxu0
        %3335 = vmatprep.mubr.bf16.mxu0 0
        %3336 = vmatmul.mubr.bf16.gmra.mrb[0].mxu0 %v991
        %v3337 = vpop.f32.mrb[0].mxu0
        %v3338 = vadd.f32 0.0, %v3337
        %v3339 = vpop.f32.mrb[0].mxu0
        %v3340 = vpop.f32.mrb[0].mxu0
        %v3341 = vadd.f32 0.0, %v3340
        %v3342 = vpop.f32.mrb[0].mxu0
        %3343 = vmatprep.mubr.bf16.mxu0 0
        %3344 = vmatmul.mubr.bf16.gmra.mrb[0].mxu0 %v992
        %v3345 = vpop.f32.mrb[0].mxu0
        %v3346 = vadd.f32 0.0, %v3345
        %v3347 = vpop.f32.mrb[0].mxu0
        %v3348 = vpop.f32.mrb[0].mxu0
        %v3349 = vadd.f32 0.0, %v3348
        %v3350 = vpop.f32.mrb[0].mxu0
        %3351 = vmatprep.mubr.bf16.mxu0 0
        %3352 = vmatmul.mubr.bf16.gmra.mrb[0].mxu0 %v993
        %v3353 = vpop.f32.mrb[0].mxu0
        %v3354 = vadd.f32 0.0, %v3353
        %v3355 = vpop.f32.mrb[0].mxu0
        %v3356 = vpop.f32.mrb[0].mxu0
        %v3357 = vadd.f32 0.0, %v3356
        %v3358 = vpop.f32.mrb[0].mxu0
        %3359 = vmatprep.mubr.bf16.mxu0 0
        %3360 = vmatmul.mubr.bf16.gmra.mrb[0].mxu0 %v994
        %v3361 = vpop.f32.mrb[0].mxu0
        %v3362 = vadd.f32 0.0, %v3361
        %v3363 = vpop.f32.mrb[0].mxu0
        %v3364 = vpop.f32.mrb[0].mxu0
        %v3365 = vadd.f32 0.0, %v3364
        %v3366 = vpop.f32.mrb[0].mxu0
        %3367 = vmatprep.mubr.bf16.mxu0 0
        %3368 = vmatmul.mubr.bf16.gmra.mrb[0].mxu0 %v995
        %v3369 = vpop.f32.mrb[0].mxu0
        %v3370 = vadd.f32 0.0, %v3369
        %v3371 = vpop.f32.mrb[0].mxu0
        %v3372 = vpop.f32.mrb[0].mxu0
        %v3373 = vadd.f32 0.0, %v3372
        %v3374 = vpop.f32.mrb[0].mxu0
        %3375 = vdwg.mxu0
        %3376 = vmatprep.subr.bf16.mxu0 0
        %3377 = vmatpush1.bf16.msra.mxu0 %v3263
        %3378 = vmatprep.subr.bf16.mxu0 0
        %3379 = vmatpush1.bf16.msra.mxu0 %v3264
        %3380 = vmatprep.subr.bf16.mxu0 0
        %3381 = vmatpush1.bf16.msra.mxu0 %v3265
        %3382 = vmatprep.subr.bf16.mxu0 0
        %3383 = vmatpush1.bf16.msra.mxu0 %v3266
        %3384 = vmatprep.subr.bf16.mxu0 0
        %3385 = vmatpush1.bf16.msra.mxu0 %v3267
        %3386 = vmatprep.subr.bf16.mxu0 0
        %3387 = vmatpush1.bf16.msra.mxu0 %v3268
        %3388 = vmatprep.subr.bf16.mxu0 0
        %3389 = vmatpush1.bf16.msra.mxu0 %v3269
        %3390 = vmatprep.subr.bf16.mxu0 0
        %3391 = vmatpush1.bf16.msra.mxu0 %v3270
        %3392 = vmatprep.subr.bf16.mxu0 0
        %3393 = vmatpush1.bf16.msra.mxu0 0
        %3394 = vmatprep.subr.bf16.mxu0 0
        %3395 = vmatpush1.bf16.msra.mxu0 0
        %3396 = vmatprep.subr.bf16.mxu0 0
        %3397 = vmatpush1.bf16.msra.mxu0 0
        %3398 = vmatprep.subr.bf16.mxu0 0
        %3399 = vmatpush1.bf16.msra.mxu0 0
        %3400 = vmatprep.subr.bf16.mxu0 0
        %3401 = vmatpush1.bf16.msra.mxu0 0
        %3402 = vmatprep.subr.bf16.mxu0 0
        %3403 = vmatpush1.bf16.msra.mxu0 0
        %3404 = vmatprep.subr.bf16.mxu0 0
        %3405 = vmatpush1.bf16.msra.mxu0 0
        %3406 = vmatprep.subr.bf16.mxu0 0
        %3407 = vmatpush1.bf16.msra.mxu0 0
        %3408 = vmatprep.mubr.bf16.mxu0 0
        %3409 = vmatmul.mubr.bf16.gmra.mrb[0].mxu0 %v843
        %v3410 = vpop.f32.mrb[0].mxu0
        %v3411 = vadd.f32 %v3314, %v3410
        %v3412 = vpop.f32.mrb[0].mxu0
        %v3413 = vpop.f32.mrb[0].mxu0
        %v3414 = vadd.f32 %v3317, %v3413
        %v3415 = vpop.f32.mrb[0].mxu0
        %3416 = vmatprep.mubr.bf16.mxu0 0
        %3417 = vmatmul.mubr.bf16.gmra.mrb[0].mxu0 %v844
        %v3418 = vpop.f32.mrb[0].mxu0
        %v3419 = vadd.f32 %v3322, %v3418
        %v3420 = vpop.f32.mrb[0].mxu0
        %v3421 = vpop.f32.mrb[0].mxu0
        %v3422 = vadd.f32 %v3325, %v3421
        %v3423 = vpop.f32.mrb[0].mxu0
        %3424 = vmatprep.mubr.bf16.mxu0 0
        %3425 = vmatmul.mubr.bf16.gmra.mrb[0].mxu0 %v845
        %v3426 = vpop.f32.mrb[0].mxu0
        %v3427 = vadd.f32 %v3330, %v3426
        %v3428 = vpop.f32.mrb[0].mxu0
        %v3429 = vpop.f32.mrb[0].mxu0
        %v3430 = vadd.f32 %v3333, %v3429
        %v3431 = vpop.f32.mrb[0].mxu0
        %3432 = vmatprep.mubr.bf16.mxu0 0
        %3433 = vmatmul.mubr.bf16.gmra.mrb[0].mxu0 %v846
        %v3434 = vpop.f32.mrb[0].mxu0
        %v3435 = vadd.f32 %v3338, %v3434
        %v3436 = vpop.f32.mrb[0].mxu0
        %v3437 = vpop.f32.mrb[0].mxu0
        %v3438 = vadd.f32 %v3341, %v3437
        %v3439 = vpop.f32.mrb[0].mxu0
        %3440 = vmatprep.mubr.bf16.mxu0 0
        %3441 = vmatmul.mubr.bf16.gmra.mrb[0].mxu0 %v847
        %v3442 = vpop.f32.mrb[0].mxu0
        %v3443 = vadd.f32 %v3346, %v3442
        %v3444 = vpop.f32.mrb[0].mxu0
        %v3445 = vpop.f32.mrb[0].mxu0
        %v3446 = vadd.f32 %v3349, %v3445
        %v3447 = vpop.f32.mrb[0].mxu0
        %3448 = vmatprep.mubr.bf16.mxu0 0
        %3449 = vmatmul.mubr.bf16.gmra.mrb[0].mxu0 %v848
        %v3450 = vpop.f32.mrb[0].mxu0
        %v3451 = vadd.f32 %v3354, %v3450
        %v3452 = vpop.f32.mrb[0].mxu0
        %v3453 = vpop.f32.mrb[0].mxu0
        %v3454 = vadd.f32 %v3357, %v3453
        %v3455 = vpop.f32.mrb[0].mxu0
        %3456 = vmatprep.mubr.bf16.mxu0 0
        %3457 = vmatmul.mubr.bf16.gmra.mrb[0].mxu0 %v849
        %v3458 = vpop.f32.mrb[0].mxu0
        %v3459 = vadd.f32 %v3362, %v3458
        %v3460 = vpop.f32.mrb[0].mxu0
        %v3461 = vpop.f32.mrb[0].mxu0
        %v3462 = vadd.f32 %v3365, %v3461
        %v3463 = vpop.f32.mrb[0].mxu0
        %3464 = vmatprep.mubr.bf16.mxu0 0
        %3465 = vmatmul.mubr.bf16.gmra.mrb[0].mxu0 %v850
        %v3466 = vpop.f32.mrb[0].mxu0
        %v3467 = vadd.f32 %v3370, %v3466
        %v3468 = vpop.f32.mrb[0].mxu0
        %v3469 = vpop.f32.mrb[0].mxu0
        %v3470 = vadd.f32 %v3373, %v3469
        %v3471 = vpop.f32.mrb[0].mxu0
        %3472 = vdwg.mxu0
        %v3473 = vld [vmem:[%s388 + $0x210] sm:$0xf]
        %v3474 = vld [vmem:[%s388 + $0x214] sm:$0xf]
        %v3475 = vld [vmem:[%s388 + $0x218] sm:$0xf]
        %v3476 = vld [vmem:[%s388 + $0x21c] sm:$0xf]
        %v3477 = vld [vmem:[%s388 + $0x220] sm:$0xf]
        %v3478 = vld [vmem:[%s388 + $0x224] sm:$0xf]
        %v3479 = vld [vmem:[%s388 + $0x228] sm:$0xf]
        %v3480 = vld [vmem:[%s388 + $0x22c] sm:$0xf]
        %v3481 = vld [vmem:[%s388 + $0x230] sm:$0xf]
        %v3482 = vld [vmem:[%s388 + $0x234] sm:$0xf]
        %v3483 = vld [vmem:[%s388 + $0x238] sm:$0xf]
        %v3484 = vld [vmem:[%s388 + $0x23c] sm:$0xf]
        %v3485 = vld [vmem:[%s388 + $0x240] sm:$0xf]
        %v3486 = vld [vmem:[%s388 + $0x244] sm:$0xf]
        %v3487 = vld [vmem:[%s388 + $0x248] sm:$0xf]
        %v3488 = vld [vmem:[%s388 + $0x24c] sm:$0xf]
        %v3505 = vunpack.c.l.b16 %v3473
        %v3506 = vunpack.c.l.b16 %v3474
        %v3507 = vunpack.c.l.b16 %v3475
        %v3508 = vunpack.c.l.b16 %v3476
        %v3509 = vunpack.c.l.b16 %v3477
        %v3510 = vunpack.c.l.b16 %v3478
        %v3511 = vunpack.c.l.b16 %v3479
        %v3512 = vunpack.c.l.b16 %v3480
        %v3513 = vunpack.c.l.b16 %v3481
        %v3514 = vunpack.c.l.b16 %v3482
        %v3515 = vunpack.c.l.b16 %v3483
        %v3516 = vunpack.c.l.b16 %v3484
        %v3517 = vunpack.c.l.b16 %v3485
        %v3518 = vunpack.c.l.b16 %v3486
        %v3519 = vunpack.c.l.b16 %v3487
        %v3520 = vunpack.c.l.b16 %v3488
        %v3521 = vpack.c.b16 %v3506, %v3505
        %v3522 = vpack.c.b16 %v3508, %v3507
        %v3523 = vpack.c.b16 %v3510, %v3509
        %v3524 = vpack.c.b16 %v3512, %v3511
        %v3525 = vpack.c.b16 %v3514, %v3513
        %v3526 = vpack.c.b16 %v3516, %v3515
        %v3527 = vpack.c.b16 %v3518, %v3517
        %v3528 = vpack.c.b16 %v3520, %v3519
        %3537 = vmatprep.subr.bf16.mxu0 0
        %3538 = vmatpush1.bf16.msra.mxu0 %v3521
        %3539 = vmatprep.subr.bf16.mxu0 0
        %3540 = vmatpush1.bf16.msra.mxu0 %v3522
        %3541 = vmatprep.subr.bf16.mxu0 0
        %3542 = vmatpush1.bf16.msra.mxu0 %v3523
        %3543 = vmatprep.subr.bf16.mxu0 0
        %3544 = vmatpush1.bf16.msra.mxu0 %v3524
        %3545 = vmatprep.subr.bf16.mxu0 0
        %3546 = vmatpush1.bf16.msra.mxu0 %v3525
        %3547 = vmatprep.subr.bf16.mxu0 0
        %3548 = vmatpush1.bf16.msra.mxu0 %v3526
        %3549 = vmatprep.subr.bf16.mxu0 0
        %3550 = vmatpush1.bf16.msra.mxu0 %v3527
        %3551 = vmatprep.subr.bf16.mxu0 0
        %3552 = vmatpush1.bf16.msra.mxu0 %v3528
        %3553 = vmatprep.subr.bf16.mxu0 0
        %3554 = vmatpush1.bf16.msra.mxu0 0
        %3555 = vmatprep.subr.bf16.mxu0 0
        %3556 = vmatpush1.bf16.msra.mxu0 0
        %3557 = vmatprep.subr.bf16.mxu0 0
        %3558 = vmatpush1.bf16.msra.mxu0 0
        %3559 = vmatprep.subr.bf16.mxu0 0
        %3560 = vmatpush1.bf16.msra.mxu0 0
        %3561 = vmatprep.subr.bf16.mxu0 0
        %3562 = vmatpush1.bf16.msra.mxu0 0
        %3563 = vmatprep.subr.bf16.mxu0 0
        %3564 = vmatpush1.bf16.msra.mxu0 0
        %3565 = vmatprep.subr.bf16.mxu0 0
        %3566 = vmatpush1.bf16.msra.mxu0 0
        %3567 = vmatprep.subr.bf16.mxu0 0
        %3568 = vmatpush1.bf16.msra.mxu0 0
        %3569 = vmatprep.mubr.bf16.mxu0 0
        %3570 = vmatmul.mubr.bf16.gmra.mrb[0].mxu0 %v530
        %v3571 = vpop.f32.mrb[0].mxu0
        %v3572 = vadd.f32 0.0, %v3571
        %v3573 = vpop.f32.mrb[0].mxu0
        %v3574 = vpop.f32.mrb[0].mxu0
        %v3575 = vadd.f32 0.0, %v3574
        %v3576 = vpop.f32.mrb[0].mxu0
        %3577 = vmatprep.mubr.bf16.mxu0 0
        %3578 = vmatmul.mubr.bf16.gmra.mrb[0].mxu0 %v531
        %v3579 = vpop.f32.mrb[0].mxu0
        %v3580 = vadd.f32 0.0, %v3579
        %v3581 = vpop.f32.mrb[0].mxu0
        %v3582 = vpop.f32.mrb[0].mxu0
        %v3583 = vadd.f32 0.0, %v3582
        %v3584 = vpop.f32.mrb[0].mxu0
        %3585 = vmatprep.mubr.bf16.mxu0 0
        %3586 = vmatmul.mubr.bf16.gmra.mrb[0].mxu0 %v532
        %v3587 = vpop.f32.mrb[0].mxu0
        %v3588 = vadd.f32 0.0, %v3587
        %v3589 = vpop.f32.mrb[0].mxu0
        %v3590 = vpop.f32.mrb[0].mxu0
        %v3591 = vadd.f32 0.0, %v3590
        %v3592 = vpop.f32.mrb[0].mxu0
        %3593 = vmatprep.mubr.bf16.mxu0 0
        %3594 = vmatmul.mubr.bf16.gmra.mrb[0].mxu0 %v533
        %v3595 = vpop.f32.mrb[0].mxu0
        %v3596 = vadd.f32 0.0, %v3595
        %v3597 = vpop.f32.mrb[0].mxu0
        %v3598 = vpop.f32.mrb[0].mxu0
        %v3599 = vadd.f32 0.0, %v3598
        %v3600 = vpop.f32.mrb[0].mxu0
        %3601 = vmatprep.mubr.bf16.mxu0 0
        %3602 = vmatmul.mubr.bf16.gmra.mrb[0].mxu0 %v534
        %v3603 = vpop.f32.mrb[0].mxu0
        %v3604 = vadd.f32 0.0, %v3603
        %v3605 = vpop.f32.mrb[0].mxu0
        %v3606 = vpop.f32.mrb[0].mxu0
        %v3607 = vadd.f32 0.0, %v3606
        %v3608 = vpop.f32.mrb[0].mxu0
        %3609 = vmatprep.mubr.bf16.mxu0 0
        %3610 = vmatmul.mubr.bf16.gmra.mrb[0].mxu0 %v535
        %v3611 = vpop.f32.mrb[0].mxu0
        %v3612 = vadd.f32 0.0, %v3611
        %v3613 = vpop.f32.mrb[0].mxu0
        %v3614 = vpop.f32.mrb[0].mxu0
        %v3615 = vadd.f32 0.0, %v3614
        %v3616 = vpop.f32.mrb[0].mxu0
        %3617 = vmatprep.mubr.bf16.mxu0 0
        %3618 = vmatmul.mubr.bf16.gmra.mrb[0].mxu0 %v536
        %v3619 = vpop.f32.mrb[0].mxu0
        %v3620 = vadd.f32 0.0, %v3619
        %v3621 = vpop.f32.mrb[0].mxu0
        %v3622 = vpop.f32.mrb[0].mxu0
        %v3623 = vadd.f32 0.0, %v3622
        %v3624 = vpop.f32.mrb[0].mxu0
        %3625 = vmatprep.mubr.bf16.mxu0 0
        %3626 = vmatmul.mubr.bf16.gmra.mrb[0].mxu0 %v537
        %v3627 = vpop.f32.mrb[0].mxu0
        %v3628 = vadd.f32 0.0, %v3627
        %v3629 = vpop.f32.mrb[0].mxu0
        %v3630 = vpop.f32.mrb[0].mxu0
        %v3631 = vadd.f32 0.0, %v3630
        %v3632 = vpop.f32.mrb[0].mxu0
        %3633 = vdwg.mxu0
        %v3634 = vadd.f32 %v3411, %v3572
        %v3635 = vadd.f32 %v3414, %v3575
        %v3636 = vadd.f32 %v3419, %v3580
        %v3637 = vadd.f32 %v3422, %v3583
        %v3638 = vadd.f32 %v3427, %v3588
        %v3639 = vadd.f32 %v3430, %v3591
        %v3640 = vadd.f32 %v3435, %v3596
        %v3641 = vadd.f32 %v3438, %v3599
        %v3642 = vadd.f32 %v3443, %v3604
        %v3643 = vadd.f32 %v3446, %v3607
        %v3644 = vadd.f32 %v3451, %v3612
        %v3645 = vadd.f32 %v3454, %v3615
        %v3646 = vadd.f32 %v3459, %v3620
        %v3647 = vadd.f32 %v3462, %v3623
        %v3648 = vadd.f32 %v3467, %v3628
        %v3649 = vadd.f32 %v3470, %v3631
        %v3650 = vld [vmem:[%s388 + $0x250] sm:$0x1]
        %v3651 = vunpack.c.l.bf16 %v3650
        %v3652 = vlaneseq
        %v3653 = vshrl.u32 %v3652, 7
        %v3654 = vsub.s32 0, %v3653
        %v3655 = vrot.slane %v3651, %v3654
        %v3656 = vadd.f32 %v3634, %v3655
        %v3657 = vadd.f32 %v3635, %v3655
        %v3658 = vadd.f32 %v3636, %v3655
        %v3659 = vadd.f32 %v3637, %v3655
        %v3660 = vadd.f32 %v3638, %v3655
        %v3661 = vadd.f32 %v3639, %v3655
        %v3662 = vadd.f32 %v3640, %v3655
        %v3663 = vadd.f32 %v3641, %v3655
        %v3664 = vadd.f32 %v3642, %v3655
        %v3665 = vadd.f32 %v3643, %v3655
        %v3666 = vadd.f32 %v3644, %v3655
        %v3667 = vadd.f32 %v3645, %v3655
        %v3668 = vadd.f32 %v3646, %v3655
        %v3669 = vadd.f32 %v3647, %v3655
        %v3670 = vadd.f32 %v3648, %v3655
        %v3671 = vadd.f32 %v3649, %v3655
        %v3672 = vmax.f32 %v3656, 0.0
        %v3673 = vmax.f32 %v3657, 0.0
        %v3674 = vmax.f32 %v3658, 0.0
        %v3675 = vmax.f32 %v3659, 0.0
        %v3676 = vmax.f32 %v3660, 0.0
        %v3677 = vmax.f32 %v3661, 0.0
        %v3678 = vmax.f32 %v3662, 0.0
        %v3679 = vmax.f32 %v3663, 0.0
        %v3680 = vmax.f32 %v3664, 0.0
        %v3681 = vmax.f32 %v3665, 0.0
        %v3682 = vmax.f32 %v3666, 0.0
        %v3683 = vmax.f32 %v3667, 0.0
        %v3684 = vmax.f32 %v3668, 0.0
        %v3685 = vmax.f32 %v3669, 0.0
        %v3686 = vmax.f32 %v3670, 0.0
        %v3687 = vmax.f32 %v3671, 0.0
        %v3688 = vld [vmem:[%s388 + $0x258] sm:$0xf]
        %v3689 = vld [vmem:[%s388 + $0x25c] sm:$0xf]
        %v3690 = vld [vmem:[%s388 + $0x260] sm:$0xf]
        %v3691 = vld [vmem:[%s388 + $0x264] sm:$0xf]
        %v3692 = vld [vmem:[%s388 + $0x268] sm:$0xf]
        %v3693 = vld [vmem:[%s388 + $0x26c] sm:$0xf]
        %v3694 = vld [vmem:[%s388 + $0x270] sm:$0xf]
        %v3695 = vld [vmem:[%s388 + $0x274] sm:$0xf]
        %v3696 = vld [vmem:[%s388 + $0x278] sm:$0xf]
        %v3697 = vld [vmem:[%s388 + $0x27c] sm:$0xf]
        %v3698 = vld [vmem:[%s388 + $0x280] sm:$0xf]
        %v3699 = vld [vmem:[%s388 + $0x284] sm:$0xf]
        %v3700 = vld [vmem:[%s388 + $0x288] sm:$0xf]
        %v3701 = vld [vmem:[%s388 + $0x28c] sm:$0xf]
        %v3702 = vld [vmem:[%s388 + $0x290] sm:$0xf]
        %v3703 = vld [vmem:[%s388 + $0x294] sm:$0xf]
        %v3704 = vld [vmem:[%s388 + $0x298] sm:$0x1]
        %v3705 = vunpack.c.l.bf16 %v3704
        %v3706 = vpack.c.bf16 %v3673, %v3672
        %v3707 = vpack.c.bf16 %v3675, %v3674
        %v3708 = vpack.c.bf16 %v3677, %v3676
        %v3709 = vpack.c.bf16 %v3679, %v3678
        %v3710 = vpack.c.bf16 %v3681, %v3680
        %v3711 = vpack.c.bf16 %v3683, %v3682
        %v3712 = vpack.c.bf16 %v3685, %v3684
        %v3713 = vpack.c.bf16 %v3687, %v3686
        %v3714 = vlaneseq
        %v3715 = vshrl.u32 %v3714, 7
        %v3716 = vsub.s32 0, %v3715
        %v3717 = vrot.slane %v3705, %v3716
        %v3734 = vunpack.c.l.b16 %v3688
        %v3735 = vunpack.c.l.b16 %v3689
        %v3736 = vunpack.c.l.b16 %v3690
        %v3737 = vunpack.c.l.b16 %v3691
        %v3738 = vunpack.c.l.b16 %v3692
        %v3739 = vunpack.c.l.b16 %v3693
        %v3740 = vunpack.c.l.b16 %v3694
        %v3741 = vunpack.c.l.b16 %v3695
        %v3742 = vunpack.c.l.b16 %v3696
        %v3743 = vunpack.c.l.b16 %v3697
        %v3744 = vunpack.c.l.b16 %v3698
        %v3745 = vunpack.c.l.b16 %v3699
        %v3746 = vunpack.c.l.b16 %v3700
        %v3747 = vunpack.c.l.b16 %v3701
        %v3748 = vunpack.c.l.b16 %v3702
        %v3749 = vunpack.c.l.b16 %v3703
        %v3750 = vpack.c.b16 %v3735, %v3734
        %v3751 = vpack.c.b16 %v3737, %v3736
        %v3752 = vpack.c.b16 %v3739, %v3738
        %v3753 = vpack.c.b16 %v3741, %v3740
        %v3754 = vpack.c.b16 %v3743, %v3742
        %v3755 = vpack.c.b16 %v3745, %v3744
        %v3756 = vpack.c.b16 %v3747, %v3746
        %v3757 = vpack.c.b16 %v3749, %v3748
        %3766 = vmatprep.subr.bf16.mxu0 0
        %3767 = vmatpush1.bf16.msra.mxu0 %v3750
        %3768 = vmatprep.subr.bf16.mxu0 0
        %3769 = vmatpush1.bf16.msra.mxu0 %v3751
        %3770 = vmatprep.subr.bf16.mxu0 0
        %3771 = vmatpush1.bf16.msra.mxu0 %v3752
        %3772 = vmatprep.subr.bf16.mxu0 0
        %3773 = vmatpush1.bf16.msra.mxu0 %v3753
        %3774 = vmatprep.subr.bf16.mxu0 0
        %3775 = vmatpush1.bf16.msra.mxu0 %v3754
        %3776 = vmatprep.subr.bf16.mxu0 0
        %3777 = vmatpush1.bf16.msra.mxu0 %v3755
        %3778 = vmatprep.subr.bf16.mxu0 0
        %3779 = vmatpush1.bf16.msra.mxu0 %v3756
        %3780 = vmatprep.subr.bf16.mxu0 0
        %3781 = vmatpush1.bf16.msra.mxu0 %v3757
        %3782 = vmatprep.subr.bf16.mxu0 0
        %3783 = vmatpush1.bf16.msra.mxu0 0
        %3784 = vmatprep.subr.bf16.mxu0 0
        %3785 = vmatpush1.bf16.msra.mxu0 0
        %3786 = vmatprep.subr.bf16.mxu0 0
        %3787 = vmatpush1.bf16.msra.mxu0 0
        %3788 = vmatprep.subr.bf16.mxu0 0
        %3789 = vmatpush1.bf16.msra.mxu0 0
        %3790 = vmatprep.subr.bf16.mxu0 0
        %3791 = vmatpush1.bf16.msra.mxu0 0
        %3792 = vmatprep.subr.bf16.mxu0 0
        %3793 = vmatpush1.bf16.msra.mxu0 0
        %3794 = vmatprep.subr.bf16.mxu0 0
        %3795 = vmatpush1.bf16.msra.mxu0 0
        %3796 = vmatprep.subr.bf16.mxu0 0
        %3797 = vmatpush1.bf16.msra.mxu0 0
        %3798 = vmatprep.mubr.bf16.mxu0 0
        %3799 = vmatmul.mubr.bf16.gmra.mrb[0].mxu0 %v3706
        %v3800 = vpop.f32.mrb[0].mxu0
        %v3801 = vadd.f32 %v3717, %v3800
        %v3802 = vpop.f32.mrb[0].mxu0
        %v3803 = vpop.f32.mrb[0].mxu0
        %v3804 = vadd.f32 %v3717, %v3803
        %v3805 = vpop.f32.mrb[0].mxu0
        %3806 = vmatprep.mubr.bf16.mxu0 0
        %3807 = vmatmul.mubr.bf16.gmra.mrb[0].mxu0 %v3707
        %v3808 = vpop.f32.mrb[0].mxu0
        %v3809 = vadd.f32 %v3717, %v3808
        %v3810 = vpop.f32.mrb[0].mxu0
        %v3811 = vpop.f32.mrb[0].mxu0
        %v3812 = vadd.f32 %v3717, %v3811
        %v3813 = vpop.f32.mrb[0].mxu0
        %3814 = vmatprep.mubr.bf16.mxu0 0
        %3815 = vmatmul.mubr.bf16.gmra.mrb[0].mxu0 %v3708
        %v3816 = vpop.f32.mrb[0].mxu0
        %v3817 = vadd.f32 %v3717, %v3816
        %v3818 = vpop.f32.mrb[0].mxu0
        %v3819 = vpop.f32.mrb[0].mxu0
        %v3820 = vadd.f32 %v3717, %v3819
        %v3821 = vpop.f32.mrb[0].mxu0
        %3822 = vmatprep.mubr.bf16.mxu0 0
        %3823 = vmatmul.mubr.bf16.gmra.mrb[0].mxu0 %v3709
        %v3824 = vpop.f32.mrb[0].mxu0
        %v3825 = vadd.f32 %v3717, %v3824
        %v3826 = vpop.f32.mrb[0].mxu0
        %v3827 = vpop.f32.mrb[0].mxu0
        %v3828 = vadd.f32 %v3717, %v3827
        %v3829 = vpop.f32.mrb[0].mxu0
        %3830 = vmatprep.mubr.bf16.mxu0 0
        %3831 = vmatmul.mubr.bf16.gmra.mrb[0].mxu0 %v3710
        %v3832 = vpop.f32.mrb[0].mxu0
        %v3833 = vadd.f32 %v3717, %v3832
        %v3834 = vpop.f32.mrb[0].mxu0
        %v3835 = vpop.f32.mrb[0].mxu0
        %v3836 = vadd.f32 %v3717, %v3835
        %v3837 = vpop.f32.mrb[0].mxu0
        %3838 = vmatprep.mubr.bf16.mxu0 0
        %3839 = vmatmul.mubr.bf16.gmra.mrb[0].mxu0 %v3711
        %v3840 = vpop.f32.mrb[0].mxu0
        %v3841 = vadd.f32 %v3717, %v3840
        %v3842 = vpop.f32.mrb[0].mxu0
        %v3843 = vpop.f32.mrb[0].mxu0
        %v3844 = vadd.f32 %v3717, %v3843
        %v3845 = vpop.f32.mrb[0].mxu0
        %3846 = vmatprep.mubr.bf16.mxu0 0
        %3847 = vmatmul.mubr.bf16.gmra.mrb[0].mxu0 %v3712
        %v3848 = vpop.f32.mrb[0].mxu0
        %v3849 = vadd.f32 %v3717, %v3848
        %v3850 = vpop.f32.mrb[0].mxu0
        %v3851 = vpop.f32.mrb[0].mxu0
        %v3852 = vadd.f32 %v3717, %v3851
        %v3853 = vpop.f32.mrb[0].mxu0
        %3854 = vmatprep.mubr.bf16.mxu0 0
        %3855 = vmatmul.mubr.bf16.gmra.mrb[0].mxu0 %v3713
        %v3856 = vpop.f32.mrb[0].mxu0
        %v3857 = vadd.f32 %v3717, %v3856
        %v3858 = vpop.f32.mrb[0].mxu0
        %v3859 = vpop.f32.mrb[0].mxu0
        %v3860 = vadd.f32 %v3717, %v3859
        %v3861 = vpop.f32.mrb[0].mxu0
        %3862 = vdwg.mxu0
        %v3863 = vmax.f32 %v3801, 0.0
        %v3864 = vmax.f32 %v3804, 0.0
        %v3865 = vmax.f32 %v3809, 0.0
        %v3866 = vmax.f32 %v3812, 0.0
        %v3867 = vmax.f32 %v3817, 0.0
        %v3868 = vmax.f32 %v3820, 0.0
        %v3869 = vmax.f32 %v3825, 0.0
        %v3870 = vmax.f32 %v3828, 0.0
        %v3871 = vmax.f32 %v3833, 0.0
        %v3872 = vmax.f32 %v3836, 0.0
        %v3873 = vmax.f32 %v3841, 0.0
        %v3874 = vmax.f32 %v3844, 0.0
        %v3875 = vmax.f32 %v3849, 0.0
        %v3876 = vmax.f32 %v3852, 0.0
        %v3877 = vmax.f32 %v3857, 0.0
        %v3878 = vmax.f32 %v3860, 0.0
        %v3879 = vld [vmem:[%s388 + $0x2a0] sm:$0xf]
        %v3880 = vld [vmem:[%s388 + $0x2a4] sm:$0xf]
        %v3881 = vld [vmem:[%s388 + $0x2a8] sm:$0xf]
        %v3882 = vld [vmem:[%s388 + $0x2ac] sm:$0xf]
        %v3883 = vld [vmem:[%s388 + $0x2b0] sm:$0xf]
        %v3884 = vld [vmem:[%s388 + $0x2b4] sm:$0xf]
        %v3885 = vld [vmem:[%s388 + $0x2b8] sm:$0xf]
        %v3886 = vld [vmem:[%s388 + $0x2bc] sm:$0xf]
        %v3887 = vld [vmem:[%s388 + $0x2c0] sm:$0xf]
        %v3888 = vld [vmem:[%s388 + $0x2c4] sm:$0xf]
        %v3889 = vld [vmem:[%s388 + $0x2c8] sm:$0xf]
        %v3890 = vld [vmem:[%s388 + $0x2cc] sm:$0xf]
        %v3891 = vld [vmem:[%s388 + $0x2d0] sm:$0xf]
        %v3892 = vld [vmem:[%s388 + $0x2d4] sm:$0xf]
        %v3893 = vld [vmem:[%s388 + $0x2d8] sm:$0xf]
        %v3894 = vld [vmem:[%s388 + $0x2dc] sm:$0xf]
        %v3895 = vld [vmem:[%s388 + $0x2e0] sm:$0x1]
        %v3896 = vunpack.c.l.bf16 %v3895
        %v3897 = vpack.c.bf16 %v3864, %v3863
        %v3898 = vpack.c.bf16 %v3866, %v3865
        %v3899 = vpack.c.bf16 %v3868, %v3867
        %v3900 = vpack.c.bf16 %v3870, %v3869
        %v3901 = vpack.c.bf16 %v3872, %v3871
        %v3902 = vpack.c.bf16 %v3874, %v3873
        %v3903 = vpack.c.bf16 %v3876, %v3875
        %v3904 = vpack.c.bf16 %v3878, %v3877
        %v3905 = vlaneseq
        %v3906 = vshrl.u32 %v3905, 7
        %v3907 = vsub.s32 0, %v3906
        %v3908 = vrot.slane %v3896, %v3907
        %v3925 = vunpack.c.l.b16 %v3879
        %v3926 = vunpack.c.l.b16 %v3880
        %v3927 = vunpack.c.l.b16 %v3881
        %v3928 = vunpack.c.l.b16 %v3882
        %v3929 = vunpack.c.l.b16 %v3883
        %v3930 = vunpack.c.l.b16 %v3884
        %v3931 = vunpack.c.l.b16 %v3885
        %v3932 = vunpack.c.l.b16 %v3886
        %v3933 = vunpack.c.l.b16 %v3887
        %v3934 = vunpack.c.l.b16 %v3888
        %v3935 = vunpack.c.l.b16 %v3889
        %v3936 = vunpack.c.l.b16 %v3890
        %v3937 = vunpack.c.l.b16 %v3891
        %v3938 = vunpack.c.l.b16 %v3892
        %v3939 = vunpack.c.l.b16 %v3893
        %v3940 = vunpack.c.l.b16 %v3894
        %v3941 = vpack.c.b16 %v3926, %v3925
        %v3942 = vpack.c.b16 %v3928, %v3927
        %v3943 = vpack.c.b16 %v3930, %v3929
        %v3944 = vpack.c.b16 %v3932, %v3931
        %v3945 = vpack.c.b16 %v3934, %v3933
        %v3946 = vpack.c.b16 %v3936, %v3935
        %v3947 = vpack.c.b16 %v3938, %v3937
        %v3948 = vpack.c.b16 %v3940, %v3939
        %3957 = vmatprep.subr.bf16.mxu0 0
        %3958 = vmatpush1.bf16.msra.mxu0 %v3941
        %3959 = vmatprep.subr.bf16.mxu0 0
        %3960 = vmatpush1.bf16.msra.mxu0 %v3942
        %3961 = vmatprep.subr.bf16.mxu0 0
        %3962 = vmatpush1.bf16.msra.mxu0 %v3943
        %3963 = vmatprep.subr.bf16.mxu0 0
        %3964 = vmatpush1.bf16.msra.mxu0 %v3944
        %3965 = vmatprep.subr.bf16.mxu0 0
        %3966 = vmatpush1.bf16.msra.mxu0 %v3945
        %3967 = vmatprep.subr.bf16.mxu0 0
        %3968 = vmatpush1.bf16.msra.mxu0 %v3946
        %3969 = vmatprep.subr.bf16.mxu0 0
        %3970 = vmatpush1.bf16.msra.mxu0 %v3947
        %3971 = vmatprep.subr.bf16.mxu0 0
        %3972 = vmatpush1.bf16.msra.mxu0 %v3948
        %3973 = vmatprep.subr.bf16.mxu0 0
        %3974 = vmatpush1.bf16.msra.mxu0 0
        %3975 = vmatprep.subr.bf16.mxu0 0
        %3976 = vmatpush1.bf16.msra.mxu0 0
        %3977 = vmatprep.subr.bf16.mxu0 0
        %3978 = vmatpush1.bf16.msra.mxu0 0
        %3979 = vmatprep.subr.bf16.mxu0 0
        %3980 = vmatpush1.bf16.msra.mxu0 0
        %3981 = vmatprep.subr.bf16.mxu0 0
        %3982 = vmatpush1.bf16.msra.mxu0 0
        %3983 = vmatprep.subr.bf16.mxu0 0
        %3984 = vmatpush1.bf16.msra.mxu0 0
        %3985 = vmatprep.subr.bf16.mxu0 0
        %3986 = vmatpush1.bf16.msra.mxu0 0
        %3987 = vmatprep.subr.bf16.mxu0 0
        %3988 = vmatpush1.bf16.msra.mxu0 0
        %3989 = vmatprep.mubr.bf16.mxu0 0
        %3990 = vmatmul.mubr.bf16.gmra.mrb[0].mxu0 %v3897
        %v3991 = vpop.f32.mrb[0].mxu0
        %v3992 = vadd.f32 %v3908, %v3991
        %v3993 = vpop.f32.mrb[0].mxu0
        %v3994 = vpop.f32.mrb[0].mxu0
        %v3995 = vadd.f32 %v3908, %v3994
        %v3996 = vpop.f32.mrb[0].mxu0
        %3997 = vmatprep.mubr.bf16.mxu0 0
        %3998 = vmatmul.mubr.bf16.gmra.mrb[0].mxu0 %v3898
        %v3999 = vpop.f32.mrb[0].mxu0
        %v4000 = vadd.f32 %v3908, %v3999
        %v4001 = vpop.f32.mrb[0].mxu0
        %v4002 = vpop.f32.mrb[0].mxu0
        %v4003 = vadd.f32 %v3908, %v4002
        %v4004 = vpop.f32.mrb[0].mxu0
        %4005 = vmatprep.mubr.bf16.mxu0 0
        %4006 = vmatmul.mubr.bf16.gmra.mrb[0].mxu0 %v3899
        %v4007 = vpop.f32.mrb[0].mxu0
        %v4008 = vadd.f32 %v3908, %v4007
        %v4009 = vpop.f32.mrb[0].mxu0
        %v4010 = vpop.f32.mrb[0].mxu0
        %v4011 = vadd.f32 %v3908, %v4010
        %v4012 = vpop.f32.mrb[0].mxu0
        %4013 = vmatprep.mubr.bf16.mxu0 0
        %4014 = vmatmul.mubr.bf16.gmra.mrb[0].mxu0 %v3900
        %v4015 = vpop.f32.mrb[0].mxu0
        %v4016 = vadd.f32 %v3908, %v4015
        %v4017 = vpop.f32.mrb[0].mxu0
        %v4018 = vpop.f32.mrb[0].mxu0
        %v4019 = vadd.f32 %v3908, %v4018
        %v4020 = vpop.f32.mrb[0].mxu0
        %4021 = vmatprep.mubr.bf16.mxu0 0
        %4022 = vmatmul.mubr.bf16.gmra.mrb[0].mxu0 %v3901
        %v4023 = vpop.f32.mrb[0].mxu0
        %v4024 = vadd.f32 %v3908, %v4023
        %v4025 = vpop.f32.mrb[0].mxu0
        %v4026 = vpop.f32.mrb[0].mxu0
        %v4027 = vadd.f32 %v3908, %v4026
        %v4028 = vpop.f32.mrb[0].mxu0
        %4029 = vmatprep.mubr.bf16.mxu0 0
        %4030 = vmatmul.mubr.bf16.gmra.mrb[0].mxu0 %v3902
        %v4031 = vpop.f32.mrb[0].mxu0
        %v4032 = vadd.f32 %v3908, %v4031
        %v4033 = vpop.f32.mrb[0].mxu0
        %v4034 = vpop.f32.mrb[0].mxu0
        %v4035 = vadd.f32 %v3908, %v4034
        %v4036 = vpop.f32.mrb[0].mxu0
        %4037 = vmatprep.mubr.bf16.mxu0 0
        %4038 = vmatmul.mubr.bf16.gmra.mrb[0].mxu0 %v3903
        %v4039 = vpop.f32.mrb[0].mxu0
        %v4040 = vadd.f32 %v3908, %v4039
        %v4041 = vpop.f32.mrb[0].mxu0
        %v4042 = vpop.f32.mrb[0].mxu0
        %v4043 = vadd.f32 %v3908, %v4042
        %v4044 = vpop.f32.mrb[0].mxu0
        %4045 = vmatprep.mubr.bf16.mxu0 0
        %4046 = vmatmul.mubr.bf16.gmra.mrb[0].mxu0 %v3904
        %v4047 = vpop.f32.mrb[0].mxu0
        %v4048 = vadd.f32 %v3908, %v4047
        %v4049 = vpop.f32.mrb[0].mxu0
        %v4050 = vpop.f32.mrb[0].mxu0
        %v4051 = vadd.f32 %v3908, %v4050
        %v4052 = vpop.f32.mrb[0].mxu0
        %4053 = vdwg.mxu0
        %v4054 = vld [vmem:[%s388 + $0x2e8] sm:$0x1]
        %v4055 = vunpack.c.l.bf16 %v4054
        %v4056 = vld [vmem:[%s388 + $0x2f0] sm:$0x1]
        %v4057 = vunpack.c.l.bf16 %v4056
        %4058 = vadd.xlane.f32.xlu0 %v3992
        %v4059 = vpop.xlane.xlu0 %4058
        %4060 = vadd.xlane.f32.xlu0 %v3995
        %v4061 = vpop.xlane.xlu0 %4060
        %4062 = vadd.xlane.f32.xlu0 %v4000
        %v4063 = vpop.xlane.xlu0 %4062
        %4064 = vadd.xlane.f32.xlu0 %v4003
        %v4065 = vpop.xlane.xlu0 %4064
        %4066 = vadd.xlane.f32.xlu0 %v4008
        %v4067 = vpop.xlane.xlu0 %4066
        %4068 = vadd.xlane.f32.xlu0 %v4011
        %v4069 = vpop.xlane.xlu0 %4068
        %4070 = vadd.xlane.f32.xlu0 %v4016
        %v4071 = vpop.xlane.xlu0 %4070
        %4072 = vadd.xlane.f32.xlu0 %v4019
        %v4073 = vpop.xlane.xlu0 %4072
        %4074 = vadd.xlane.f32.xlu0 %v4024
        %v4075 = vpop.xlane.xlu0 %4074
        %4076 = vadd.xlane.f32.xlu0 %v4027
        %v4077 = vpop.xlane.xlu0 %4076
        %4078 = vadd.xlane.f32.xlu0 %v4032
        %v4079 = vpop.xlane.xlu0 %4078
        %4080 = vadd.xlane.f32.xlu0 %v4035
        %v4081 = vpop.xlane.xlu0 %4080
        %4082 = vadd.xlane.f32.xlu0 %v4040
        %v4083 = vpop.xlane.xlu0 %4082
        %4084 = vadd.xlane.f32.xlu0 %v4043
        %v4085 = vpop.xlane.xlu0 %4084
        %4086 = vadd.xlane.f32.xlu0 %v4048
        %v4087 = vpop.xlane.xlu0 %4086
        %4088 = vadd.xlane.f32.xlu0 %v4051
        %v4089 = vpop.xlane.xlu0 %4088
        %v4090 = vmul.f32 %v4059, 0.03125
        %v4091 = vmul.f32 %v4061, 0.03125
        %v4092 = vmul.f32 %v4063, 0.03125
        %v4093 = vmul.f32 %v4065, 0.03125
        %v4094 = vmul.f32 %v4067, 0.03125
        %v4095 = vmul.f32 %v4069, 0.03125
        %v4096 = vmul.f32 %v4071, 0.03125
        %v4097 = vmul.f32 %v4073, 0.03125
        %v4098 = vmul.f32 %v4075, 0.03125
        %v4099 = vmul.f32 %v4077, 0.03125
        %v4100 = vmul.f32 %v4079, 0.03125
        %v4101 = vmul.f32 %v4081, 0.03125
        %v4102 = vmul.f32 %v4083, 0.03125
        %v4103 = vmul.f32 %v4085, 0.03125
        %v4104 = vmul.f32 %v4087, 0.03125
        %v4105 = vmul.f32 %v4089, 0.03125
        %v4106 = vsub.f32 %v3992, %v4090
        %v4107 = vsub.f32 %v3995, %v4091
        %v4108 = vsub.f32 %v4000, %v4092
        %v4109 = vsub.f32 %v4003, %v4093
        %v4110 = vsub.f32 %v4008, %v4094
        %v4111 = vsub.f32 %v4011, %v4095
        %v4112 = vsub.f32 %v4016, %v4096
        %v4113 = vsub.f32 %v4019, %v4097
        %v4114 = vsub.f32 %v4024, %v4098
        %v4115 = vsub.f32 %v4027, %v4099
        %v4116 = vsub.f32 %v4032, %v4100
        %v4117 = vsub.f32 %v4035, %v4101
        %v4118 = vsub.f32 %v4040, %v4102
        %v4119 = vsub.f32 %v4043, %v4103
        %v4120 = vsub.f32 %v4048, %v4104
        %v4121 = vsub.f32 %v4051, %v4105
        %v4122 = vmul.f32 %v4106, %v1690
        %v4123 = vmul.f32 %v4107, %v1690
        %v4124 = vmul.f32 %v4108, %v1690
        %v4125 = vmul.f32 %v4109, %v1690
        %v4126 = vmul.f32 %v4110, %v1690
        %v4127 = vmul.f32 %v4111, %v1690
        %v4128 = vmul.f32 %v4112, %v1690
        %v4129 = vmul.f32 %v4113, %v1690
        %v4130 = vmul.f32 %v4114, %v1690
        %v4131 = vmul.f32 %v4115, %v1690
        %v4132 = vmul.f32 %v4116, %v1690
        %v4133 = vmul.f32 %v4117, %v1690
        %v4134 = vmul.f32 %v4118, %v1690
        %v4135 = vmul.f32 %v4119, %v1690
        %v4136 = vmul.f32 %v4120, %v1690
        %v4137 = vmul.f32 %v4121, %v1690
        %v4138 = vmul.f32 %v4122, %v4122
        %v4139 = vmul.f32 %v4123, %v4123
        %v4140 = vmul.f32 %v4124, %v4124
        %v4141 = vmul.f32 %v4125, %v4125
        %v4142 = vmul.f32 %v4126, %v4126
        %v4143 = vmul.f32 %v4127, %v4127
        %v4144 = vmul.f32 %v4128, %v4128
        %v4145 = vmul.f32 %v4129, %v4129
        %v4146 = vmul.f32 %v4130, %v4130
        %v4147 = vmul.f32 %v4131, %v4131
        %v4148 = vmul.f32 %v4132, %v4132
        %v4149 = vmul.f32 %v4133, %v4133
        %v4150 = vmul.f32 %v4134, %v4134
        %v4151 = vmul.f32 %v4135, %v4135
        %v4152 = vmul.f32 %v4136, %v4136
        %v4153 = vmul.f32 %v4137, %v4137
        %4154 = vadd.xlane.f32.xlu0 %v4138
        %v4155 = vpop.xlane.xlu0 %4154
        %4156 = vadd.xlane.f32.xlu0 %v4139
        %v4157 = vpop.xlane.xlu0 %4156
        %4158 = vadd.xlane.f32.xlu0 %v4140
        %v4159 = vpop.xlane.xlu0 %4158
        %4160 = vadd.xlane.f32.xlu0 %v4141
        %v4161 = vpop.xlane.xlu0 %4160
        %4162 = vadd.xlane.f32.xlu0 %v4142
        %v4163 = vpop.xlane.xlu0 %4162
        %4164 = vadd.xlane.f32.xlu0 %v4143
        %v4165 = vpop.xlane.xlu0 %4164
        %4166 = vadd.xlane.f32.xlu0 %v4144
        %v4167 = vpop.xlane.xlu0 %4166
        %4168 = vadd.xlane.f32.xlu0 %v4145
        %v4169 = vpop.xlane.xlu0 %4168
        %4170 = vadd.xlane.f32.xlu0 %v4146
        %v4171 = vpop.xlane.xlu0 %4170
        %4172 = vadd.xlane.f32.xlu0 %v4147
        %v4173 = vpop.xlane.xlu0 %4172
        %4174 = vadd.xlane.f32.xlu0 %v4148
        %v4175 = vpop.xlane.xlu0 %4174
        %4176 = vadd.xlane.f32.xlu0 %v4149
        %v4177 = vpop.xlane.xlu0 %4176
        %4178 = vadd.xlane.f32.xlu0 %v4150
        %v4179 = vpop.xlane.xlu0 %4178
        %4180 = vadd.xlane.f32.xlu0 %v4151
        %v4181 = vpop.xlane.xlu0 %4180
        %4182 = vadd.xlane.f32.xlu0 %v4152
        %v4183 = vpop.xlane.xlu0 %4182
        %4184 = vadd.xlane.f32.xlu0 %v4153
        %v4185 = vpop.xlane.xlu0 %4184
        %v4186 = vmul.f32 %v4155, 0.03125
        %v4187 = vmul.f32 %v4157, 0.03125
        %v4188 = vmul.f32 %v4159, 0.03125
        %v4189 = vmul.f32 %v4161, 0.03125
        %v4190 = vmul.f32 %v4163, 0.03125
        %v4191 = vmul.f32 %v4165, 0.03125
        %v4192 = vmul.f32 %v4167, 0.03125
        %v4193 = vmul.f32 %v4169, 0.03125
        %v4194 = vmul.f32 %v4171, 0.03125
        %v4195 = vmul.f32 %v4173, 0.03125
        %v4196 = vmul.f32 %v4175, 0.03125
        %v4197 = vmul.f32 %v4177, 0.03125
        %v4198 = vmul.f32 %v4179, 0.03125
        %v4199 = vmul.f32 %v4181, 0.03125
        %v4200 = vmul.f32 %v4183, 0.03125
        %v4201 = vmul.f32 %v4185, 0.03125
        %v4202 = vadd.f32 %v4186, 1e-05
        %v4203 = vadd.f32 %v4187, 1e-05
        %v4204 = vadd.f32 %v4188, 1e-05
        %v4205 = vadd.f32 %v4189, 1e-05
        %v4206 = vadd.f32 %v4190, 1e-05
        %v4207 = vadd.f32 %v4191, 1e-05
        %v4208 = vadd.f32 %v4192, 1e-05
        %v4209 = vadd.f32 %v4193, 1e-05
        %v4210 = vadd.f32 %v4194, 1e-05
        %v4211 = vadd.f32 %v4195, 1e-05
        %v4212 = vadd.f32 %v4196, 1e-05
        %v4213 = vadd.f32 %v4197, 1e-05
        %v4214 = vadd.f32 %v4198, 1e-05
        %v4215 = vadd.f32 %v4199, 1e-05
        %v4216 = vadd.f32 %v4200, 1e-05
        %v4217 = vadd.f32 %v4201, 1e-05
        %v4218 = vrsqrt.pop %v4202
        %v4219 = vrsqrt.pop %v4203
        %v4220 = vrsqrt.pop %v4204
        %v4221 = vrsqrt.pop %v4205
        %v4222 = vrsqrt.pop %v4206
        %v4223 = vrsqrt.pop %v4207
        %v4224 = vrsqrt.pop %v4208
        %v4225 = vrsqrt.pop %v4209
        %v4226 = vrsqrt.pop %v4210
        %v4227 = vrsqrt.pop %v4211
        %v4228 = vrsqrt.pop %v4212
        %v4229 = vrsqrt.pop %v4213
        %v4230 = vrsqrt.pop %v4214
        %v4231 = vrsqrt.pop %v4215
        %v4232 = vrsqrt.pop %v4216
        %v4233 = vrsqrt.pop %v4217
        %v4234 = vmul.f32 %v4122, %v4218
        %v4235 = vmul.f32 %v4123, %v4219
        %v4236 = vmul.f32 %v4124, %v4220
        %v4237 = vmul.f32 %v4125, %v4221
        %v4238 = vmul.f32 %v4126, %v4222
        %v4239 = vmul.f32 %v4127, %v4223
        %v4240 = vmul.f32 %v4128, %v4224
        %v4241 = vmul.f32 %v4129, %v4225
        %v4242 = vmul.f32 %v4130, %v4226
        %v4243 = vmul.f32 %v4131, %v4227
        %v4244 = vmul.f32 %v4132, %v4228
        %v4245 = vmul.f32 %v4133, %v4229
        %v4246 = vmul.f32 %v4134, %v4230
        %v4247 = vmul.f32 %v4135, %v4231
        %v4248 = vmul.f32 %v4136, %v4232
        %v4249 = vmul.f32 %v4137, %v4233
        %v4250 = vlaneseq
        %v4251 = vshrl.u32 %v4250, 7
        %v4252 = vsub.s32 0, %v4251
        %v4253 = vrot.slane %v4055, %v4252
        %v4254 = vmul.f32 %v4234, %v4253
        %v4255 = vmul.f32 %v4235, %v4253
        %v4256 = vmul.f32 %v4236, %v4253
        %v4257 = vmul.f32 %v4237, %v4253
        %v4258 = vmul.f32 %v4238, %v4253
        %v4259 = vmul.f32 %v4239, %v4253
        %v4260 = vmul.f32 %v4240, %v4253
        %v4261 = vmul.f32 %v4241, %v4253
        %v4262 = vmul.f32 %v4242, %v4253
        %v4263 = vmul.f32 %v4243, %v4253
        %v4264 = vmul.f32 %v4244, %v4253
        %v4265 = vmul.f32 %v4245, %v4253
        %v4266 = vmul.f32 %v4246, %v4253
        %v4267 = vmul.f32 %v4247, %v4253
        %v4268 = vmul.f32 %v4248, %v4253
        %v4269 = vmul.f32 %v4249, %v4253
        %v4270 = vlaneseq
        %v4271 = vshrl.u32 %v4270, 7
        %v4272 = vsub.s32 0, %v4271
        %v4273 = vrot.slane %v4057, %v4272
        %v4274 = vadd.f32 %v4254, %v4273
        %v4275 = vadd.f32 %v4255, %v4273
        %v4276 = vadd.f32 %v4256, %v4273
        %v4277 = vadd.f32 %v4257, %v4273
        %v4278 = vadd.f32 %v4258, %v4273
        %v4279 = vadd.f32 %v4259, %v4273
        %v4280 = vadd.f32 %v4260, %v4273
        %v4281 = vadd.f32 %v4261, %v4273
        %v4282 = vadd.f32 %v4262, %v4273
        %v4283 = vadd.f32 %v4263, %v4273
        %v4284 = vadd.f32 %v4264, %v4273
        %v4285 = vadd.f32 %v4265, %v4273
        %v4286 = vadd.f32 %v4266, %v4273
        %v4287 = vadd.f32 %v4267, %v4273
        %v4288 = vadd.f32 %v4268, %v4273
        %v4289 = vadd.f32 %v4269, %v4273
        %v4290 = vadd.f32 %v3030, %v490
        %v4291 = vadd.f32 %v3031, %v491
        %v4292 = vadd.f32 %v3032, %v492
        %v4293 = vadd.f32 %v3033, %v493
        %v4294 = vadd.f32 %v3034, %v494
        %v4295 = vadd.f32 %v3035, %v495
        %v4296 = vadd.f32 %v3036, %v496
        %v4297 = vadd.f32 %v3037, %v497
        %v4298 = vadd.f32 %v3038, %v498
        %v4299 = vadd.f32 %v3039, %v499
        %v4300 = vadd.f32 %v3040, %v500
        %v4301 = vadd.f32 %v3041, %v501
        %v4302 = vadd.f32 %v3042, %v502
        %v4303 = vadd.f32 %v3043, %v503
        %v4304 = vadd.f32 %v3044, %v504
        %v4305 = vadd.f32 %v3045, %v505
        %4306 = vst [vmem:[#allocation14] sm:$0xff] %v4290
        %4307 = vst [vmem:[#allocation14 + $0x8] sm:$0xff] %v4291
        %4308 = vst [vmem:[#allocation14 + $0x10] sm:$0xff] %v4292
        %4309 = vst [vmem:[#allocation14 + $0x18] sm:$0xff] %v4293
        %4310 = vst [vmem:[#allocation14 + $0x20] sm:$0xff] %v4294
        %4311 = vst [vmem:[#allocation14 + $0x28] sm:$0xff] %v4295
        %4312 = vst [vmem:[#allocation14 + $0x30] sm:$0xff] %v4296
        %4313 = vst [vmem:[#allocation14 + $0x38] sm:$0xff] %v4297
        %4314 = vst [vmem:[#allocation14 + $0x40] sm:$0xff] %v4298
        %4315 = vst [vmem:[#allocation14 + $0x48] sm:$0xff] %v4299
        %4316 = vst [vmem:[#allocation14 + $0x50] sm:$0xff] %v4300
        %4317 = vst [vmem:[#allocation14 + $0x58] sm:$0xff] %v4301
        %4318 = vst [vmem:[#allocation14 + $0x60] sm:$0xff] %v4302
        %4319 = vst [vmem:[#allocation14 + $0x68] sm:$0xff] %v4303
        %4320 = vst [vmem:[#allocation14 + $0x70] sm:$0xff] %v4304
        %4321 = vst [vmem:[#allocation14 + $0x78] sm:$0xff] %v4305
        %v4322 = vadd.f32 %v4274, %v506
        %v4323 = vadd.f32 %v4275, %v507
        %v4324 = vadd.f32 %v4276, %v508
        %v4325 = vadd.f32 %v4277, %v509
        %v4326 = vadd.f32 %v4278, %v510
        %v4327 = vadd.f32 %v4279, %v511
        %v4328 = vadd.f32 %v4280, %v512
        %v4329 = vadd.f32 %v4281, %v513
        %v4330 = vadd.f32 %v4282, %v514
        %v4331 = vadd.f32 %v4283, %v515
        %v4332 = vadd.f32 %v4284, %v516
        %v4333 = vadd.f32 %v4285, %v517
        %v4334 = vadd.f32 %v4286, %v518
        %v4335 = vadd.f32 %v4287, %v519
        %v4336 = vadd.f32 %v4288, %v520
        %v4337 = vadd.f32 %v4289, %v521
        %4338 = vst [vmem:[#allocation15] sm:$0xff] %v4322
        %4339 = vst [vmem:[#allocation15 + $0x8] sm:$0xff] %v4323
        %4340 = vst [vmem:[#allocation15 + $0x10] sm:$0xff] %v4324
        %4341 = vst [vmem:[#allocation15 + $0x18] sm:$0xff] %v4325
        %4342 = vst [vmem:[#allocation15 + $0x20] sm:$0xff] %v4326
        %4343 = vst [vmem:[#allocation15 + $0x28] sm:$0xff] %v4327
        %4344 = vst [vmem:[#allocation15 + $0x30] sm:$0xff] %v4328
        %4345 = vst [vmem:[#allocation15 + $0x38] sm:$0xff] %v4329
        %4346 = vst [vmem:[#allocation15 + $0x40] sm:$0xff] %v4330
        %4347 = vst [vmem:[#allocation15 + $0x48] sm:$0xff] %v4331
        %4348 = vst [vmem:[#allocation15 + $0x50] sm:$0xff] %v4332
        %4349 = vst [vmem:[#allocation15 + $0x58] sm:$0xff] %v4333
        %4350 = vst [vmem:[#allocation15 + $0x60] sm:$0xff] %v4334
        %4351 = vst [vmem:[#allocation15 + $0x68] sm:$0xff] %v4335
        %4352 = vst [vmem:[#allocation15 + $0x70] sm:$0xff] %v4336
        %4353 = vst [vmem:[#allocation15 + $0x78] sm:$0xff] %v4337
        // Predicated region
        $region81: #{tpu_custom_call.1} parent=47 // pred_check
          %p4354 = pneg %p198
        $region82: #{tpu_custom_call.1} parent=47 // pred_check_branch
          %4356 = sbr.rel (%p4354) target = $region84
        $region83: #{tpu_custom_call.1} parent=47 // pred_region
          %s4358 = ssub.s32 2048, 2048
          %4359 = vsyncadd [#allocation4], %s4358
          %s4360 = sshll.u32 [#allocation14], 4
          %s4361 = int_to_ptr.vmem [resolvable:$true] %s4360
          %4366 = dma.vmem_to_hbm [thread:$0]  %s4361, 2048, %s7, [#allocation4], 128, 128, 8
        $region84: #{tpu_custom_call.1} parent=47 // pred_fallthru
          _
        // Predicated region
        $region85: #{tpu_custom_call.1} parent=47 // pred_check
          %p4367 = pneg %p219
        $region86: #{tpu_custom_call.1} parent=47 // pred_check_branch
          %4369 = sbr.rel (%p4367) target = $region88
        $region87: #{tpu_custom_call.1} parent=47 // pred_region
          %s4371 = ssub.s32 2048, 2048
          %4372 = vsyncadd [#allocation16], %s4371
          %s4373 = sshll.u32 [#allocation15], 4
          %s4374 = int_to_ptr.vmem [resolvable:$true] %s4373
          %4379 = dma.vmem_to_hbm [thread:$0]  %s4374, 2048, %s8, [#allocation16], 128, 128, 8
        $region88: #{tpu_custom_call.1} parent=47 // pred_fallthru
          _
        // Predicated region
        $region89: #{tpu_custom_call.1} parent=47 // pred_check
          %p4380 = pneg %p198
        $region90: #{tpu_custom_call.1} parent=47 // pred_check_branch
          %4382 = sbr.rel (%p4380) target = $region92
        $region91: #{tpu_custom_call.1} parent=47 // pred_region
          %4383 = dma.done [#allocation4], 2048
        $region92: #{tpu_custom_call.1} parent=47 // pred_fallthru
          _
        // Predicated region
        $region93: #{tpu_custom_call.1} parent=47 // pred_check
          %p4384 = pneg %p219
        $region94: #{tpu_custom_call.1} parent=47 // pred_check_branch
          %4386 = sbr.rel (%p4384) target = $region96
        $region95: #{tpu_custom_call.1} parent=47 // pred_region
          %4387 = dma.done [#allocation16], 2048
        $region96: #{tpu_custom_call.1} parent=47 // pred_fallthru
          _
      $region48: #{tpu_custom_call.1} parent=5 // pred_fallthru
        _
      %p4388 = scmp.le.s32.totalorder 2, %s23
      // Predicated region
      $region97: #{tpu_custom_call.1} parent=5 // pred_check
        %p4389 = pneg %p4388
      $region98: #{tpu_custom_call.1} parent=5 // pred_check_branch
        %4391 = sbr.rel (%p4389) target = $region100
      $region99: #{tpu_custom_call.1} parent=5 // pred_region
        %s4392 = ssub.s32 %s23, 2
      $region100: #{tpu_custom_call.1} parent=5 // pred_fallthru
        _
    $region6: #{tpu_custom_call.1} parent=1 // loop_footer
      %s27 = sadd.s32 1, %s23
    $region7: #{tpu_custom_call.1} parent=1 // loop_footer_branch
      %22 = sbr.rel target = $region3
    $region8: #{tpu_custom_call.1} parent=1 // loop_exit
      _
    %4393 = vsyncpa [#allocation3], 1
    %s4394 = scalar_lea.sflag [#allocation3], 1
    %4395 = vsyncpa %s4394, 1
    %4396 = vsyncpa [#allocation6], 1
    %4397 = vsyncpa [#allocation9], 1
    %4398 = vsyncpa [#allocation12], 1
    %s4399 = scalar_lea.sflag [#allocation12], 1
    %4400 = vsyncpa %s4399, 1
    %4401 = vsyncpa [#allocation4], 1
    %s4402 = scalar_lea.sflag [#allocation4], 1
    %4403 = vsyncpa %s4402, 1
    %4404 = vsyncpa [#allocation16], 1

</llo_original>
